<compile_context>
chip_gen: v5e
topology: v5e:2x2
jax: 0.10.0
libtpu: 0.0.40
codegen_flags: <defaults>
</compile_context>

<pallas_src>
import jax
import jax.numpy as jnp
from jax.experimental import pallas as pl
from jax.experimental.pallas import tpu as pltpu

INPUT_SCALE = 0.1
WEIGHT_SCALE = 0.1


# ------------------------------ fused kernel -------------------------------

def _lenet_kernel(xq_ref, t1_ref, t2_ref, w1_ref, w2_ref, w3q_ref, b_ref,
                  out_ref, x1_ref, p2_ref):
    f32, bf16 = jnp.float32, jnp.bfloat16

    # packed biases (all segment starts are 128-lane aligned -> safe slices)
    b1t = b_ref[:, 0:84]        # conv1 bias, tiled over the 14 pooled W cols
    b2t = b_ref[:, 128:208]     # conv2 bias, tiled over the 5 pooled W cols
    b1fc = b_ref[:, 256:376]    # fc1 bias (120)
    b2fc = b_ref[:, 384:480]    # fc2 bias (96)
    b3fc = b_ref[:, 512:522]    # fc3 bias (10)

    # ---- conv1 (1->6, 5x5, pad 2) + ReLU + 2x2 maxpool, on the MXU ----------
    # Output rows are produced per residue class rho (row = 4k + rho), so the
    # H-pool pairs classes (0,1) and (2,3) elementwise and conv2 later reads
    # contiguous slabs.  Even / odd output columns live in the two 128-aligned
    # halves of the Toeplitz weight (lanes = pooled_w*6 + channel).
    def conv1_class(rho):
        acc = jnp.zeros((7, 212), f32)
        for i in range(5):                                  # unrolled kernel rows
            q, off = (rho + i) % 4, (rho + i) // 4
            slab = xq_ref[q, off:off + 7, :]                # (7, 32) bf16
            acc = acc + jnp.dot(slab, t1_ref[i], preferred_element_type=f32)
        return jnp.maximum(acc[:, 0:84], acc[:, 128:212])   # W-pool -> (7, 84)

    # bias add / ReLU commute with max-pool -> applied once after pooling
    c0 = conv1_class(0)
    c1 = conv1_class(1)
    x1_ref[0, :, :] = jnp.maximum(jnp.maximum(c0, c1) + b1t, 0.0).astype(bf16)
    c2 = conv1_class(2)
    c3 = conv1_class(3)
    x1_ref[1, :, :] = jnp.maximum(jnp.maximum(c2, c3) + b1t, 0.0).astype(bf16)
    # x1_ref[0]: pooled rows 0,2,..,12 ; x1_ref[1]: pooled rows 1,3,..,13

    # ---- conv2 (6->16, 5x5) + ReLU + 2x2 maxpool, on the MXU ----------------
    def conv2_parity(ph):                       # ph = parity of conv2 output row
        acc = jnp.zeros((5, 208), f32)
        for i in range(5):
            q, off = (ph + i) % 2, (ph + i) // 2
            slab = x1_ref[q, off:off + 5, :]                # (5, 84) bf16
            acc = acc + jnp.dot(slab, t2_ref[i], preferred_element_type=f32)
        return jnp.maximum(acc[:, 0:80], acc[:, 128:208])   # W-pool -> (5, 80)

    p2 = jnp.maximum(jnp.maximum(conv2_parity(0), conv2_parity(1)) + b2t, 0.0)
    p2_ref[...] = p2.astype(bf16)               # (5, 80): lanes = w*16 + c

    # ---- fc1 -> fc2 -> (fc3, quantized mm), all on the MXU ------------------
    h = b1fc                                                    # (1, 120) f32
    for hh in range(5):                                         # unrolled rows
        h = h + jnp.dot(p2_ref[hh:hh + 1, :], w1_ref[hh],
                        preferred_element_type=f32)
    h = jnp.maximum(h, 0.0)                                     # fc1 + ReLU

    h = jnp.maximum(jnp.dot(h.astype(bf16), w2_ref[...],
                            preferred_element_type=f32) + b2fc, 0.0)  # (1, 96)

    out_ref[0:1, :] = jnp.dot(h.astype(bf16), w3q_ref[:, 0:10],
                              preferred_element_type=f32) + b3fc      # fc3

    # int8-style quantized matmul (reference clamps to [-127, 128]); values are
    # small integers -> exact in bf16, f32 accumulate on the MXU is bit-exact.
    qx = jnp.clip(jnp.round(h / INPUT_SCALE), -127.0, 128.0)
    out_ref[1:2, :] = jnp.dot(qx.astype(bf16), w3q_ref[:, 128:138],
                              preferred_element_type=f32)


# ------------------------------- glue (JAX) --------------------------------

def lenet_forward(params, x):
    # x: (B, 1, 28, 28) f32 NCHW.  QuantStub / DeQuantStub are identity for the
    # non-converted fp32 model.
    B = x.shape[0]
    f32, bf16 = jnp.float32, jnp.bfloat16

    # pad to 32x32 and split padded rows into 4 residue classes (row = 4k + r)
    xp = jnp.pad(x, ((0, 0), (0, 0), (2, 2), (2, 2)))[:, 0]              # (B,32,32)
    xq = xp.reshape(B, 8, 4, 32).transpose(0, 2, 1, 3).astype(bf16)      # (B,4,8,32)

    # conv1 Toeplitz weight: (5, 32, 212); even output cols at lanes 0:84,
    # odd output cols at lanes 128:212, output lane = pooled_w*6 + channel.
    w1r = jnp.transpose(params["conv1_w"][:, 0], (1, 2, 0))              # (5,5,6)

    def t1_half(pw):
        wout = 2 * jnp.arange(14) + pw
        j = jnp.arange(32)[:, None] - wout[None, :]                      # (32,14)
        tap = jnp.where(((j >= 0) & (j < 5))[None, :, :, None],
                        w1r[:, jnp.clip(j, 0, 4), :], 0.0)               # (5,32,14,6)
        return tap.reshape(5, 32, 84)

    t1 = jnp.zeros((5, 32, 212), f32)
    t1 = t1.at[:, :, 0:84].set(t1_half(0)).at[:, :, 128:212].set(t1_half(1))
    t1 = t1.astype(bf16)

    # conv2 Toeplitz weight: (5, 84, 208); input lane = w*6 + cin, output lane
    # = pooled_w*16 + cout, even cols at 0:80, odd cols at 128:208.
    w2r = jnp.transpose(params["conv2_w"], (2, 3, 1, 0))                 # (5,5,6,16)

    def t2_half(pw):
        wout = 2 * jnp.arange(5) + pw
        j = jnp.arange(14)[:, None] - wout[None, :]                      # (14,5)
        tap = jnp.where(((j >= 0) & (j < 5))[None, :, :, None, None],
                        w2r[:, jnp.clip(j, 0, 4)], 0.0)                  # (5,14,5,6,16)
        tap = jnp.transpose(tap, (0, 1, 3, 2, 4))                        # (i,w,ci,m,co)
        return tap.reshape(5, 84, 80)

    t2 = jnp.zeros((5, 84, 208), f32)
    t2 = t2.at[:, :, 0:80].set(t2_half(0)).at[:, :, 128:208].set(t2_half(1))
    t2 = t2.astype(bf16)

    # fc weights: fc1 columns permuted from torch's (c,h,w) flatten order to the
    # kernel's (h, w*16+c) order; all FC weights pre-cast to bf16 (MXU native).
    w1fc = jnp.transpose(params["fc1_w"].reshape(120, 16, 5, 5),
                         (2, 3, 1, 0)).reshape(5, 80, 120).astype(bf16)  # (5,80,120)
    w2fc = params["fc2_w"].T.astype(bf16)                                # (120,96)
    # fc3 weight and its (constant-folded) quantized version in one operand
    qw_t = jnp.clip(jnp.round(params["fc3_w"] / WEIGHT_SCALE),
                    -127.0, 128.0).T                                     # (96,10)
    w3q = jnp.zeros((96, 138), f32)
    w3q = w3q.at[:, 0:10].set(params["fc3_w"].T).at[:, 128:138].set(qw_t)
    w3q = w3q.astype(bf16)

    # packed biases, every segment start 128-lane aligned
    bias = jnp.zeros((1, 640), f32)
    bias = bias.at[0, 0:84].set(jnp.tile(params["conv1_b"], 14))
    bias = bias.at[0, 128:208].set(jnp.tile(params["conv2_b"], 5))
    bias = bias.at[0, 256:376].set(params["fc1_b"])
    bias = bias.at[0, 384:480].set(params["fc2_b"])
    bias = bias.at[0, 512:522].set(params["fc3_b"])

    # total VMEM footprint (weights + scratch) is well under 1 MiB on every
    # generation, so no explicit vmem_limit_bytes is needed (v7x-safe).
    res = pl.pallas_call(
        _lenet_kernel,
        out_shape=jax.ShapeDtypeStruct((B, 2, 10), jnp.float32),
        grid=(B,),
        in_specs=[
            pl.BlockSpec((None, 4, 8, 32), lambda b: (b, 0, 0, 0)),   # per-sample x
            pl.BlockSpec((5, 32, 212), lambda b: (0, 0, 0)),          # conv1 Toeplitz
            pl.BlockSpec((5, 84, 208), lambda b: (0, 0, 0)),          # conv2 Toeplitz
            pl.BlockSpec((5, 80, 120), lambda b: (0, 0, 0)),          # fc1 weight
            pl.BlockSpec((120, 96), lambda b: (0, 0)),                # fc2 weight
            pl.BlockSpec((96, 138), lambda b: (0, 0)),                # fc3 | quant fc3
            pl.BlockSpec((1, 640), lambda b: (0, 0)),                 # packed biases
        ],
        out_specs=pl.BlockSpec((None, 2, 10), lambda b: (b, 0, 0)),
        scratch_shapes=[
            pltpu.VMEM((2, 7, 84), jnp.bfloat16),   # pooled conv1 (even/odd rows)
            pltpu.VMEM((5, 80), jnp.bfloat16),      # pooled conv2 slab for fc1
        ],
        compiler_params=pltpu.CompilerParams(
            dimension_semantics=("parallel",)),      # v7x: one sample per TC
    )(xq, t1, t2, w1fc, w2fc, w3q, bias)

    return res[:, 0, :], res[:, 1, :]


def init_params(key):
    # Deterministic synthetic init (PyTorch-style uniform(-1/sqrt(fan_in), ...)).
    ks = jax.random.split(key, 10)

    def u(k, shape, fan_in):
        bound = 1.0 / (fan_in ** 0.5)
        return jax.random.uniform(k, shape, jnp.float32, -bound, bound)

    return {
        "conv1_w": u(ks[0], (6, 1, 5, 5), 25),
        "conv1_b": u(ks[1], (6,), 25),
        "conv2_w": u(ks[2], (16, 6, 5, 5), 150),
        "conv2_b": u(ks[3], (16,), 150),
        "fc1_w": u(ks[4], (120, 400), 400),
        "fc1_b": u(ks[5], (120,), 400),
        "fc2_w": u(ks[6], (96, 120), 120),
        "fc2_b": u(ks[7], (96,), 120),
        "fc3_w": u(ks[8], (10, 96), 96),
        "fc3_b": u(ks[9], (10,), 96),
    }


if __name__ == "__main__":
    key = jax.random.PRNGKey(0)
    kx, kp = jax.random.split(key)
    # Shapes implied by the module: 1 input channel, 28x28 spatial
    # (conv2 -> 16x5x5 -> flatten 400).  Small batch = 2.
    x = jax.random.normal(kx, (2, 1, 28, 28), jnp.float32)
    params = init_params(kp)

    fwd = jax.jit(lenet_forward)
    out, mm = fwd(params, x)
    jax.block_until_ready((out, mm))

    assert out.shape == (2, 10) and out.dtype == jnp.float32
    assert mm.shape == (2, 10) and mm.dtype == jnp.float32
    print("KERNEL_OK")
</pallas_src>

<mosaic_0001>
module attributes {stable_mosaic.version = 11 : i64} {
  func.func @_lenet_kernel(%arg0: i32, %arg1: memref<1x4x8x32xbf16, #tpu.memory_space<vmem>>, %arg2: memref<5x32x212xbf16, #tpu.memory_space<vmem>>, %arg3: memref<5x84x208xbf16, #tpu.memory_space<vmem>>, %arg4: memref<5x80x120xbf16, #tpu.memory_space<vmem>>, %arg5: memref<120x96xbf16, #tpu.memory_space<vmem>>, %arg6: memref<96x138xbf16, #tpu.memory_space<vmem>>, %arg7: memref<1x640xf32, #tpu.memory_space<vmem>>, %arg8: memref<1x2x10xf32, #tpu.memory_space<vmem>>, %arg9: memref<2x7x84xbf16, #tpu.memory_space<vmem>>, %arg10: memref<5x80xbf16, #tpu.memory_space<vmem>>) attributes {dimension_semantics = [#tpu.dimension_semantics<parallel>], iteration_bounds = array<i64: 2>, scalar_prefetch = 0 : i64, scratch_operands = 2 : i64, tpu.core_type = #tpu.core_type<tc>, window_params = [{transform_indices = @transform_0, window_bounds = array<i64: 1, 4, 8, 32>}, {pipeline_mode = #tpu.pipeline_mode<synchronous>, transform_indices = @transform_1, window_bounds = array<i64: 5, 32, 212>}, {pipeline_mode = #tpu.pipeline_mode<synchronous>, transform_indices = @transform_2, window_bounds = array<i64: 5, 84, 208>}, {pipeline_mode = #tpu.pipeline_mode<synchronous>, transform_indices = @transform_3, window_bounds = array<i64: 5, 80, 120>}, {pipeline_mode = #tpu.pipeline_mode<synchronous>, transform_indices = @transform_4, window_bounds = array<i64: 120, 96>}, {pipeline_mode = #tpu.pipeline_mode<synchronous>, transform_indices = @transform_5, window_bounds = array<i64: 96, 138>}, {pipeline_mode = #tpu.pipeline_mode<synchronous>, transform_indices = @transform_6, window_bounds = array<i64: 1, 640>}, {transform_indices = @transform_7, window_bounds = array<i64: 1, 2, 10>}]} {
    %c0 = arith.constant 0 : index
    %c0_0 = arith.constant 0 : index
    %0 = vector.load %arg7[%c0, %c0_0] : memref<1x640xf32, #tpu.memory_space<vmem>>, vector<1x84xf32>
    %c0_1 = arith.constant 0 : index
    %c128 = arith.constant 128 : index
    %1 = vector.load %arg7[%c0_1, %c128] : memref<1x640xf32, #tpu.memory_space<vmem>>, vector<1x80xf32>
    %c0_2 = arith.constant 0 : index
    %c256 = arith.constant 256 : index
    %2 = vector.load %arg7[%c0_2, %c256] : memref<1x640xf32, #tpu.memory_space<vmem>>, vector<1x120xf32>
    %c0_3 = arith.constant 0 : index
    %c384 = arith.constant 384 : index
    %3 = vector.load %arg7[%c0_3, %c384] : memref<1x640xf32, #tpu.memory_space<vmem>>, vector<1x96xf32>
    %c0_4 = arith.constant 0 : index
    %c512 = arith.constant 512 : index
    %4 = vector.load %arg7[%c0_4, %c512] : memref<1x640xf32, #tpu.memory_space<vmem>>, vector<1x10xf32>
    %cst = arith.constant 0.000000e+00 : f32
    %5 = vector.broadcast %cst : f32 to vector<7x212xf32>
    %c0_5 = arith.constant 0 : index
    %c0_6 = arith.constant 0 : index
    %c0_7 = arith.constant 0 : index
    %c0_8 = arith.constant 0 : index
    %6 = vector.load %arg1[%c0_5, %c0_6, %c0_7, %c0_8] : memref<1x4x8x32xbf16, #tpu.memory_space<vmem>>, vector<1x1x7x32xbf16>
    %7 = vector.shape_cast %6 : vector<1x1x7x32xbf16> to vector<7x32xbf16>
    %c0_9 = arith.constant 0 : index
    %c0_10 = arith.constant 0 : index
    %c0_11 = arith.constant 0 : index
    %8 = vector.load %arg2[%c0_9, %c0_10, %c0_11] : memref<5x32x212xbf16, #tpu.memory_space<vmem>>, vector<1x32x212xbf16>
    %9 = vector.shape_cast %8 : vector<1x32x212xbf16> to vector<32x212xbf16>
    %cst_12 = arith.constant dense<0.000000e+00> : vector<7x212xf32>
    %10 = tpu.matmul %7, %9, %cst_12 {dimension_numbers = #tpu.dot_dimension_numbers<[1], [0], [0], [1], [0, 0, 1, 1], [], []>} : vector<7x32xbf16>, vector<32x212xbf16>, vector<7x212xf32> -> vector<7x212xf32>
    %11 = arith.addf %5, %10 : vector<7x212xf32>
    %c0_13 = arith.constant 0 : index
    %c1 = arith.constant 1 : index
    %c0_14 = arith.constant 0 : index
    %c0_15 = arith.constant 0 : index
    %12 = vector.load %arg1[%c0_13, %c1, %c0_14, %c0_15] : memref<1x4x8x32xbf16, #tpu.memory_space<vmem>>, vector<1x1x7x32xbf16>
    %13 = vector.shape_cast %12 : vector<1x1x7x32xbf16> to vector<7x32xbf16>
    %c1_16 = arith.constant 1 : index
    %c0_17 = arith.constant 0 : index
    %c0_18 = arith.constant 0 : index
    %14 = vector.load %arg2[%c1_16, %c0_17, %c0_18] : memref<5x32x212xbf16, #tpu.memory_space<vmem>>, vector<1x32x212xbf16>
    %15 = vector.shape_cast %14 : vector<1x32x212xbf16> to vector<32x212xbf16>
    %cst_19 = arith.constant dense<0.000000e+00> : vector<7x212xf32>
    %16 = tpu.matmul %13, %15, %cst_19 {dimension_numbers = #tpu.dot_dimension_numbers<[1], [0], [0], [1], [0, 0, 1, 1], [], []>} : vector<7x32xbf16>, vector<32x212xbf16>, vector<7x212xf32> -> vector<7x212xf32>
    %17 = arith.addf %11, %16 : vector<7x212xf32>
    %c0_20 = arith.constant 0 : index
    %c2 = arith.constant 2 : index
    %c0_21 = arith.constant 0 : index
    %c0_22 = arith.constant 0 : index
    %18 = vector.load %arg1[%c0_20, %c2, %c0_21, %c0_22] : memref<1x4x8x32xbf16, #tpu.memory_space<vmem>>, vector<1x1x7x32xbf16>
    %19 = vector.shape_cast %18 : vector<1x1x7x32xbf16> to vector<7x32xbf16>
    %c2_23 = arith.constant 2 : index
    %c0_24 = arith.constant 0 : index
    %c0_25 = arith.constant 0 : index
    %20 = vector.load %arg2[%c2_23, %c0_24, %c0_25] : memref<5x32x212xbf16, #tpu.memory_space<vmem>>, vector<1x32x212xbf16>
    %21 = vector.shape_cast %20 : vector<1x32x212xbf16> to vector<32x212xbf16>
    %cst_26 = arith.constant dense<0.000000e+00> : vector<7x212xf32>
    %22 = tpu.matmul %19, %21, %cst_26 {dimension_numbers = #tpu.dot_dimension_numbers<[1], [0], [0], [1], [0, 0, 1, 1], [], []>} : vector<7x32xbf16>, vector<32x212xbf16>, vector<7x212xf32> -> vector<7x212xf32>
    %23 = arith.addf %17, %22 : vector<7x212xf32>
    %c0_27 = arith.constant 0 : index
    %c3 = arith.constant 3 : index
    %c0_28 = arith.constant 0 : index
    %c0_29 = arith.constant 0 : index
    %24 = vector.load %arg1[%c0_27, %c3, %c0_28, %c0_29] : memref<1x4x8x32xbf16, #tpu.memory_space<vmem>>, vector<1x1x7x32xbf16>
    %25 = vector.shape_cast %24 : vector<1x1x7x32xbf16> to vector<7x32xbf16>
    %c3_30 = arith.constant 3 : index
    %c0_31 = arith.constant 0 : index
    %c0_32 = arith.constant 0 : index
    %26 = vector.load %arg2[%c3_30, %c0_31, %c0_32] : memref<5x32x212xbf16, #tpu.memory_space<vmem>>, vector<1x32x212xbf16>
    %27 = vector.shape_cast %26 : vector<1x32x212xbf16> to vector<32x212xbf16>
    %cst_33 = arith.constant dense<0.000000e+00> : vector<7x212xf32>
    %28 = tpu.matmul %25, %27, %cst_33 {dimension_numbers = #tpu.dot_dimension_numbers<[1], [0], [0], [1], [0, 0, 1, 1], [], []>} : vector<7x32xbf16>, vector<32x212xbf16>, vector<7x212xf32> -> vector<7x212xf32>
    %29 = arith.addf %23, %28 : vector<7x212xf32>
    %c0_34 = arith.constant 0 : index
    %c0_35 = arith.constant 0 : index
    %c1_36 = arith.constant 1 : index
    %c0_37 = arith.constant 0 : index
    %30 = vector.load %arg1[%c0_34, %c0_35, %c1_36, %c0_37] : memref<1x4x8x32xbf16, #tpu.memory_space<vmem>>, vector<1x1x7x32xbf16>
    %31 = vector.shape_cast %30 : vector<1x1x7x32xbf16> to vector<7x32xbf16>
    %c4 = arith.constant 4 : index
    %c0_38 = arith.constant 0 : index
    %c0_39 = arith.constant 0 : index
    %32 = vector.load %arg2[%c4, %c0_38, %c0_39] : memref<5x32x212xbf16, #tpu.memory_space<vmem>>, vector<1x32x212xbf16>
    %33 = vector.shape_cast %32 : vector<1x32x212xbf16> to vector<32x212xbf16>
    %cst_40 = arith.constant dense<0.000000e+00> : vector<7x212xf32>
    %34 = tpu.matmul %31, %33, %cst_40 {dimension_numbers = #tpu.dot_dimension_numbers<[1], [0], [0], [1], [0, 0, 1, 1], [], []>} : vector<7x32xbf16>, vector<32x212xbf16>, vector<7x212xf32> -> vector<7x212xf32>
    %35 = arith.addf %29, %34 : vector<7x212xf32>
    %36 = vector.extract_strided_slice %35 {offsets = [0, 0], sizes = [7, 84], strides = [1, 1]} : vector<7x212xf32> to vector<7x84xf32>
    %37 = vector.extract_strided_slice %35 {offsets = [0, 128], sizes = [7, 84], strides = [1, 1]} : vector<7x212xf32> to vector<7x84xf32>
    %38 = arith.maximumf %36, %37 : vector<7x84xf32>
    %cst_41 = arith.constant 0.000000e+00 : f32
    %39 = vector.broadcast %cst_41 : f32 to vector<7x212xf32>
    %c0_42 = arith.constant 0 : index
    %c1_43 = arith.constant 1 : index
    %c0_44 = arith.constant 0 : index
    %c0_45 = arith.constant 0 : index
    %40 = vector.load %arg1[%c0_42, %c1_43, %c0_44, %c0_45] : memref<1x4x8x32xbf16, #tpu.memory_space<vmem>>, vector<1x1x7x32xbf16>
    %41 = vector.shape_cast %40 : vector<1x1x7x32xbf16> to vector<7x32xbf16>
    %c0_46 = arith.constant 0 : index
    %c0_47 = arith.constant 0 : index
    %c0_48 = arith.constant 0 : index
    %42 = vector.load %arg2[%c0_46, %c0_47, %c0_48] : memref<5x32x212xbf16, #tpu.memory_space<vmem>>, vector<1x32x212xbf16>
    %43 = vector.shape_cast %42 : vector<1x32x212xbf16> to vector<32x212xbf16>
    %cst_49 = arith.constant dense<0.000000e+00> : vector<7x212xf32>
    %44 = tpu.matmul %41, %43, %cst_49 {dimension_numbers = #tpu.dot_dimension_numbers<[1], [0], [0], [1], [0, 0, 1, 1], [], []>} : vector<7x32xbf16>, vector<32x212xbf16>, vector<7x212xf32> -> vector<7x212xf32>
    %45 = arith.addf %39, %44 : vector<7x212xf32>
    %c0_50 = arith.constant 0 : index
    %c2_51 = arith.constant 2 : index
    %c0_52 = arith.constant 0 : index
    %c0_53 = arith.constant 0 : index
    %46 = vector.load %arg1[%c0_50, %c2_51, %c0_52, %c0_53] : memref<1x4x8x32xbf16, #tpu.memory_space<vmem>>, vector<1x1x7x32xbf16>
    %47 = vector.shape_cast %46 : vector<1x1x7x32xbf16> to vector<7x32xbf16>
    %c1_54 = arith.constant 1 : index
    %c0_55 = arith.constant 0 : index
    %c0_56 = arith.constant 0 : index
    %48 = vector.load %arg2[%c1_54, %c0_55, %c0_56] : memref<5x32x212xbf16, #tpu.memory_space<vmem>>, vector<1x32x212xbf16>
    %49 = vector.shape_cast %48 : vector<1x32x212xbf16> to vector<32x212xbf16>
    %cst_57 = arith.constant dense<0.000000e+00> : vector<7x212xf32>
    %50 = tpu.matmul %47, %49, %cst_57 {dimension_numbers = #tpu.dot_dimension_numbers<[1], [0], [0], [1], [0, 0, 1, 1], [], []>} : vector<7x32xbf16>, vector<32x212xbf16>, vector<7x212xf32> -> vector<7x212xf32>
    %51 = arith.addf %45, %50 : vector<7x212xf32>
    %c0_58 = arith.constant 0 : index
    %c3_59 = arith.constant 3 : index
    %c0_60 = arith.constant 0 : index
    %c0_61 = arith.constant 0 : index
    %52 = vector.load %arg1[%c0_58, %c3_59, %c0_60, %c0_61] : memref<1x4x8x32xbf16, #tpu.memory_space<vmem>>, vector<1x1x7x32xbf16>
    %53 = vector.shape_cast %52 : vector<1x1x7x32xbf16> to vector<7x32xbf16>
    %c2_62 = arith.constant 2 : index
    %c0_63 = arith.constant 0 : index
    %c0_64 = arith.constant 0 : index
    %54 = vector.load %arg2[%c2_62, %c0_63, %c0_64] : memref<5x32x212xbf16, #tpu.memory_space<vmem>>, vector<1x32x212xbf16>
    %55 = vector.shape_cast %54 : vector<1x32x212xbf16> to vector<32x212xbf16>
    %cst_65 = arith.constant dense<0.000000e+00> : vector<7x212xf32>
    %56 = tpu.matmul %53, %55, %cst_65 {dimension_numbers = #tpu.dot_dimension_numbers<[1], [0], [0], [1], [0, 0, 1, 1], [], []>} : vector<7x32xbf16>, vector<32x212xbf16>, vector<7x212xf32> -> vector<7x212xf32>
    %57 = arith.addf %51, %56 : vector<7x212xf32>
    %c0_66 = arith.constant 0 : index
    %c0_67 = arith.constant 0 : index
    %c1_68 = arith.constant 1 : index
    %c0_69 = arith.constant 0 : index
    %58 = vector.load %arg1[%c0_66, %c0_67, %c1_68, %c0_69] : memref<1x4x8x32xbf16, #tpu.memory_space<vmem>>, vector<1x1x7x32xbf16>
    %59 = vector.shape_cast %58 : vector<1x1x7x32xbf16> to vector<7x32xbf16>
    %c3_70 = arith.constant 3 : index
    %c0_71 = arith.constant 0 : index
    %c0_72 = arith.constant 0 : index
    %60 = vector.load %arg2[%c3_70, %c0_71, %c0_72] : memref<5x32x212xbf16, #tpu.memory_space<vmem>>, vector<1x32x212xbf16>
    %61 = vector.shape_cast %60 : vector<1x32x212xbf16> to vector<32x212xbf16>
    %cst_73 = arith.constant dense<0.000000e+00> : vector<7x212xf32>
    %62 = tpu.matmul %59, %61, %cst_73 {dimension_numbers = #tpu.dot_dimension_numbers<[1], [0], [0], [1], [0, 0, 1, 1], [], []>} : vector<7x32xbf16>, vector<32x212xbf16>, vector<7x212xf32> -> vector<7x212xf32>
    %63 = arith.addf %57, %62 : vector<7x212xf32>
    %c0_74 = arith.constant 0 : index
    %c1_75 = arith.constant 1 : index
    %c1_76 = arith.constant 1 : index
    %c0_77 = arith.constant 0 : index
    %64 = vector.load %arg1[%c0_74, %c1_75, %c1_76, %c0_77] : memref<1x4x8x32xbf16, #tpu.memory_space<vmem>>, vector<1x1x7x32xbf16>
    %65 = vector.shape_cast %64 : vector<1x1x7x32xbf16> to vector<7x32xbf16>
    %c4_78 = arith.constant 4 : index
    %c0_79 = arith.constant 0 : index
    %c0_80 = arith.constant 0 : index
    %66 = vector.load %arg2[%c4_78, %c0_79, %c0_80] : memref<5x32x212xbf16, #tpu.memory_space<vmem>>, vector<1x32x212xbf16>
    %67 = vector.shape_cast %66 : vector<1x32x212xbf16> to vector<32x212xbf16>
    %cst_81 = arith.constant dense<0.000000e+00> : vector<7x212xf32>
    %68 = tpu.matmul %65, %67, %cst_81 {dimension_numbers = #tpu.dot_dimension_numbers<[1], [0], [0], [1], [0, 0, 1, 1], [], []>} : vector<7x32xbf16>, vector<32x212xbf16>, vector<7x212xf32> -> vector<7x212xf32>
    %69 = arith.addf %63, %68 : vector<7x212xf32>
    %70 = vector.extract_strided_slice %69 {offsets = [0, 0], sizes = [7, 84], strides = [1, 1]} : vector<7x212xf32> to vector<7x84xf32>
    %71 = vector.extract_strided_slice %69 {offsets = [0, 128], sizes = [7, 84], strides = [1, 1]} : vector<7x212xf32> to vector<7x84xf32>
    %72 = arith.maximumf %70, %71 : vector<7x84xf32>
    %73 = arith.maximumf %38, %72 : vector<7x84xf32>
    %74 = vector.broadcast %0 : vector<1x84xf32> to vector<7x84xf32>
    %75 = arith.addf %73, %74 : vector<7x84xf32>
    %cst_82 = arith.constant 0.000000e+00 : f32
    %76 = vector.broadcast %cst_82 : f32 to vector<7x84xf32>
    %77 = arith.maximumf %75, %76 : vector<7x84xf32>
    %78 = arith.truncf %77 : vector<7x84xf32> to vector<7x84xbf16>
    %c0_83 = arith.constant 0 : index
    %c0_84 = arith.constant 0 : index
    %c0_85 = arith.constant 0 : index
    %79 = vector.load %arg9[%c0_83, %c0_84, %c0_85] : memref<2x7x84xbf16, #tpu.memory_space<vmem>>, vector<1x7x84xbf16>
    %80 = vector.shape_cast %79 : vector<1x7x84xbf16> to vector<7x84xbf16>
    %81 = vector.shape_cast %78 : vector<7x84xbf16> to vector<1x7x84xbf16>
    tpu.vector_store %arg9[%c0_83, %c0_84, %c0_85], %81 {strides = array<i32>} : memref<2x7x84xbf16, #tpu.memory_space<vmem>>, vector<1x7x84xbf16>,
    %cst_86 = arith.constant 0.000000e+00 : f32
    %82 = vector.broadcast %cst_86 : f32 to vector<7x212xf32>
    %c0_87 = arith.constant 0 : index
    %c2_88 = arith.constant 2 : index
    %c0_89 = arith.constant 0 : index
    %c0_90 = arith.constant 0 : index
    %83 = vector.load %arg1[%c0_87, %c2_88, %c0_89, %c0_90] : memref<1x4x8x32xbf16, #tpu.memory_space<vmem>>, vector<1x1x7x32xbf16>
    %84 = vector.shape_cast %83 : vector<1x1x7x32xbf16> to vector<7x32xbf16>
    %c0_91 = arith.constant 0 : index
    %c0_92 = arith.constant 0 : index
    %c0_93 = arith.constant 0 : index
    %85 = vector.load %arg2[%c0_91, %c0_92, %c0_93] : memref<5x32x212xbf16, #tpu.memory_space<vmem>>, vector<1x32x212xbf16>
    %86 = vector.shape_cast %85 : vector<1x32x212xbf16> to vector<32x212xbf16>
    %cst_94 = arith.constant dense<0.000000e+00> : vector<7x212xf32>
    %87 = tpu.matmul %84, %86, %cst_94 {dimension_numbers = #tpu.dot_dimension_numbers<[1], [0], [0], [1], [0, 0, 1, 1], [], []>} : vector<7x32xbf16>, vector<32x212xbf16>, vector<7x212xf32> -> vector<7x212xf32>
    %88 = arith.addf %82, %87 : vector<7x212xf32>
    %c0_95 = arith.constant 0 : index
    %c3_96 = arith.constant 3 : index
    %c0_97 = arith.constant 0 : index
    %c0_98 = arith.constant 0 : index
    %89 = vector.load %arg1[%c0_95, %c3_96, %c0_97, %c0_98] : memref<1x4x8x32xbf16, #tpu.memory_space<vmem>>, vector<1x1x7x32xbf16>
    %90 = vector.shape_cast %89 : vector<1x1x7x32xbf16> to vector<7x32xbf16>
    %c1_99 = arith.constant 1 : index
    %c0_100 = arith.constant 0 : index
    %c0_101 = arith.constant 0 : index
    %91 = vector.load %arg2[%c1_99, %c0_100, %c0_101] : memref<5x32x212xbf16, #tpu.memory_space<vmem>>, vector<1x32x212xbf16>
    %92 = vector.shape_cast %91 : vector<1x32x212xbf16> to vector<32x212xbf16>
    %cst_102 = arith.constant dense<0.000000e+00> : vector<7x212xf32>
    %93 = tpu.matmul %90, %92, %cst_102 {dimension_numbers = #tpu.dot_dimension_numbers<[1], [0], [0], [1], [0, 0, 1, 1], [], []>} : vector<7x32xbf16>, vector<32x212xbf16>, vector<7x212xf32> -> vector<7x212xf32>
    %94 = arith.addf %88, %93 : vector<7x212xf32>
    %c0_103 = arith.constant 0 : index
    %c0_104 = arith.constant 0 : index
    %c1_105 = arith.constant 1 : index
    %c0_106 = arith.constant 0 : index
    %95 = vector.load %arg1[%c0_103, %c0_104, %c1_105, %c0_106] : memref<1x4x8x32xbf16, #tpu.memory_space<vmem>>, vector<1x1x7x32xbf16>
    %96 = vector.shape_cast %95 : vector<1x1x7x32xbf16> to vector<7x32xbf16>
    %c2_107 = arith.constant 2 : index
    %c0_108 = arith.constant 0 : index
    %c0_109 = arith.constant 0 : index
    %97 = vector.load %arg2[%c2_107, %c0_108, %c0_109] : memref<5x32x212xbf16, #tpu.memory_space<vmem>>, vector<1x32x212xbf16>
    %98 = vector.shape_cast %97 : vector<1x32x212xbf16> to vector<32x212xbf16>
    %cst_110 = arith.constant dense<0.000000e+00> : vector<7x212xf32>
    %99 = tpu.matmul %96, %98, %cst_110 {dimension_numbers = #tpu.dot_dimension_numbers<[1], [0], [0], [1], [0, 0, 1, 1], [], []>} : vector<7x32xbf16>, vector<32x212xbf16>, vector<7x212xf32> -> vector<7x212xf32>
    %100 = arith.addf %94, %99 : vector<7x212xf32>
    %c0_111 = arith.constant 0 : index
    %c1_112 = arith.constant 1 : index
    %c1_113 = arith.constant 1 : index
    %c0_114 = arith.constant 0 : index
    %101 = vector.load %arg1[%c0_111, %c1_112, %c1_113, %c0_114] : memref<1x4x8x32xbf16, #tpu.memory_space<vmem>>, vector<1x1x7x32xbf16>
    %102 = vector.shape_cast %101 : vector<1x1x7x32xbf16> to vector<7x32xbf16>
    %c3_115 = arith.constant 3 : index
    %c0_116 = arith.constant 0 : index
    %c0_117 = arith.constant 0 : index
    %103 = vector.load %arg2[%c3_115, %c0_116, %c0_117] : memref<5x32x212xbf16, #tpu.memory_space<vmem>>, vector<1x32x212xbf16>
    %104 = vector.shape_cast %103 : vector<1x32x212xbf16> to vector<32x212xbf16>
    %cst_118 = arith.constant dense<0.000000e+00> : vector<7x212xf32>
    %105 = tpu.matmul %102, %104, %cst_118 {dimension_numbers = #tpu.dot_dimension_numbers<[1], [0], [0], [1], [0, 0, 1, 1], [], []>} : vector<7x32xbf16>, vector<32x212xbf16>, vector<7x212xf32> -> vector<7x212xf32>
    %106 = arith.addf %100, %105 : vector<7x212xf32>
    %c0_119 = arith.constant 0 : index
    %c2_120 = arith.constant 2 : index
    %c1_121 = arith.constant 1 : index
    %c0_122 = arith.constant 0 : index
    %107 = vector.load %arg1[%c0_119, %c2_120, %c1_121, %c0_122] : memref<1x4x8x32xbf16, #tpu.memory_space<vmem>>, vector<1x1x7x32xbf16>
    %108 = vector.shape_cast %107 : vector<1x1x7x32xbf16> to vector<7x32xbf16>
    %c4_123 = arith.constant 4 : index
    %c0_124 = arith.constant 0 : index
    %c0_125 = arith.constant 0 : index
    %109 = vector.load %arg2[%c4_123, %c0_124, %c0_125] : memref<5x32x212xbf16, #tpu.memory_space<vmem>>, vector<1x32x212xbf16>
    %110 = vector.shape_cast %109 : vector<1x32x212xbf16> to vector<32x212xbf16>
    %cst_126 = arith.constant dense<0.000000e+00> : vector<7x212xf32>
    %111 = tpu.matmul %108, %110, %cst_126 {dimension_numbers = #tpu.dot_dimension_numbers<[1], [0], [0], [1], [0, 0, 1, 1], [], []>} : vector<7x32xbf16>, vector<32x212xbf16>, vector<7x212xf32> -> vector<7x212xf32>
    %112 = arith.addf %106, %111 : vector<7x212xf32>
    %113 = vector.extract_strided_slice %112 {offsets = [0, 0], sizes = [7, 84], strides = [1, 1]} : vector<7x212xf32> to vector<7x84xf32>
    %114 = vector.extract_strided_slice %112 {offsets = [0, 128], sizes = [7, 84], strides = [1, 1]} : vector<7x212xf32> to vector<7x84xf32>
    %115 = arith.maximumf %113, %114 : vector<7x84xf32>
    %cst_127 = arith.constant 0.000000e+00 : f32
    %116 = vector.broadcast %cst_127 : f32 to vector<7x212xf32>
    %c0_128 = arith.constant 0 : index
    %c3_129 = arith.constant 3 : index
    %c0_130 = arith.constant 0 : index
    %c0_131 = arith.constant 0 : index
    %117 = vector.load %arg1[%c0_128, %c3_129, %c0_130, %c0_131] : memref<1x4x8x32xbf16, #tpu.memory_space<vmem>>, vector<1x1x7x32xbf16>
    %118 = vector.shape_cast %117 : vector<1x1x7x32xbf16> to vector<7x32xbf16>
    %c0_132 = arith.constant 0 : index
    %c0_133 = arith.constant 0 : index
    %c0_134 = arith.constant 0 : index
    %119 = vector.load %arg2[%c0_132, %c0_133, %c0_134] : memref<5x32x212xbf16, #tpu.memory_space<vmem>>, vector<1x32x212xbf16>
    %120 = vector.shape_cast %119 : vector<1x32x212xbf16> to vector<32x212xbf16>
    %cst_135 = arith.constant dense<0.000000e+00> : vector<7x212xf32>
    %121 = tpu.matmul %118, %120, %cst_135 {dimension_numbers = #tpu.dot_dimension_numbers<[1], [0], [0], [1], [0, 0, 1, 1], [], []>} : vector<7x32xbf16>, vector<32x212xbf16>, vector<7x212xf32> -> vector<7x212xf32>
    %122 = arith.addf %116, %121 : vector<7x212xf32>
    %c0_136 = arith.constant 0 : index
    %c0_137 = arith.constant 0 : index
    %c1_138 = arith.constant 1 : index
    %c0_139 = arith.constant 0 : index
    %123 = vector.load %arg1[%c0_136, %c0_137, %c1_138, %c0_139] : memref<1x4x8x32xbf16, #tpu.memory_space<vmem>>, vector<1x1x7x32xbf16>
    %124 = vector.shape_cast %123 : vector<1x1x7x32xbf16> to vector<7x32xbf16>
    %c1_140 = arith.constant 1 : index
    %c0_141 = arith.constant 0 : index
    %c0_142 = arith.constant 0 : index
    %125 = vector.load %arg2[%c1_140, %c0_141, %c0_142] : memref<5x32x212xbf16, #tpu.memory_space<vmem>>, vector<1x32x212xbf16>
    %126 = vector.shape_cast %125 : vector<1x32x212xbf16> to vector<32x212xbf16>
    %cst_143 = arith.constant dense<0.000000e+00> : vector<7x212xf32>
    %127 = tpu.matmul %124, %126, %cst_143 {dimension_numbers = #tpu.dot_dimension_numbers<[1], [0], [0], [1], [0, 0, 1, 1], [], []>} : vector<7x32xbf16>, vector<32x212xbf16>, vector<7x212xf32> -> vector<7x212xf32>
    %128 = arith.addf %122, %127 : vector<7x212xf32>
    %c0_144 = arith.constant 0 : index
    %c1_145 = arith.constant 1 : index
    %c1_146 = arith.constant 1 : index
    %c0_147 = arith.constant 0 : index
    %129 = vector.load %arg1[%c0_144, %c1_145, %c1_146, %c0_147] : memref<1x4x8x32xbf16, #tpu.memory_space<vmem>>, vector<1x1x7x32xbf16>
    %130 = vector.shape_cast %129 : vector<1x1x7x32xbf16> to vector<7x32xbf16>
    %c2_148 = arith.constant 2 : index
    %c0_149 = arith.constant 0 : index
    %c0_150 = arith.constant 0 : index
    %131 = vector.load %arg2[%c2_148, %c0_149, %c0_150] : memref<5x32x212xbf16, #tpu.memory_space<vmem>>, vector<1x32x212xbf16>
    %132 = vector.shape_cast %131 : vector<1x32x212xbf16> to vector<32x212xbf16>
    %cst_151 = arith.constant dense<0.000000e+00> : vector<7x212xf32>
    %133 = tpu.matmul %130, %132, %cst_151 {dimension_numbers = #tpu.dot_dimension_numbers<[1], [0], [0], [1], [0, 0, 1, 1], [], []>} : vector<7x32xbf16>, vector<32x212xbf16>, vector<7x212xf32> -> vector<7x212xf32>
    %134 = arith.addf %128, %133 : vector<7x212xf32>
    %c0_152 = arith.constant 0 : index
    %c2_153 = arith.constant 2 : index
    %c1_154 = arith.constant 1 : index
    %c0_155 = arith.constant 0 : index
    %135 = vector.load %arg1[%c0_152, %c2_153, %c1_154, %c0_155] : memref<1x4x8x32xbf16, #tpu.memory_space<vmem>>, vector<1x1x7x32xbf16>
    %136 = vector.shape_cast %135 : vector<1x1x7x32xbf16> to vector<7x32xbf16>
    %c3_156 = arith.constant 3 : index
    %c0_157 = arith.constant 0 : index
    %c0_158 = arith.constant 0 : index
    %137 = vector.load %arg2[%c3_156, %c0_157, %c0_158] : memref<5x32x212xbf16, #tpu.memory_space<vmem>>, vector<1x32x212xbf16>
    %138 = vector.shape_cast %137 : vector<1x32x212xbf16> to vector<32x212xbf16>
    %cst_159 = arith.constant dense<0.000000e+00> : vector<7x212xf32>
    %139 = tpu.matmul %136, %138, %cst_159 {dimension_numbers = #tpu.dot_dimension_numbers<[1], [0], [0], [1], [0, 0, 1, 1], [], []>} : vector<7x32xbf16>, vector<32x212xbf16>, vector<7x212xf32> -> vector<7x212xf32>
    %140 = arith.addf %134, %139 : vector<7x212xf32>
    %c0_160 = arith.constant 0 : index
    %c3_161 = arith.constant 3 : index
    %c1_162 = arith.constant 1 : index
    %c0_163 = arith.constant 0 : index
    %141 = vector.load %arg1[%c0_160, %c3_161, %c1_162, %c0_163] : memref<1x4x8x32xbf16, #tpu.memory_space<vmem>>, vector<1x1x7x32xbf16>
    %142 = vector.shape_cast %141 : vector<1x1x7x32xbf16> to vector<7x32xbf16>
    %c4_164 = arith.constant 4 : index
    %c0_165 = arith.constant 0 : index
    %c0_166 = arith.constant 0 : index
    %143 = vector.load %arg2[%c4_164, %c0_165, %c0_166] : memref<5x32x212xbf16, #tpu.memory_space<vmem>>, vector<1x32x212xbf16>
    %144 = vector.shape_cast %143 : vector<1x32x212xbf16> to vector<32x212xbf16>
    %cst_167 = arith.constant dense<0.000000e+00> : vector<7x212xf32>
    %145 = tpu.matmul %142, %144, %cst_167 {dimension_numbers = #tpu.dot_dimension_numbers<[1], [0], [0], [1], [0, 0, 1, 1], [], []>} : vector<7x32xbf16>, vector<32x212xbf16>, vector<7x212xf32> -> vector<7x212xf32>
    %146 = arith.addf %140, %145 : vector<7x212xf32>
    %147 = vector.extract_strided_slice %146 {offsets = [0, 0], sizes = [7, 84], strides = [1, 1]} : vector<7x212xf32> to vector<7x84xf32>
    %148 = vector.extract_strided_slice %146 {offsets = [0, 128], sizes = [7, 84], strides = [1, 1]} : vector<7x212xf32> to vector<7x84xf32>
    %149 = arith.maximumf %147, %148 : vector<7x84xf32>
    %150 = arith.maximumf %115, %149 : vector<7x84xf32>
    %151 = vector.broadcast %0 : vector<1x84xf32> to vector<7x84xf32>
    %152 = arith.addf %150, %151 : vector<7x84xf32>
    %cst_168 = arith.constant 0.000000e+00 : f32
    %153 = vector.broadcast %cst_168 : f32 to vector<7x84xf32>
    %154 = arith.maximumf %152, %153 : vector<7x84xf32>
    %155 = arith.truncf %154 : vector<7x84xf32> to vector<7x84xbf16>
    %c1_169 = arith.constant 1 : index
    %c0_170 = arith.constant 0 : index
    %c0_171 = arith.constant 0 : index
    %156 = vector.load %arg9[%c1_169, %c0_170, %c0_171] : memref<2x7x84xbf16, #tpu.memory_space<vmem>>, vector<1x7x84xbf16>
    %157 = vector.shape_cast %156 : vector<1x7x84xbf16> to vector<7x84xbf16>
    %158 = vector.shape_cast %155 : vector<7x84xbf16> to vector<1x7x84xbf16>
    tpu.vector_store %arg9[%c1_169, %c0_170, %c0_171], %158 {strides = array<i32>} : memref<2x7x84xbf16, #tpu.memory_space<vmem>>, vector<1x7x84xbf16>,
    %cst_172 = arith.constant 0.000000e+00 : f32
    %159 = vector.broadcast %cst_172 : f32 to vector<5x208xf32>
    %c0_173 = arith.constant 0 : index
    %c0_174 = arith.constant 0 : index
    %c0_175 = arith.constant 0 : index
    %160 = vector.load %arg9[%c0_173, %c0_174, %c0_175] : memref<2x7x84xbf16, #tpu.memory_space<vmem>>, vector<1x5x84xbf16>
    %161 = vector.shape_cast %160 : vector<1x5x84xbf16> to vector<5x84xbf16>
    %c0_176 = arith.constant 0 : index
    %c0_177 = arith.constant 0 : index
    %c0_178 = arith.constant 0 : index
    %162 = vector.load %arg3[%c0_176, %c0_177, %c0_178] : memref<5x84x208xbf16, #tpu.memory_space<vmem>>, vector<1x84x208xbf16>
    %163 = vector.shape_cast %162 : vector<1x84x208xbf16> to vector<84x208xbf16>
    %cst_179 = arith.constant dense<0.000000e+00> : vector<5x208xf32>
    %164 = tpu.matmul %161, %163, %cst_179 {dimension_numbers = #tpu.dot_dimension_numbers<[1], [0], [0], [1], [0, 0, 1, 1], [], []>} : vector<5x84xbf16>, vector<84x208xbf16>, vector<5x208xf32> -> vector<5x208xf32>
    %165 = arith.addf %159, %164 : vector<5x208xf32>
    %c1_180 = arith.constant 1 : index
    %c0_181 = arith.constant 0 : index
    %c0_182 = arith.constant 0 : index
    %166 = vector.load %arg9[%c1_180, %c0_181, %c0_182] : memref<2x7x84xbf16, #tpu.memory_space<vmem>>, vector<1x5x84xbf16>
    %167 = vector.shape_cast %166 : vector<1x5x84xbf16> to vector<5x84xbf16>
    %c1_183 = arith.constant 1 : index
    %c0_184 = arith.constant 0 : index
    %c0_185 = arith.constant 0 : index
    %168 = vector.load %arg3[%c1_183, %c0_184, %c0_185] : memref<5x84x208xbf16, #tpu.memory_space<vmem>>, vector<1x84x208xbf16>
    %169 = vector.shape_cast %168 : vector<1x84x208xbf16> to vector<84x208xbf16>
    %cst_186 = arith.constant dense<0.000000e+00> : vector<5x208xf32>
    %170 = tpu.matmul %167, %169, %cst_186 {dimension_numbers = #tpu.dot_dimension_numbers<[1], [0], [0], [1], [0, 0, 1, 1], [], []>} : vector<5x84xbf16>, vector<84x208xbf16>, vector<5x208xf32> -> vector<5x208xf32>
    %171 = arith.addf %165, %170 : vector<5x208xf32>
    %c0_187 = arith.constant 0 : index
    %c1_188 = arith.constant 1 : index
    %c0_189 = arith.constant 0 : index
    %172 = vector.load %arg9[%c0_187, %c1_188, %c0_189] : memref<2x7x84xbf16, #tpu.memory_space<vmem>>, vector<1x5x84xbf16>
    %173 = vector.shape_cast %172 : vector<1x5x84xbf16> to vector<5x84xbf16>
    %c2_190 = arith.constant 2 : index
    %c0_191 = arith.constant 0 : index
    %c0_192 = arith.constant 0 : index
    %174 = vector.load %arg3[%c2_190, %c0_191, %c0_192] : memref<5x84x208xbf16, #tpu.memory_space<vmem>>, vector<1x84x208xbf16>
    %175 = vector.shape_cast %174 : vector<1x84x208xbf16> to vector<84x208xbf16>
    %cst_193 = arith.constant dense<0.000000e+00> : vector<5x208xf32>
    %176 = tpu.matmul %173, %175, %cst_193 {dimension_numbers = #tpu.dot_dimension_numbers<[1], [0], [0], [1], [0, 0, 1, 1], [], []>} : vector<5x84xbf16>, vector<84x208xbf16>, vector<5x208xf32> -> vector<5x208xf32>
    %177 = arith.addf %171, %176 : vector<5x208xf32>
    %c1_194 = arith.constant 1 : index
    %c1_195 = arith.constant 1 : index
    %c0_196 = arith.constant 0 : index
    %178 = vector.load %arg9[%c1_194, %c1_195, %c0_196] : memref<2x7x84xbf16, #tpu.memory_space<vmem>>, vector<1x5x84xbf16>
    %179 = vector.shape_cast %178 : vector<1x5x84xbf16> to vector<5x84xbf16>
    %c3_197 = arith.constant 3 : index
    %c0_198 = arith.constant 0 : index
    %c0_199 = arith.constant 0 : index
    %180 = vector.load %arg3[%c3_197, %c0_198, %c0_199] : memref<5x84x208xbf16, #tpu.memory_space<vmem>>, vector<1x84x208xbf16>
    %181 = vector.shape_cast %180 : vector<1x84x208xbf16> to vector<84x208xbf16>
    %cst_200 = arith.constant dense<0.000000e+00> : vector<5x208xf32>
    %182 = tpu.matmul %179, %181, %cst_200 {dimension_numbers = #tpu.dot_dimension_numbers<[1], [0], [0], [1], [0, 0, 1, 1], [], []>} : vector<5x84xbf16>, vector<84x208xbf16>, vector<5x208xf32> -> vector<5x208xf32>
    %183 = arith.addf %177, %182 : vector<5x208xf32>
    %c0_201 = arith.constant 0 : index
    %c2_202 = arith.constant 2 : index
    %c0_203 = arith.constant 0 : index
    %184 = vector.load %arg9[%c0_201, %c2_202, %c0_203] : memref<2x7x84xbf16, #tpu.memory_space<vmem>>, vector<1x5x84xbf16>
    %185 = vector.shape_cast %184 : vector<1x5x84xbf16> to vector<5x84xbf16>
    %c4_204 = arith.constant 4 : index
    %c0_205 = arith.constant 0 : index
    %c0_206 = arith.constant 0 : index
    %186 = vector.load %arg3[%c4_204, %c0_205, %c0_206] : memref<5x84x208xbf16, #tpu.memory_space<vmem>>, vector<1x84x208xbf16>
    %187 = vector.shape_cast %186 : vector<1x84x208xbf16> to vector<84x208xbf16>
    %cst_207 = arith.constant dense<0.000000e+00> : vector<5x208xf32>
    %188 = tpu.matmul %185, %187, %cst_207 {dimension_numbers = #tpu.dot_dimension_numbers<[1], [0], [0], [1], [0, 0, 1, 1], [], []>} : vector<5x84xbf16>, vector<84x208xbf16>, vector<5x208xf32> -> vector<5x208xf32>
    %189 = arith.addf %183, %188 : vector<5x208xf32>
    %190 = vector.extract_strided_slice %189 {offsets = [0, 0], sizes = [5, 80], strides = [1, 1]} : vector<5x208xf32> to vector<5x80xf32>
    %191 = vector.extract_strided_slice %189 {offsets = [0, 128], sizes = [5, 80], strides = [1, 1]} : vector<5x208xf32> to vector<5x80xf32>
    %192 = arith.maximumf %190, %191 : vector<5x80xf32>
    %cst_208 = arith.constant 0.000000e+00 : f32
    %193 = vector.broadcast %cst_208 : f32 to vector<5x208xf32>
    %c1_209 = arith.constant 1 : index
    %c0_210 = arith.constant 0 : index
    %c0_211 = arith.constant 0 : index
    %194 = vector.load %arg9[%c1_209, %c0_210, %c0_211] : memref<2x7x84xbf16, #tpu.memory_space<vmem>>, vector<1x5x84xbf16>
    %195 = vector.shape_cast %194 : vector<1x5x84xbf16> to vector<5x84xbf16>
    %c0_212 = arith.constant 0 : index
    %c0_213 = arith.constant 0 : index
    %c0_214 = arith.constant 0 : index
    %196 = vector.load %arg3[%c0_212, %c0_213, %c0_214] : memref<5x84x208xbf16, #tpu.memory_space<vmem>>, vector<1x84x208xbf16>
    %197 = vector.shape_cast %196 : vector<1x84x208xbf16> to vector<84x208xbf16>
    %cst_215 = arith.constant dense<0.000000e+00> : vector<5x208xf32>
    %198 = tpu.matmul %195, %197, %cst_215 {dimension_numbers = #tpu.dot_dimension_numbers<[1], [0], [0], [1], [0, 0, 1, 1], [], []>} : vector<5x84xbf16>, vector<84x208xbf16>, vector<5x208xf32> -> vector<5x208xf32>
    %199 = arith.addf %193, %198 : vector<5x208xf32>
    %c0_216 = arith.constant 0 : index
    %c1_217 = arith.constant 1 : index
    %c0_218 = arith.constant 0 : index
    %200 = vector.load %arg9[%c0_216, %c1_217, %c0_218] : memref<2x7x84xbf16, #tpu.memory_space<vmem>>, vector<1x5x84xbf16>
    %201 = vector.shape_cast %200 : vector<1x5x84xbf16> to vector<5x84xbf16>
    %c1_219 = arith.constant 1 : index
    %c0_220 = arith.constant 0 : index
    %c0_221 = arith.constant 0 : index
    %202 = vector.load %arg3[%c1_219, %c0_220, %c0_221] : memref<5x84x208xbf16, #tpu.memory_space<vmem>>, vector<1x84x208xbf16>
    %203 = vector.shape_cast %202 : vector<1x84x208xbf16> to vector<84x208xbf16>
    %cst_222 = arith.constant dense<0.000000e+00> : vector<5x208xf32>
    %204 = tpu.matmul %201, %203, %cst_222 {dimension_numbers = #tpu.dot_dimension_numbers<[1], [0], [0], [1], [0, 0, 1, 1], [], []>} : vector<5x84xbf16>, vector<84x208xbf16>, vector<5x208xf32> -> vector<5x208xf32>
    %205 = arith.addf %199, %204 : vector<5x208xf32>
    %c1_223 = arith.constant 1 : index
    %c1_224 = arith.constant 1 : index
    %c0_225 = arith.constant 0 : index
    %206 = vector.load %arg9[%c1_223, %c1_224, %c0_225] : memref<2x7x84xbf16, #tpu.memory_space<vmem>>, vector<1x5x84xbf16>
    %207 = vector.shape_cast %206 : vector<1x5x84xbf16> to vector<5x84xbf16>
    %c2_226 = arith.constant 2 : index
    %c0_227 = arith.constant 0 : index
    %c0_228 = arith.constant 0 : index
    %208 = vector.load %arg3[%c2_226, %c0_227, %c0_228] : memref<5x84x208xbf16, #tpu.memory_space<vmem>>, vector<1x84x208xbf16>
    %209 = vector.shape_cast %208 : vector<1x84x208xbf16> to vector<84x208xbf16>
    %cst_229 = arith.constant dense<0.000000e+00> : vector<5x208xf32>
    %210 = tpu.matmul %207, %209, %cst_229 {dimension_numbers = #tpu.dot_dimension_numbers<[1], [0], [0], [1], [0, 0, 1, 1], [], []>} : vector<5x84xbf16>, vector<84x208xbf16>, vector<5x208xf32> -> vector<5x208xf32>
    %211 = arith.addf %205, %210 : vector<5x208xf32>
    %c0_230 = arith.constant 0 : index
    %c2_231 = arith.constant 2 : index
    %c0_232 = arith.constant 0 : index
    %212 = vector.load %arg9[%c0_230, %c2_231, %c0_232] : memref<2x7x84xbf16, #tpu.memory_space<vmem>>, vector<1x5x84xbf16>
    %213 = vector.shape_cast %212 : vector<1x5x84xbf16> to vector<5x84xbf16>
    %c3_233 = arith.constant 3 : index
    %c0_234 = arith.constant 0 : index
    %c0_235 = arith.constant 0 : index
    %214 = vector.load %arg3[%c3_233, %c0_234, %c0_235] : memref<5x84x208xbf16, #tpu.memory_space<vmem>>, vector<1x84x208xbf16>
    %215 = vector.shape_cast %214 : vector<1x84x208xbf16> to vector<84x208xbf16>
    %cst_236 = arith.constant dense<0.000000e+00> : vector<5x208xf32>
    %216 = tpu.matmul %213, %215, %cst_236 {dimension_numbers = #tpu.dot_dimension_numbers<[1], [0], [0], [1], [0, 0, 1, 1], [], []>} : vector<5x84xbf16>, vector<84x208xbf16>, vector<5x208xf32> -> vector<5x208xf32>
    %217 = arith.addf %211, %216 : vector<5x208xf32>
    %c1_237 = arith.constant 1 : index
    %c2_238 = arith.constant 2 : index
    %c0_239 = arith.constant 0 : index
    %218 = vector.load %arg9[%c1_237, %c2_238, %c0_239] : memref<2x7x84xbf16, #tpu.memory_space<vmem>>, vector<1x5x84xbf16>
    %219 = vector.shape_cast %218 : vector<1x5x84xbf16> to vector<5x84xbf16>
    %c4_240 = arith.constant 4 : index
    %c0_241 = arith.constant 0 : index
    %c0_242 = arith.constant 0 : index
    %220 = vector.load %arg3[%c4_240, %c0_241, %c0_242] : memref<5x84x208xbf16, #tpu.memory_space<vmem>>, vector<1x84x208xbf16>
    %221 = vector.shape_cast %220 : vector<1x84x208xbf16> to vector<84x208xbf16>
    %cst_243 = arith.constant dense<0.000000e+00> : vector<5x208xf32>
    %222 = tpu.matmul %219, %221, %cst_243 {dimension_numbers = #tpu.dot_dimension_numbers<[1], [0], [0], [1], [0, 0, 1, 1], [], []>} : vector<5x84xbf16>, vector<84x208xbf16>, vector<5x208xf32> -> vector<5x208xf32>
    %223 = arith.addf %217, %222 : vector<5x208xf32>
    %224 = vector.extract_strided_slice %223 {offsets = [0, 0], sizes = [5, 80], strides = [1, 1]} : vector<5x208xf32> to vector<5x80xf32>
    %225 = vector.extract_strided_slice %223 {offsets = [0, 128], sizes = [5, 80], strides = [1, 1]} : vector<5x208xf32> to vector<5x80xf32>
    %226 = arith.maximumf %224, %225 : vector<5x80xf32>
    %227 = arith.maximumf %192, %226 : vector<5x80xf32>
    %228 = vector.broadcast %1 : vector<1x80xf32> to vector<5x80xf32>
    %229 = arith.addf %227, %228 : vector<5x80xf32>
    %cst_244 = arith.constant 0.000000e+00 : f32
    %230 = vector.broadcast %cst_244 : f32 to vector<5x80xf32>
    %231 = arith.maximumf %229, %230 : vector<5x80xf32>
    %232 = arith.truncf %231 : vector<5x80xf32> to vector<5x80xbf16>
    %c0_245 = arith.constant 0 : index
    %c0_246 = arith.constant 0 : index
    %233 = vector.load %arg10[%c0_245, %c0_246] : memref<5x80xbf16, #tpu.memory_space<vmem>>, vector<5x80xbf16>
    tpu.vector_store %arg10[%c0_245, %c0_246], %232 {strides = array<i32>} : memref<5x80xbf16, #tpu.memory_space<vmem>>, vector<5x80xbf16>,
    %c0_247 = arith.constant 0 : index
    %c0_248 = arith.constant 0 : index
    %234 = vector.load %arg10[%c0_247, %c0_248] : memref<5x80xbf16, #tpu.memory_space<vmem>>, vector<1x80xbf16>
    %c0_249 = arith.constant 0 : index
    %c0_250 = arith.constant 0 : index
    %c0_251 = arith.constant 0 : index
    %235 = vector.load %arg4[%c0_249, %c0_250, %c0_251] : memref<5x80x120xbf16, #tpu.memory_space<vmem>>, vector<1x80x120xbf16>
    %236 = vector.shape_cast %235 : vector<1x80x120xbf16> to vector<80x120xbf16>
    %cst_252 = arith.constant dense<0.000000e+00> : vector<1x120xf32>
    %237 = tpu.matmul %234, %236, %cst_252 {dimension_numbers = #tpu.dot_dimension_numbers<[1], [0], [0], [1], [0, 0, 1, 1], [], []>} : vector<1x80xbf16>, vector<80x120xbf16>, vector<1x120xf32> -> vector<1x120xf32>
    %238 = arith.addf %2, %237 : vector<1x120xf32>
    %c1_253 = arith.constant 1 : index
    %c0_254 = arith.constant 0 : index
    %239 = vector.load %arg10[%c1_253, %c0_254] : memref<5x80xbf16, #tpu.memory_space<vmem>>, vector<1x80xbf16>
    %c1_255 = arith.constant 1 : index
    %c0_256 = arith.constant 0 : index
    %c0_257 = arith.constant 0 : index
    %240 = vector.load %arg4[%c1_255, %c0_256, %c0_257] : memref<5x80x120xbf16, #tpu.memory_space<vmem>>, vector<1x80x120xbf16>
    %241 = vector.shape_cast %240 : vector<1x80x120xbf16> to vector<80x120xbf16>
    %cst_258 = arith.constant dense<0.000000e+00> : vector<1x120xf32>
    %242 = tpu.matmul %239, %241, %cst_258 {dimension_numbers = #tpu.dot_dimension_numbers<[1], [0], [0], [1], [0, 0, 1, 1], [], []>} : vector<1x80xbf16>, vector<80x120xbf16>, vector<1x120xf32> -> vector<1x120xf32>
    %243 = arith.addf %238, %242 : vector<1x120xf32>
    %c2_259 = arith.constant 2 : index
    %c0_260 = arith.constant 0 : index
    %244 = vector.load %arg10[%c2_259, %c0_260] : memref<5x80xbf16, #tpu.memory_space<vmem>>, vector<1x80xbf16>
    %c2_261 = arith.constant 2 : index
    %c0_262 = arith.constant 0 : index
    %c0_263 = arith.constant 0 : index
    %245 = vector.load %arg4[%c2_261, %c0_262, %c0_263] : memref<5x80x120xbf16, #tpu.memory_space<vmem>>, vector<1x80x120xbf16>
    %246 = vector.shape_cast %245 : vector<1x80x120xbf16> to vector<80x120xbf16>
    %cst_264 = arith.constant dense<0.000000e+00> : vector<1x120xf32>
    %247 = tpu.matmul %244, %246, %cst_264 {dimension_numbers = #tpu.dot_dimension_numbers<[1], [0], [0], [1], [0, 0, 1, 1], [], []>} : vector<1x80xbf16>, vector<80x120xbf16>, vector<1x120xf32> -> vector<1x120xf32>
    %248 = arith.addf %243, %247 : vector<1x120xf32>
    %c3_265 = arith.constant 3 : index
    %c0_266 = arith.constant 0 : index
    %249 = vector.load %arg10[%c3_265, %c0_266] : memref<5x80xbf16, #tpu.memory_space<vmem>>, vector<1x80xbf16>
    %c3_267 = arith.constant 3 : index
    %c0_268 = arith.constant 0 : index
    %c0_269 = arith.constant 0 : index
    %250 = vector.load %arg4[%c3_267, %c0_268, %c0_269] : memref<5x80x120xbf16, #tpu.memory_space<vmem>>, vector<1x80x120xbf16>
    %251 = vector.shape_cast %250 : vector<1x80x120xbf16> to vector<80x120xbf16>
    %cst_270 = arith.constant dense<0.000000e+00> : vector<1x120xf32>
    %252 = tpu.matmul %249, %251, %cst_270 {dimension_numbers = #tpu.dot_dimension_numbers<[1], [0], [0], [1], [0, 0, 1, 1], [], []>} : vector<1x80xbf16>, vector<80x120xbf16>, vector<1x120xf32> -> vector<1x120xf32>
    %253 = arith.addf %248, %252 : vector<1x120xf32>
    %c4_271 = arith.constant 4 : index
    %c0_272 = arith.constant 0 : index
    %254 = vector.load %arg10[%c4_271, %c0_272] : memref<5x80xbf16, #tpu.memory_space<vmem>>, vector<1x80xbf16>
    %c4_273 = arith.constant 4 : index
    %c0_274 = arith.constant 0 : index
    %c0_275 = arith.constant 0 : index
    %255 = vector.load %arg4[%c4_273, %c0_274, %c0_275] : memref<5x80x120xbf16, #tpu.memory_space<vmem>>, vector<1x80x120xbf16>
    %256 = vector.shape_cast %255 : vector<1x80x120xbf16> to vector<80x120xbf16>
    %cst_276 = arith.constant dense<0.000000e+00> : vector<1x120xf32>
    %257 = tpu.matmul %254, %256, %cst_276 {dimension_numbers = #tpu.dot_dimension_numbers<[1], [0], [0], [1], [0, 0, 1, 1], [], []>} : vector<1x80xbf16>, vector<80x120xbf16>, vector<1x120xf32> -> vector<1x120xf32>
    %258 = arith.addf %253, %257 : vector<1x120xf32>
    %cst_277 = arith.constant 0.000000e+00 : f32
    %259 = vector.broadcast %cst_277 : f32 to vector<1x120xf32>
    %260 = arith.maximumf %258, %259 : vector<1x120xf32>
    %261 = arith.truncf %260 : vector<1x120xf32> to vector<1x120xbf16>
    %c0_278 = arith.constant 0 : index
    %c0_279 = arith.constant 0 : index
    %262 = vector.load %arg5[%c0_278, %c0_279] : memref<120x96xbf16, #tpu.memory_space<vmem>>, vector<120x96xbf16>
    %cst_280 = arith.constant dense<0.000000e+00> : vector<1x96xf32>
    %263 = tpu.matmul %261, %262, %cst_280 {dimension_numbers = #tpu.dot_dimension_numbers<[1], [0], [0], [1], [0, 0, 1, 1], [], []>} : vector<1x120xbf16>, vector<120x96xbf16>, vector<1x96xf32> -> vector<1x96xf32>
    %264 = arith.addf %263, %3 : vector<1x96xf32>
    %cst_281 = arith.constant 0.000000e+00 : f32
    %265 = vector.broadcast %cst_281 : f32 to vector<1x96xf32>
    %266 = arith.maximumf %264, %265 : vector<1x96xf32>
    %267 = arith.truncf %266 : vector<1x96xf32> to vector<1x96xbf16>
    %c0_282 = arith.constant 0 : index
    %c0_283 = arith.constant 0 : index
    %268 = vector.load %arg6[%c0_282, %c0_283] : memref<96x138xbf16, #tpu.memory_space<vmem>>, vector<96x10xbf16>
    %cst_284 = arith.constant dense<0.000000e+00> : vector<1x10xf32>
    %269 = tpu.matmul %267, %268, %cst_284 {dimension_numbers = #tpu.dot_dimension_numbers<[1], [0], [0], [1], [0, 0, 1, 1], [], []>} : vector<1x96xbf16>, vector<96x10xbf16>, vector<1x10xf32> -> vector<1x10xf32>
    %270 = arith.addf %269, %4 : vector<1x10xf32>
    %c0_285 = arith.constant 0 : index
    %c0_286 = arith.constant 0 : index
    %c0_287 = arith.constant 0 : index
    %271 = vector.load %arg8[%c0_285, %c0_286, %c0_287] : memref<1x2x10xf32, #tpu.memory_space<vmem>>, vector<1x1x10xf32>
    %272 = vector.shape_cast %271 : vector<1x1x10xf32> to vector<1x10xf32>
    %273 = vector.shape_cast %270 : vector<1x10xf32> to vector<1x1x10xf32>
    tpu.vector_store %arg8[%c0_285, %c0_286, %c0_287], %273 {strides = array<i32>} : memref<1x2x10xf32, #tpu.memory_space<vmem>>, vector<1x1x10xf32>,
    %cst_288 = arith.constant 1.000000e-01 : f32
    %274 = vector.broadcast %cst_288 : f32 to vector<1x96xf32>
    %275 = arith.divf %266, %274 : vector<1x96xf32>
    %276 = math.roundeven %275 : vector<1x96xf32>
    %cst_289 = arith.constant -1.270000e+02 : f32
    %cst_290 = arith.constant 1.280000e+02 : f32
    %277 = vector.broadcast %cst_289 : f32 to vector<1x96xf32>
    %278 = arith.maximumf %277, %276 : vector<1x96xf32>
    %279 = vector.broadcast %cst_290 : f32 to vector<1x96xf32>
    %280 = arith.minimumf %279, %278 : vector<1x96xf32>
    %281 = arith.truncf %280 : vector<1x96xf32> to vector<1x96xbf16>
    %c0_291 = arith.constant 0 : index
    %c128_292 = arith.constant 128 : index
    %282 = vector.load %arg6[%c0_291, %c128_292] : memref<96x138xbf16, #tpu.memory_space<vmem>>, vector<96x10xbf16>
    %cst_293 = arith.constant dense<0.000000e+00> : vector<1x10xf32>
    %283 = tpu.matmul %281, %282, %cst_293 {dimension_numbers = #tpu.dot_dimension_numbers<[1], [0], [0], [1], [0, 0, 1, 1], [], []>} : vector<1x96xbf16>, vector<96x10xbf16>, vector<1x10xf32> -> vector<1x10xf32>
    %c0_294 = arith.constant 0 : index
    %c1_295 = arith.constant 1 : index
    %c0_296 = arith.constant 0 : index
    %284 = vector.load %arg8[%c0_294, %c1_295, %c0_296] : memref<1x2x10xf32, #tpu.memory_space<vmem>>, vector<1x1x10xf32>
    %285 = vector.shape_cast %284 : vector<1x1x10xf32> to vector<1x10xf32>
    %286 = vector.shape_cast %283 : vector<1x10xf32> to vector<1x1x10xf32>
    tpu.vector_store %arg8[%c0_294, %c1_295, %c0_296], %286 {strides = array<i32>} : memref<1x2x10xf32, #tpu.memory_space<vmem>>, vector<1x1x10xf32>,
    return
  }
  func.func @transform_0(%arg0: i32) -> (i32, i32, i32, i32) {
    %c0_i32 = arith.constant 0 : i32
    %c0_i32_0 = arith.constant 0 : i32
    %c0_i32_1 = arith.constant 0 : i32
    %c0_i32_2 = arith.constant 0 : i32
    return %arg0, %c0_i32, %c0_i32_0, %c0_i32_1 : i32, i32, i32, i32
  }
  func.func @transform_1(%arg0: i32) -> (i32, i32, i32) {
    %c0_i32 = arith.constant 0 : i32
    %c0_i32_0 = arith.constant 0 : i32
    %c0_i32_1 = arith.constant 0 : i32
    %c0_i32_2 = arith.constant 0 : i32
    return %c0_i32, %c0_i32_0, %c0_i32_1 : i32, i32, i32
  }
  func.func @transform_2(%arg0: i32) -> (i32, i32, i32) {
    %c0_i32 = arith.constant 0 : i32
    %c0_i32_0 = arith.constant 0 : i32
    %c0_i32_1 = arith.constant 0 : i32
    %c0_i32_2 = arith.constant 0 : i32
    return %c0_i32, %c0_i32_0, %c0_i32_1 : i32, i32, i32
  }
  func.func @transform_3(%arg0: i32) -> (i32, i32, i32) {
    %c0_i32 = arith.constant 0 : i32
    %c0_i32_0 = arith.constant 0 : i32
    %c0_i32_1 = arith.constant 0 : i32
    %c0_i32_2 = arith.constant 0 : i32
    return %c0_i32, %c0_i32_0, %c0_i32_1 : i32, i32, i32
  }
  func.func @transform_4(%arg0: i32) -> (i32, i32) {
    %c0_i32 = arith.constant 0 : i32
    %c0_i32_0 = arith.constant 0 : i32
    %c0_i32_1 = arith.constant 0 : i32
    return %c0_i32, %c0_i32_0 : i32, i32
  }
  func.func @transform_5(%arg0: i32) -> (i32, i32) {
    %c0_i32 = arith.constant 0 : i32
    %c0_i32_0 = arith.constant 0 : i32
    %c0_i32_1 = arith.constant 0 : i32
    return %c0_i32, %c0_i32_0 : i32, i32
  }
  func.func @transform_6(%arg0: i32) -> (i32, i32) {
    %c0_i32 = arith.constant 0 : i32
    %c0_i32_0 = arith.constant 0 : i32
    %c0_i32_1 = arith.constant 0 : i32
    return %c0_i32, %c0_i32_0 : i32, i32
  }
  func.func @transform_7(%arg0: i32) -> (i32, i32, i32) {
    %c0_i32 = arith.constant 0 : i32
    %c0_i32_0 = arith.constant 0 : i32
    %c0_i32_1 = arith.constant 0 : i32
    return %arg0, %c0_i32, %c0_i32_0 : i32, i32, i32
  }
}

</mosaic_0001>

<llo_original>
// kernel: tile.18
$region0: #{tile.18}
  #allocation2 [shape = 's32[1]{0}', space=sflag, size = 0x4, scoped, tag = 'scoped memory for tile.18']
  %s0 = inlined_call_operand.hbm [shape: f32[16], index: 0, kind: input, shape index: {}]
  %s1 = inlined_call_operand.vmem [shape: f32[5,16], index: 1, kind: output, shape index: {}]
  $region1: #{tile.18} parent=0
    #allocation0 [shape = 'u8[512]{0}', space=vmem, size = 0x400, scoped, tag = 'operand span for operand 0']
    #allocation1 [shape = 's32[1]{0}', space=sflag, size = 0x4, scoped, tag = 'scoped memory for tile.18']
    %2 = vsyncpa [#allocation1], 0
    // Predicated region
    $region2: #{tile.18} parent=1 // pred_check
      _
    $region3: #{tile.18} parent=1 // pred_check_branch
      %4 = sbr.rel (0) target = $region5
    $region4: #{tile.18} parent=1 // pred_region
      %6 = vsyncadd [#allocation1], 0
      %s8 = sshll.u32 %s0, 4
      %s9 = int_to_ptr.hbm [resolvable:$true] %s8
      %s10 = sshll.u32 [#allocation0], 4
      %s11 = int_to_ptr.vmem [resolvable:$true] %s10
      %13 = dma.hbm_to_vmem [thread:$0]  %s9, 16, %s11, [#allocation1]
    $region5: #{tile.18} parent=1 // pred_fallthru
      _
    // Predicated region
    $region6: #{tile.18} parent=1 // pred_check
      _
    $region7: #{tile.18} parent=1 // pred_check_branch
      %15 = sbr.rel (0) target = $region9
    $region8: #{tile.18} parent=1 // pred_region
      %17 = dma.done [#allocation1], 16
    $region9: #{tile.18} parent=1 // pred_fallthru
      _
    %v18 = vld [vmem:[#allocation0] ss:$0 sm:$0xff]
    %19 = vst [vmem:[%s1] sm:$0xff] %v18
    %20 = vsyncpa [#allocation1], 1

// kernel: lenet_forward.1
$region0: #{lenet_forward.1}
  #allocation0 [shape = 'u32[]', space=smem, size = 0x4, offset = 0x4, fixed_abs, tag = 'smem constant byte address 0x4 - core index']
  #allocation1 [shape = 'u32[72,128]{1,0:T(1,128)}', space=vmem, size = 0x9000, scoped, tag = 'internal scratch']
  #allocation2 [shape = 'bf16[2,7,84]{2,1,0:T(8,128)(2,1)}', space=vmem, size = 0x1000, scoped, tag = 'scratch operand']
  #allocation3 [shape = 'bf16[5,80]{1,0:T(8,128)(2,1)}', space=vmem, size = 0x800, scoped, tag = 'scratch operand']
  %s0 = inlined_call_operand.vmem [shape: bf16[2,4,8,32], index: 0, kind: input, shape index: {}]
  %s1 = inlined_call_operand.vmem [shape: bf16[5,32,212], index: 1, kind: input, shape index: {}]
  %s2 = inlined_call_operand.vmem [shape: bf16[5,84,208], index: 2, kind: input, shape index: {}]
  %s3 = inlined_call_operand.vmem [shape: bf16[5,80,120], index: 3, kind: input, shape index: {}]
  %s4 = inlined_call_operand.vmem [shape: bf16[120,96], index: 4, kind: input, shape index: {}]
  %s5 = inlined_call_operand.vmem [shape: bf16[96,138], index: 5, kind: input, shape index: {}]
  %s6 = inlined_call_operand.vmem [shape: f32[1,640], index: 6, kind: input, shape index: {}]
  %s7 = inlined_call_operand.vmem [shape: f32[2,2,10], index: 7, kind: output, shape index: {}]
  %s8 = sld [smem:[#allocation0]]
  $region61: #{lenet_forward.1} parent=0
    _
  %s10 = ssub.s32 1, %s8
  %s11 = scalar_select 0, %s10, %s8
  loop: start=0, step=1, limit=4
  $region2: #{lenet_forward.1} parent=0 // loop_pre_header
    _
  $region3: #{lenet_forward.1} parent=0 // loop_header
    %s13 = sphi 0, %s17
    %p14 = scmp.ge.s32.totalorder %s13, 4
    %s23 = sphi 0, %s25
    %s26 = sphi 0, %s23
    %s27 = sphi 0, %s26
    %s43 = sphi 0, %s27
    %s47 = sphi 0, %s47
    %s49 = sphi 0, %s47
    %s50 = sphi 0, %s49
    %s64 = sphi 0, %s50
    %s68 = sphi 0, %s68
    %s70 = sphi 0, %s68
    %s71 = sphi 0, %s70
    %s85 = sphi 0, %s71
    %s89 = sphi 0, %s89
    %s91 = sphi 0, %s89
    %s92 = sphi 0, %s91
    %s106 = sphi 0, %s92
    %s110 = sphi 0, %s110
    %s112 = sphi 0, %s110
    %s113 = sphi 0, %s112
    %s127 = sphi 0, %s113
    %s131 = sphi 0, %s131
    %s133 = sphi 0, %s131
    %s134 = sphi 0, %s133
    %s148 = sphi 0, %s134
    %s152 = sphi 0, %s152
    %s154 = sphi 0, %s152
    %s155 = sphi 0, %s154
    %s169 = sphi 0, %s155
    %s175 = sphi 0, %s177
    %s178 = sphi 0, %s175
    %s179 = sphi 0, %s178
    %s195 = sphi 0, %s179
  $region4: #{lenet_forward.1} parent=0 // loop_header_branch
    %16 = sbr.rel (%p14) target = $region8
  $region5: #{lenet_forward.1} parent=0 // loop_body
    %s18 = ssub.s32 %s13, 1
    %s19 = ssub.s32 %s13, 2
    %s20 = sadd.s32 %s13, 1
    %s21 = ssub.s32 %s13, %s20
    %p22 = scmp.eq.s32.totalorder %s21, 0
    %s24 = sadd.s32 %s23, 1
    %s25 = scalar_select %p22, %s23, %s24
    %p28 = pneg %p22
    %p29 = scmp.eq.s32.totalorder %s13, 1
    %p30 = por %p28, %p29
    %p31 = scmp.ne.s32.totalorder %s23, %s26
    %p32 = scmp.eq.s32.totalorder %s13, 0
    %p33 = por %p31, %p32
    %p34 = scmp.ne.s32.totalorder %s23, %s26
    %p35 = scmp.eq.s32.totalorder %s18, 1
    %p36 = por %p34, %p35
    %p37 = scmp.ne.s32.totalorder %s26, %s27
    %p38 = scmp.eq.s32.totalorder %s18, 0
    %p39 = por %p37, %p38
    %p40 = scmp.ne.s32.totalorder %s26, %s27
    %p41 = scmp.eq.s32.totalorder %s19, 1
    %p42 = por %p40, %p41
    %p44 = scmp.ne.s32.totalorder %s27, %s43
    %p45 = scmp.eq.s32.totalorder %s19, 0
    %p46 = por %p44, %p45
    %s48 = sadd.s32 %s47, 1
    %p51 = scmp.eq.s32.totalorder %s13, 1
    %p52 = scmp.ne.s32.totalorder %s47, %s49
    %p53 = scmp.eq.s32.totalorder %s13, 0
    %p54 = por %p52, %p53
    %p55 = scmp.ne.s32.totalorder %s47, %s49
    %p56 = scmp.eq.s32.totalorder %s18, 1
    %p57 = por %p55, %p56
    %p58 = scmp.ne.s32.totalorder %s49, %s50
    %p59 = scmp.eq.s32.totalorder %s18, 0
    %p60 = por %p58, %p59
    %p61 = scmp.ne.s32.totalorder %s49, %s50
    %p62 = scmp.eq.s32.totalorder %s19, 1
    %p63 = por %p61, %p62
    %p65 = scmp.ne.s32.totalorder %s50, %s64
    %p66 = scmp.eq.s32.totalorder %s19, 0
    %p67 = por %p65, %p66
    %s69 = sadd.s32 %s68, 1
    %p72 = scmp.eq.s32.totalorder %s13, 1
    %p73 = scmp.ne.s32.totalorder %s68, %s70
    %p74 = scmp.eq.s32.totalorder %s13, 0
    %p75 = por %p73, %p74
    %p76 = scmp.ne.s32.totalorder %s68, %s70
    %p77 = scmp.eq.s32.totalorder %s18, 1
    %p78 = por %p76, %p77
    %p79 = scmp.ne.s32.totalorder %s70, %s71
    %p80 = scmp.eq.s32.totalorder %s18, 0
    %p81 = por %p79, %p80
    %p82 = scmp.ne.s32.totalorder %s70, %s71
    %p83 = scmp.eq.s32.totalorder %s19, 1
    %p84 = por %p82, %p83
    %p86 = scmp.ne.s32.totalorder %s71, %s85
    %p87 = scmp.eq.s32.totalorder %s19, 0
    %p88 = por %p86, %p87
    %s90 = sadd.s32 %s89, 1
    %p93 = scmp.eq.s32.totalorder %s13, 1
    %p94 = scmp.ne.s32.totalorder %s89, %s91
    %p95 = scmp.eq.s32.totalorder %s13, 0
    %p96 = por %p94, %p95
    %p97 = scmp.ne.s32.totalorder %s89, %s91
    %p98 = scmp.eq.s32.totalorder %s18, 1
    %p99 = por %p97, %p98
    %p100 = scmp.ne.s32.totalorder %s91, %s92
    %p101 = scmp.eq.s32.totalorder %s18, 0
    %p102 = por %p100, %p101
    %p103 = scmp.ne.s32.totalorder %s91, %s92
    %p104 = scmp.eq.s32.totalorder %s19, 1
    %p105 = por %p103, %p104
    %p107 = scmp.ne.s32.totalorder %s92, %s106
    %p108 = scmp.eq.s32.totalorder %s19, 0
    %p109 = por %p107, %p108
    %s111 = sadd.s32 %s110, 1
    %p114 = scmp.eq.s32.totalorder %s13, 1
    %p115 = scmp.ne.s32.totalorder %s110, %s112
    %p116 = scmp.eq.s32.totalorder %s13, 0
    %p117 = por %p115, %p116
    %p118 = scmp.ne.s32.totalorder %s110, %s112
    %p119 = scmp.eq.s32.totalorder %s18, 1
    %p120 = por %p118, %p119
    %p121 = scmp.ne.s32.totalorder %s112, %s113
    %p122 = scmp.eq.s32.totalorder %s18, 0
    %p123 = por %p121, %p122
    %p124 = scmp.ne.s32.totalorder %s112, %s113
    %p125 = scmp.eq.s32.totalorder %s19, 1
    %p126 = por %p124, %p125
    %p128 = scmp.ne.s32.totalorder %s113, %s127
    %p129 = scmp.eq.s32.totalorder %s19, 0
    %p130 = por %p128, %p129
    %s132 = sadd.s32 %s131, 1
    %p135 = scmp.eq.s32.totalorder %s13, 1
    %p136 = scmp.ne.s32.totalorder %s131, %s133
    %p137 = scmp.eq.s32.totalorder %s13, 0
    %p138 = por %p136, %p137
    %p139 = scmp.ne.s32.totalorder %s131, %s133
    %p140 = scmp.eq.s32.totalorder %s18, 1
    %p141 = por %p139, %p140
    %p142 = scmp.ne.s32.totalorder %s133, %s134
    %p143 = scmp.eq.s32.totalorder %s18, 0
    %p144 = por %p142, %p143
    %p145 = scmp.ne.s32.totalorder %s133, %s134
    %p146 = scmp.eq.s32.totalorder %s19, 1
    %p147 = por %p145, %p146
    %p149 = scmp.ne.s32.totalorder %s134, %s148
    %p150 = scmp.eq.s32.totalorder %s19, 0
    %p151 = por %p149, %p150
    %s153 = sadd.s32 %s152, 1
    %p156 = scmp.eq.s32.totalorder %s13, 1
    %p157 = scmp.ne.s32.totalorder %s152, %s154
    %p158 = scmp.eq.s32.totalorder %s13, 0
    %p159 = por %p157, %p158
    %p160 = scmp.ne.s32.totalorder %s152, %s154
    %p161 = scmp.eq.s32.totalorder %s18, 1
    %p162 = por %p160, %p161
    %p163 = scmp.ne.s32.totalorder %s154, %s155
    %p164 = scmp.eq.s32.totalorder %s18, 0
    %p165 = por %p163, %p164
    %p166 = scmp.ne.s32.totalorder %s154, %s155
    %p167 = scmp.eq.s32.totalorder %s19, 1
    %p168 = por %p166, %p167
    %p170 = scmp.ne.s32.totalorder %s155, %s169
    %p171 = scmp.eq.s32.totalorder %s19, 0
    %p172 = por %p170, %p171
    %s173 = ssub.s32 %s13, %s20
    %p174 = scmp.eq.s32.totalorder %s173, 0
    %s176 = sadd.s32 %s175, 1
    %s177 = scalar_select %p174, %s175, %s176
    %p180 = pneg %p174
    %p181 = scmp.eq.s32.totalorder %s13, 1
    %p182 = por %p180, %p181
    %p183 = scmp.ne.s32.totalorder %s175, %s178
    %p184 = scmp.eq.s32.totalorder %s13, 0
    %p185 = por %p183, %p184
    %p186 = scmp.ne.s32.totalorder %s175, %s178
    %p187 = scmp.eq.s32.totalorder %s18, 1
    %p188 = por %p186, %p187
    %p189 = scmp.ne.s32.totalorder %s178, %s179
    %p190 = scmp.eq.s32.totalorder %s18, 0
    %p191 = por %p189, %p190
    %p192 = scmp.ne.s32.totalorder %s178, %s179
    %p193 = scmp.eq.s32.totalorder %s19, 1
    %p194 = por %p192, %p193
    %p196 = scmp.ne.s32.totalorder %s179, %s195
    %p197 = scmp.eq.s32.totalorder %s19, 0
    %p198 = por %p196, %p197
    %p199 = scmp.le.s32.totalorder 1, %s13
    %p200 = scmp.lt.s32.totalorder %s13, 3
    %p201 = pnand %p199, %p200
    %p202 = pneg %p201
    // Predicated region
    $region9: #{lenet_forward.1} parent=5 // pred_check
      _
    $region10: #{lenet_forward.1} parent=5 // pred_check_branch
      %204 = sbr.rel (%p201) target = $region12
    $region11: #{lenet_forward.1} parent=5 // pred_region
      %s205 = ssub.s32 %s13, 1
      // Predicated region
      $region13: #{lenet_forward.1} parent=11 // pred_check
        %p206 = pneg %p60
      $region14: #{lenet_forward.1} parent=11 // pred_check_branch
        %208 = sbr.rel (%p206) target = $region16
      $region15: #{lenet_forward.1} parent=11 // pred_region
        _
      $region16: #{lenet_forward.1} parent=11 // pred_fallthru
        _
      // Predicated region
      $region17: #{lenet_forward.1} parent=11 // pred_check
        %p209 = pneg %p81
      $region18: #{lenet_forward.1} parent=11 // pred_check_branch
        %211 = sbr.rel (%p209) target = $region20
      $region19: #{lenet_forward.1} parent=11 // pred_region
        _
      $region20: #{lenet_forward.1} parent=11 // pred_fallthru
        _
      // Predicated region
      $region21: #{lenet_forward.1} parent=11 // pred_check
        %p212 = pneg %p102
      $region22: #{lenet_forward.1} parent=11 // pred_check_branch
        %214 = sbr.rel (%p212) target = $region24
      $region23: #{lenet_forward.1} parent=11 // pred_region
        _
      $region24: #{lenet_forward.1} parent=11 // pred_fallthru
        _
      // Predicated region
      $region25: #{lenet_forward.1} parent=11 // pred_check
        %p215 = pneg %p123
      $region26: #{lenet_forward.1} parent=11 // pred_check_branch
        %217 = sbr.rel (%p215) target = $region28
      $region27: #{lenet_forward.1} parent=11 // pred_region
        _
      $region28: #{lenet_forward.1} parent=11 // pred_fallthru
        _
      // Predicated region
      $region29: #{lenet_forward.1} parent=11 // pred_check
        %p218 = pneg %p144
      $region30: #{lenet_forward.1} parent=11 // pred_check_branch
        %220 = sbr.rel (%p218) target = $region32
      $region31: #{lenet_forward.1} parent=11 // pred_region
        _
      $region32: #{lenet_forward.1} parent=11 // pred_fallthru
        _
      // Predicated region
      $region33: #{lenet_forward.1} parent=11 // pred_check
        %p221 = pneg %p165
      $region34: #{lenet_forward.1} parent=11 // pred_check_branch
        %223 = sbr.rel (%p221) target = $region36
      $region35: #{lenet_forward.1} parent=11 // pred_region
        _
      $region36: #{lenet_forward.1} parent=11 // pred_fallthru
        _
    $region12: #{lenet_forward.1} parent=5 // pred_fallthru
      _
    %p224 = scmp.lt.s32.totalorder %s13, 2
    // Predicated region
    $region37: #{lenet_forward.1} parent=5 // pred_check
      %p225 = pneg %p224
    $region38: #{lenet_forward.1} parent=5 // pred_check_branch
      %227 = sbr.rel (%p225) target = $region40
    $region39: #{lenet_forward.1} parent=5 // pred_region
      // Predicated region
      $region41: #{lenet_forward.1} parent=39 // pred_check
        %p228 = pneg %p33
      $region42: #{lenet_forward.1} parent=39 // pred_check_branch
        %230 = sbr.rel (%p228) target = $region44
      $region43: #{lenet_forward.1} parent=39 // pred_region
        %p231 = scmp.lt.s32.totalorder %s13, 1
        %s232 = scalar_select %p231, %s13, 1
        %s233 = smul.addr %s232, 4
        %s234 = smul.addr %s233, 4
        %s235 = scalar_lea.vmem %s0, %s234
      $region44: #{lenet_forward.1} parent=39 // pred_fallthru
        _
    $region40: #{lenet_forward.1} parent=5 // pred_fallthru
      _
    %p236 = scmp.le.s32.totalorder 1, %s13
    %p237 = scmp.lt.s32.totalorder %s13, 3
    %p238 = pnand %p236, %p237
    %p239 = pneg %p238
    // Predicated region
    $region45: #{lenet_forward.1} parent=5 // pred_check
      _
    $region46: #{lenet_forward.1} parent=5 // pred_check_branch
      %241 = sbr.rel (%p238) target = $region48
    $region47: #{lenet_forward.1} parent=5 // pred_region
      %s242 = ssub.s32 %s13, 1
      %p243 = scmp.lt.s32.totalorder %s18, 1
      %s244 = scalar_select %p243, %s18, 1
      %s245 = smul.addr %s244, 4
      %s246 = smul.addr %s245, 4
      %s247 = scalar_lea.vmem %s0, %s246
      %p248 = pneg %p39
      %p249 = pneg %p36
      %p250 = pneg %p60
      %p251 = pneg %p57
      %p252 = pneg %p81
      %p253 = pneg %p78
      %p254 = pneg %p102
      %p255 = pneg %p99
      %p256 = pneg %p123
      %p257 = pneg %p120
      %p258 = pneg %p144
      %p259 = pneg %p141
      %p260 = pneg %p165
      %p261 = pneg %p162
      %p262 = pneg %p191
      %p263 = pneg %p188
      %p264 = scmp.lt.s32.totalorder %s18, 1
      %s265 = scalar_select %p264, %s18, 1
      %s266 = smul.addr %s265, 2
      %s267 = scalar_lea.vmem %s7, %s266
      %p268 = scmp.lt.s32.totalorder %s18, 1
      %s269 = scalar_select %p268, %s18, 1
      %s270 = smul.addr %s269, 4
      %s271 = smul.addr %s270, 4
      %s272 = scalar_lea.vmem %s0, %s271
      %p273 = scmp.lt.s32.totalorder %s18, 1
      %s274 = scalar_select %p273, %s18, 1
      %s275 = smul.addr %s274, 2
      %s276 = scalar_lea.vmem %s7, %s275
      %v278 = vld [vmem:[%s6] sm:$0x1]
      %v279 = vld [vmem:[%s6 + $0x1] sm:$0x1]
      %v280 = vld [vmem:[%s6 + $0x2] sm:$0x1]
      %v281 = vld [vmem:[%s6 + $0x3] sm:$0x1]
      %v282 = vld [vmem:[%s6 + $0x4] sm:$0x1]
      %v283 = vld [vmem:[%s272] sm:$0xf]
      %v284 = vld [vmem:[%s1] sm:$0xff]
      %v285 = vld [vmem:[%s1 + $0x8] sm:$0xff]
      %v286 = vld [vmem:[%s1 + $0x10] sm:$0xff]
      %v287 = vld [vmem:[%s1 + $0x18] sm:$0xff]
      %s288 = scalar_lea.vmem %s272, 4
      %v289 = vld [vmem:[%s288] sm:$0xf]
      %s290 = scalar_lea.vmem %s1, 32
      %v291 = vld [vmem:[%s290] sm:$0xff]
      %v292 = vld [vmem:[%s290 + $0x8] sm:$0xff]
      %v293 = vld [vmem:[%s290 + $0x10] sm:$0xff]
      %v294 = vld [vmem:[%s290 + $0x18] sm:$0xff]
      %v299 = vunpack.c.l.b16 %v291
      %v300 = vunpack.c.h.b16 %v291
      %v301 = vunpack.c.l.b16 %v292
      %v302 = vunpack.c.h.b16 %v292
      %v303 = vunpack.c.l.b16 %v293
      %v304 = vunpack.c.h.b16 %v293
      %v305 = vunpack.c.l.b16 %v294
      %v306 = vunpack.c.h.b16 %v294
      %v307 = vpack.c.b16 %v301, %v299
      %v308 = vpack.c.b16 %v302, %v300
      %v309 = vpack.c.b16 %v305, %v303
      %v310 = vpack.c.b16 %v306, %v304
      %vm315 = vcmask 261120
      %v317 = vsel %vm315, %v289, 0
      %319 = vmatpush.bf16.msra.mxu0 0
      %320 = vmatpush.bf16.msra.mxu0 0
      %321 = vmatpush.bf16.msra.mxu0 0
      %322 = vmatpush.bf16.msra.mxu0 0
      %323 = vmatpush.bf16.msra.mxu0 0
      %324 = vmatpush.bf16.msra.mxu0 0
      %325 = vmatpush.bf16.msra.mxu0 %v309
      %326 = vmatpush.bf16.msra.mxu0 %v307
      %327 = vmatmul.bf16.gmra.mxu0 %v317
      %v328 = vpop.f32.mrf.mxu0
      %v329 = vadd.f32 0.0, %v328
      %v330 = vpop.f32.mrf.mxu0
      %331 = vdwg.mxu0
      %332 = vmatpush.bf16.msra.mxu0 0
      %333 = vmatpush.bf16.msra.mxu0 0
      %334 = vmatpush.bf16.msra.mxu0 0
      %335 = vmatpush.bf16.msra.mxu0 0
      %336 = vmatpush.bf16.msra.mxu0 0
      %337 = vmatpush.bf16.msra.mxu0 0
      %338 = vmatpush.bf16.msra.mxu0 %v310
      %339 = vmatpush.bf16.msra.mxu0 %v308
      %340 = vmatmul.bf16.gmra.mxu0 %v317
      %v341 = vpop.f32.mrf.mxu0
      %v342 = vadd.f32 0.0, %v341
      %v343 = vpop.f32.mrf.mxu0
      %344 = vdwg.mxu0
      %v349 = vunpack.c.l.b16 %v284
      %v350 = vunpack.c.h.b16 %v284
      %v351 = vunpack.c.l.b16 %v285
      %v352 = vunpack.c.h.b16 %v285
      %v353 = vunpack.c.l.b16 %v286
      %v354 = vunpack.c.h.b16 %v286
      %v355 = vunpack.c.l.b16 %v287
      %v356 = vunpack.c.h.b16 %v287
      %v357 = vpack.c.b16 %v351, %v349
      %v358 = vpack.c.b16 %v352, %v350
      %v359 = vpack.c.b16 %v355, %v353
      %v360 = vpack.c.b16 %v356, %v354
      %v366 = vsel %vm315, %v283, 0
      %368 = vmatpush.bf16.msra.mxu0 0
      %369 = vmatpush.bf16.msra.mxu0 0
      %370 = vmatpush.bf16.msra.mxu0 0
      %371 = vmatpush.bf16.msra.mxu0 0
      %372 = vmatpush.bf16.msra.mxu0 0
      %373 = vmatpush.bf16.msra.mxu0 0
      %374 = vmatpush.bf16.msra.mxu0 %v359
      %375 = vmatpush.bf16.msra.mxu0 %v357
      %376 = vmatmul.bf16.gmra.mxu0 %v366
      %v377 = vpop.f32.mrf.mxu0
      %v378 = vadd.f32 %v329, %v377
      %v379 = vpop.f32.mrf.mxu0
      %380 = vdwg.mxu0
      %381 = vmatpush.bf16.msra.mxu0 0
      %382 = vmatpush.bf16.msra.mxu0 0
      %383 = vmatpush.bf16.msra.mxu0 0
      %384 = vmatpush.bf16.msra.mxu0 0
      %385 = vmatpush.bf16.msra.mxu0 0
      %386 = vmatpush.bf16.msra.mxu0 0
      %387 = vmatpush.bf16.msra.mxu0 %v360
      %388 = vmatpush.bf16.msra.mxu0 %v358
      %389 = vmatmul.bf16.gmra.mxu0 %v366
      %v390 = vpop.f32.mrf.mxu0
      %v391 = vadd.f32 %v342, %v390
      %v392 = vpop.f32.mrf.mxu0
      %393 = vdwg.mxu0
      %s394 = scalar_lea.vmem %s272, 8
      %v395 = vld [vmem:[%s394] sm:$0xf]
      %s396 = scalar_lea.vmem %s1, 64
      %v397 = vld [vmem:[%s396] sm:$0xff]
      %v398 = vld [vmem:[%s396 + $0x8] sm:$0xff]
      %v399 = vld [vmem:[%s396 + $0x10] sm:$0xff]
      %v400 = vld [vmem:[%s396 + $0x18] sm:$0xff]
      %v405 = vunpack.c.l.b16 %v397
      %v406 = vunpack.c.h.b16 %v397
      %v407 = vunpack.c.l.b16 %v398
      %v408 = vunpack.c.h.b16 %v398
      %v409 = vunpack.c.l.b16 %v399
      %v410 = vunpack.c.h.b16 %v399
      %v411 = vunpack.c.l.b16 %v400
      %v412 = vunpack.c.h.b16 %v400
      %v413 = vpack.c.b16 %v407, %v405
      %v414 = vpack.c.b16 %v408, %v406
      %v415 = vpack.c.b16 %v411, %v409
      %v416 = vpack.c.b16 %v412, %v410
      %v422 = vsel %vm315, %v395, 0
      %424 = vmatpush.bf16.msra.mxu0 0
      %425 = vmatpush.bf16.msra.mxu0 0
      %426 = vmatpush.bf16.msra.mxu0 0
      %427 = vmatpush.bf16.msra.mxu0 0
      %428 = vmatpush.bf16.msra.mxu0 0
      %429 = vmatpush.bf16.msra.mxu0 0
      %430 = vmatpush.bf16.msra.mxu0 %v415
      %431 = vmatpush.bf16.msra.mxu0 %v413
      %432 = vmatmul.bf16.gmra.mxu0 %v422
      %v433 = vpop.f32.mrf.mxu0
      %v434 = vadd.f32 0.0, %v433
      %v435 = vpop.f32.mrf.mxu0
      %436 = vdwg.mxu0
      %437 = vmatpush.bf16.msra.mxu0 0
      %438 = vmatpush.bf16.msra.mxu0 0
      %439 = vmatpush.bf16.msra.mxu0 0
      %440 = vmatpush.bf16.msra.mxu0 0
      %441 = vmatpush.bf16.msra.mxu0 0
      %442 = vmatpush.bf16.msra.mxu0 0
      %443 = vmatpush.bf16.msra.mxu0 %v416
      %444 = vmatpush.bf16.msra.mxu0 %v414
      %445 = vmatmul.bf16.gmra.mxu0 %v422
      %v446 = vpop.f32.mrf.mxu0
      %v447 = vadd.f32 0.0, %v446
      %v448 = vpop.f32.mrf.mxu0
      %449 = vdwg.mxu0
      %v450 = vadd.f32 %v378, %v434
      %v451 = vadd.f32 %v391, %v447
      %s452 = scalar_lea.vmem %s272, 12
      %v453 = vld [vmem:[%s452] sm:$0xf]
      %s454 = scalar_lea.vmem %s1, 96
      %v455 = vld [vmem:[%s454] sm:$0xff]
      %v456 = vld [vmem:[%s454 + $0x8] sm:$0xff]
      %v457 = vld [vmem:[%s454 + $0x10] sm:$0xff]
      %v458 = vld [vmem:[%s454 + $0x18] sm:$0xff]
      %v463 = vunpack.c.l.b16 %v455
      %v464 = vunpack.c.h.b16 %v455
      %v465 = vunpack.c.l.b16 %v456
      %v466 = vunpack.c.h.b16 %v456
      %v467 = vunpack.c.l.b16 %v457
      %v468 = vunpack.c.h.b16 %v457
      %v469 = vunpack.c.l.b16 %v458
      %v470 = vunpack.c.h.b16 %v458
      %v471 = vpack.c.b16 %v465, %v463
      %v472 = vpack.c.b16 %v466, %v464
      %v473 = vpack.c.b16 %v469, %v467
      %v474 = vpack.c.b16 %v470, %v468
      %v480 = vsel %vm315, %v453, 0
      %482 = vmatpush.bf16.msra.mxu0 0
      %483 = vmatpush.bf16.msra.mxu0 0
      %484 = vmatpush.bf16.msra.mxu0 0
      %485 = vmatpush.bf16.msra.mxu0 0
      %486 = vmatpush.bf16.msra.mxu0 0
      %487 = vmatpush.bf16.msra.mxu0 0
      %488 = vmatpush.bf16.msra.mxu0 %v473
      %489 = vmatpush.bf16.msra.mxu0 %v471
      %490 = vmatmul.bf16.gmra.mxu0 %v480
      %v491 = vpop.f32.mrf.mxu0
      %v492 = vadd.f32 0.0, %v491
      %v493 = vpop.f32.mrf.mxu0
      %494 = vdwg.mxu0
      %495 = vmatpush.bf16.msra.mxu0 0
      %496 = vmatpush.bf16.msra.mxu0 0
      %497 = vmatpush.bf16.msra.mxu0 0
      %498 = vmatpush.bf16.msra.mxu0 0
      %499 = vmatpush.bf16.msra.mxu0 0
      %500 = vmatpush.bf16.msra.mxu0 0
      %501 = vmatpush.bf16.msra.mxu0 %v474
      %502 = vmatpush.bf16.msra.mxu0 %v472
      %503 = vmatmul.bf16.gmra.mxu0 %v480
      %v504 = vpop.f32.mrf.mxu0
      %v505 = vadd.f32 0.0, %v504
      %v506 = vpop.f32.mrf.mxu0
      %507 = vdwg.mxu0
      %v508 = vadd.f32 %v450, %v492
      %v509 = vadd.f32 %v451, %v505
      %s510 = scalar_lea.vmem %s1, 128
      %v511 = vld [vmem:[%s510] sm:$0xff]
      %v512 = vld [vmem:[%s510 + $0x8] sm:$0xff]
      %v513 = vld [vmem:[%s510 + $0x10] sm:$0xff]
      %v514 = vld [vmem:[%s510 + $0x18] sm:$0xff]
      %v516 = vunpack.c.l.b16 %v283
      %v517 = vpack.c.b16 %v516, %v516
      %v519 = vshrl.u32 %v517, 16
      %v521 = vshll.u32 %v517, 16
      %v523 = vrot.slane %v521, 1
      %v524 = vor.u32 %v519, %v523
      %v529 = vunpack.c.l.b16 %v511
      %v530 = vunpack.c.h.b16 %v511
      %v531 = vunpack.c.l.b16 %v512
      %v532 = vunpack.c.h.b16 %v512
      %v533 = vunpack.c.l.b16 %v513
      %v534 = vunpack.c.h.b16 %v513
      %v535 = vunpack.c.l.b16 %v514
      %v536 = vunpack.c.h.b16 %v514
      %v537 = vpack.c.b16 %v531, %v529
      %v538 = vpack.c.b16 %v532, %v530
      %v539 = vpack.c.b16 %v535, %v533
      %v540 = vpack.c.b16 %v536, %v534
      %v546 = vsel %vm315, %v524, 0
      %548 = vmatpush.bf16.msra.mxu0 0
      %549 = vmatpush.bf16.msra.mxu0 0
      %550 = vmatpush.bf16.msra.mxu0 0
      %551 = vmatpush.bf16.msra.mxu0 0
      %552 = vmatpush.bf16.msra.mxu0 0
      %553 = vmatpush.bf16.msra.mxu0 0
      %554 = vmatpush.bf16.msra.mxu0 %v539
      %555 = vmatpush.bf16.msra.mxu0 %v537
      %556 = vmatmul.bf16.gmra.mxu0 %v546
      %v557 = vpop.f32.mrf.mxu0
      %v558 = vadd.f32 0.0, %v557
      %v559 = vpop.f32.mrf.mxu0
      %560 = vdwg.mxu0
      %561 = vmatpush.bf16.msra.mxu0 0
      %562 = vmatpush.bf16.msra.mxu0 0
      %563 = vmatpush.bf16.msra.mxu0 0
      %564 = vmatpush.bf16.msra.mxu0 0
      %565 = vmatpush.bf16.msra.mxu0 0
      %566 = vmatpush.bf16.msra.mxu0 0
      %567 = vmatpush.bf16.msra.mxu0 %v540
      %568 = vmatpush.bf16.msra.mxu0 %v538
      %569 = vmatmul.bf16.gmra.mxu0 %v546
      %v570 = vpop.f32.mrf.mxu0
      %v571 = vadd.f32 0.0, %v570
      %v572 = vpop.f32.mrf.mxu0
      %573 = vdwg.mxu0
      %v574 = vadd.f32 %v508, %v558
      %v575 = vadd.f32 %v509, %v571
      %v576 = vmax.f32 %v574, %v575
      %577 = vmatpush.bf16.msra.mxu0 0
      %578 = vmatpush.bf16.msra.mxu0 0
      %579 = vmatpush.bf16.msra.mxu0 0
      %580 = vmatpush.bf16.msra.mxu0 0
      %581 = vmatpush.bf16.msra.mxu0 0
      %582 = vmatpush.bf16.msra.mxu0 0
      %583 = vmatpush.bf16.msra.mxu0 %v309
      %584 = vmatpush.bf16.msra.mxu0 %v307
      %585 = vmatmul.bf16.gmra.mxu0 %v422
      %v586 = vpop.f32.mrf.mxu0
      %v587 = vadd.f32 0.0, %v586
      %v588 = vpop.f32.mrf.mxu0
      %589 = vdwg.mxu0
      %590 = vmatpush.bf16.msra.mxu0 0
      %591 = vmatpush.bf16.msra.mxu0 0
      %592 = vmatpush.bf16.msra.mxu0 0
      %593 = vmatpush.bf16.msra.mxu0 0
      %594 = vmatpush.bf16.msra.mxu0 0
      %595 = vmatpush.bf16.msra.mxu0 0
      %596 = vmatpush.bf16.msra.mxu0 %v310
      %597 = vmatpush.bf16.msra.mxu0 %v308
      %598 = vmatmul.bf16.gmra.mxu0 %v422
      %v599 = vpop.f32.mrf.mxu0
      %v600 = vadd.f32 0.0, %v599
      %v601 = vpop.f32.mrf.mxu0
      %602 = vdwg.mxu0
      %603 = vmatpush.bf16.msra.mxu0 0
      %604 = vmatpush.bf16.msra.mxu0 0
      %605 = vmatpush.bf16.msra.mxu0 0
      %606 = vmatpush.bf16.msra.mxu0 0
      %607 = vmatpush.bf16.msra.mxu0 0
      %608 = vmatpush.bf16.msra.mxu0 0
      %609 = vmatpush.bf16.msra.mxu0 %v359
      %610 = vmatpush.bf16.msra.mxu0 %v357
      %611 = vmatmul.bf16.gmra.mxu0 %v317
      %v612 = vpop.f32.mrf.mxu0
      %v613 = vadd.f32 %v587, %v612
      %v614 = vpop.f32.mrf.mxu0
      %615 = vdwg.mxu0
      %616 = vmatpush.bf16.msra.mxu0 0
      %617 = vmatpush.bf16.msra.mxu0 0
      %618 = vmatpush.bf16.msra.mxu0 0
      %619 = vmatpush.bf16.msra.mxu0 0
      %620 = vmatpush.bf16.msra.mxu0 0
      %621 = vmatpush.bf16.msra.mxu0 0
      %622 = vmatpush.bf16.msra.mxu0 %v360
      %623 = vmatpush.bf16.msra.mxu0 %v358
      %624 = vmatmul.bf16.gmra.mxu0 %v317
      %v625 = vpop.f32.mrf.mxu0
      %v626 = vadd.f32 %v600, %v625
      %v627 = vpop.f32.mrf.mxu0
      %628 = vdwg.mxu0
      %629 = vmatpush.bf16.msra.mxu0 0
      %630 = vmatpush.bf16.msra.mxu0 0
      %631 = vmatpush.bf16.msra.mxu0 0
      %632 = vmatpush.bf16.msra.mxu0 0
      %633 = vmatpush.bf16.msra.mxu0 0
      %634 = vmatpush.bf16.msra.mxu0 0
      %635 = vmatpush.bf16.msra.mxu0 %v415
      %636 = vmatpush.bf16.msra.mxu0 %v413
      %637 = vmatmul.bf16.gmra.mxu0 %v480
      %v638 = vpop.f32.mrf.mxu0
      %v639 = vadd.f32 0.0, %v638
      %v640 = vpop.f32.mrf.mxu0
      %641 = vdwg.mxu0
      %642 = vmatpush.bf16.msra.mxu0 0
      %643 = vmatpush.bf16.msra.mxu0 0
      %644 = vmatpush.bf16.msra.mxu0 0
      %645 = vmatpush.bf16.msra.mxu0 0
      %646 = vmatpush.bf16.msra.mxu0 0
      %647 = vmatpush.bf16.msra.mxu0 0
      %648 = vmatpush.bf16.msra.mxu0 %v416
      %649 = vmatpush.bf16.msra.mxu0 %v414
      %650 = vmatmul.bf16.gmra.mxu0 %v480
      %v651 = vpop.f32.mrf.mxu0
      %v652 = vadd.f32 0.0, %v651
      %v653 = vpop.f32.mrf.mxu0
      %654 = vdwg.mxu0
      %v655 = vadd.f32 %v613, %v639
      %v656 = vadd.f32 %v626, %v652
      %657 = vmatpush.bf16.msra.mxu0 0
      %658 = vmatpush.bf16.msra.mxu0 0
      %659 = vmatpush.bf16.msra.mxu0 0
      %660 = vmatpush.bf16.msra.mxu0 0
      %661 = vmatpush.bf16.msra.mxu0 0
      %662 = vmatpush.bf16.msra.mxu0 0
      %663 = vmatpush.bf16.msra.mxu0 %v473
      %664 = vmatpush.bf16.msra.mxu0 %v471
      %665 = vmatmul.bf16.gmra.mxu0 %v546
      %v666 = vpop.f32.mrf.mxu0
      %v667 = vadd.f32 0.0, %v666
      %v668 = vpop.f32.mrf.mxu0
      %669 = vdwg.mxu0
      %670 = vmatpush.bf16.msra.mxu0 0
      %671 = vmatpush.bf16.msra.mxu0 0
      %672 = vmatpush.bf16.msra.mxu0 0
      %673 = vmatpush.bf16.msra.mxu0 0
      %674 = vmatpush.bf16.msra.mxu0 0
      %675 = vmatpush.bf16.msra.mxu0 0
      %676 = vmatpush.bf16.msra.mxu0 %v474
      %677 = vmatpush.bf16.msra.mxu0 %v472
      %678 = vmatmul.bf16.gmra.mxu0 %v546
      %v679 = vpop.f32.mrf.mxu0
      %v680 = vadd.f32 0.0, %v679
      %v681 = vpop.f32.mrf.mxu0
      %682 = vdwg.mxu0
      %v683 = vadd.f32 %v655, %v667
      %v684 = vadd.f32 %v656, %v680
      %v686 = vunpack.c.l.b16 %v289
      %v687 = vpack.c.b16 %v686, %v686
      %v689 = vshrl.u32 %v687, 16
      %v691 = vshll.u32 %v687, 16
      %v693 = vrot.slane %v691, 1
      %v694 = vor.u32 %v689, %v693
      %v696 = vsel %vm315, %v694, 0
      %698 = vmatpush.bf16.msra.mxu0 0
      %699 = vmatpush.bf16.msra.mxu0 0
      %700 = vmatpush.bf16.msra.mxu0 0
      %701 = vmatpush.bf16.msra.mxu0 0
      %702 = vmatpush.bf16.msra.mxu0 0
      %703 = vmatpush.bf16.msra.mxu0 0
      %704 = vmatpush.bf16.msra.mxu0 %v539
      %705 = vmatpush.bf16.msra.mxu0 %v537
      %706 = vmatmul.bf16.gmra.mxu0 %v696
      %v707 = vpop.f32.mrf.mxu0
      %v708 = vadd.f32 0.0, %v707
      %v709 = vpop.f32.mrf.mxu0
      %710 = vdwg.mxu0
      %711 = vmatpush.bf16.msra.mxu0 0
      %712 = vmatpush.bf16.msra.mxu0 0
      %713 = vmatpush.bf16.msra.mxu0 0
      %714 = vmatpush.bf16.msra.mxu0 0
      %715 = vmatpush.bf16.msra.mxu0 0
      %716 = vmatpush.bf16.msra.mxu0 0
      %717 = vmatpush.bf16.msra.mxu0 %v540
      %718 = vmatpush.bf16.msra.mxu0 %v538
      %719 = vmatmul.bf16.gmra.mxu0 %v696
      %v720 = vpop.f32.mrf.mxu0
      %v721 = vadd.f32 0.0, %v720
      %v722 = vpop.f32.mrf.mxu0
      %723 = vdwg.mxu0
      %v724 = vadd.f32 %v683, %v708
      %v725 = vadd.f32 %v684, %v721
      %v726 = vmax.f32 %v724, %v725
      %v727 = vmax.f32 %v576, %v726
      %v729 = vperm.slane %v278, 0
      %v731 = vadd.f32 %v727, %v729
      %v732 = vmax.f32 %v731, 0.0
      %v733 = vpack.c.bf16 %v732, %v732
      %vm734 = vcmask 683008
      %vm735 = vsmask.f32 3328
      %vm736 = vmand %vm734, %vm735
      %v737 = vld [vmem:[#allocation2] sm:$0xf]
      %v738 = vsel %vm736, %v733, %v737
      %739 = vst [vmem:[#allocation2] sm:$0xf] %v738
      %v740 = vld [vmem:[%s394] sm:$0xf]
      %v741 = vld [vmem:[%s1] sm:$0xff]
      %v742 = vld [vmem:[%s1 + $0x8] sm:$0xff]
      %v743 = vld [vmem:[%s1 + $0x10] sm:$0xff]
      %v744 = vld [vmem:[%s1 + $0x18] sm:$0xff]
      %v745 = vld [vmem:[%s452] sm:$0xf]
      %v746 = vld [vmem:[%s290] sm:$0xff]
      %v747 = vld [vmem:[%s290 + $0x8] sm:$0xff]
      %v748 = vld [vmem:[%s290 + $0x10] sm:$0xff]
      %v749 = vld [vmem:[%s290 + $0x18] sm:$0xff]
      %v754 = vunpack.c.l.b16 %v746
      %v755 = vunpack.c.h.b16 %v746
      %v756 = vunpack.c.l.b16 %v747
      %v757 = vunpack.c.h.b16 %v747
      %v758 = vunpack.c.l.b16 %v748
      %v759 = vunpack.c.h.b16 %v748
      %v760 = vunpack.c.l.b16 %v749
      %v761 = vunpack.c.h.b16 %v749
      %v762 = vpack.c.b16 %v756, %v754
      %v763 = vpack.c.b16 %v757, %v755
      %v764 = vpack.c.b16 %v760, %v758
      %v765 = vpack.c.b16 %v761, %v759
      %v771 = vsel %vm315, %v745, 0
      %773 = vmatpush.bf16.msra.mxu0 0
      %774 = vmatpush.bf16.msra.mxu0 0
      %775 = vmatpush.bf16.msra.mxu0 0
      %776 = vmatpush.bf16.msra.mxu0 0
      %777 = vmatpush.bf16.msra.mxu0 0
      %778 = vmatpush.bf16.msra.mxu0 0
      %779 = vmatpush.bf16.msra.mxu0 %v764
      %780 = vmatpush.bf16.msra.mxu0 %v762
      %781 = vmatmul.bf16.gmra.mxu0 %v771
      %v782 = vpop.f32.mrf.mxu0
      %v783 = vadd.f32 0.0, %v782
      %v784 = vpop.f32.mrf.mxu0
      %785 = vdwg.mxu0
      %786 = vmatpush.bf16.msra.mxu0 0
      %787 = vmatpush.bf16.msra.mxu0 0
      %788 = vmatpush.bf16.msra.mxu0 0
      %789 = vmatpush.bf16.msra.mxu0 0
      %790 = vmatpush.bf16.msra.mxu0 0
      %791 = vmatpush.bf16.msra.mxu0 0
      %792 = vmatpush.bf16.msra.mxu0 %v765
      %793 = vmatpush.bf16.msra.mxu0 %v763
      %794 = vmatmul.bf16.gmra.mxu0 %v771
      %v795 = vpop.f32.mrf.mxu0
      %v796 = vadd.f32 0.0, %v795
      %v797 = vpop.f32.mrf.mxu0
      %798 = vdwg.mxu0
      %v803 = vunpack.c.l.b16 %v741
      %v804 = vunpack.c.h.b16 %v741
      %v805 = vunpack.c.l.b16 %v742
      %v806 = vunpack.c.h.b16 %v742
      %v807 = vunpack.c.l.b16 %v743
      %v808 = vunpack.c.h.b16 %v743
      %v809 = vunpack.c.l.b16 %v744
      %v810 = vunpack.c.h.b16 %v744
      %v811 = vpack.c.b16 %v805, %v803
      %v812 = vpack.c.b16 %v806, %v804
      %v813 = vpack.c.b16 %v809, %v807
      %v814 = vpack.c.b16 %v810, %v808
      %v820 = vsel %vm315, %v740, 0
      %822 = vmatpush.bf16.msra.mxu0 0
      %823 = vmatpush.bf16.msra.mxu0 0
      %824 = vmatpush.bf16.msra.mxu0 0
      %825 = vmatpush.bf16.msra.mxu0 0
      %826 = vmatpush.bf16.msra.mxu0 0
      %827 = vmatpush.bf16.msra.mxu0 0
      %828 = vmatpush.bf16.msra.mxu0 %v813
      %829 = vmatpush.bf16.msra.mxu0 %v811
      %830 = vmatmul.bf16.gmra.mxu0 %v820
      %v831 = vpop.f32.mrf.mxu0
      %v832 = vadd.f32 %v783, %v831
      %v833 = vpop.f32.mrf.mxu0
      %834 = vdwg.mxu0
      %835 = vmatpush.bf16.msra.mxu0 0
      %836 = vmatpush.bf16.msra.mxu0 0
      %837 = vmatpush.bf16.msra.mxu0 0
      %838 = vmatpush.bf16.msra.mxu0 0
      %839 = vmatpush.bf16.msra.mxu0 0
      %840 = vmatpush.bf16.msra.mxu0 0
      %841 = vmatpush.bf16.msra.mxu0 %v814
      %842 = vmatpush.bf16.msra.mxu0 %v812
      %843 = vmatmul.bf16.gmra.mxu0 %v820
      %v844 = vpop.f32.mrf.mxu0
      %v845 = vadd.f32 %v796, %v844
      %v846 = vpop.f32.mrf.mxu0
      %847 = vdwg.mxu0
      %v848 = vld [vmem:[%s272] sm:$0xf]
      %v849 = vld [vmem:[%s396] sm:$0xff]
      %v850 = vld [vmem:[%s396 + $0x8] sm:$0xff]
      %v851 = vld [vmem:[%s396 + $0x10] sm:$0xff]
      %v852 = vld [vmem:[%s396 + $0x18] sm:$0xff]
      %v854 = vunpack.c.l.b16 %v848
      %v855 = vpack.c.b16 %v854, %v854
      %v857 = vshrl.u32 %v855, 16
      %v859 = vshll.u32 %v855, 16
      %v861 = vrot.slane %v859, 1
      %v862 = vor.u32 %v857, %v861
      %v867 = vunpack.c.l.b16 %v849
      %v868 = vunpack.c.h.b16 %v849
      %v869 = vunpack.c.l.b16 %v850
      %v870 = vunpack.c.h.b16 %v850
      %v871 = vunpack.c.l.b16 %v851
      %v872 = vunpack.c.h.b16 %v851
      %v873 = vunpack.c.l.b16 %v852
      %v874 = vunpack.c.h.b16 %v852
      %v875 = vpack.c.b16 %v869, %v867
      %v876 = vpack.c.b16 %v870, %v868
      %v877 = vpack.c.b16 %v873, %v871
      %v878 = vpack.c.b16 %v874, %v872
      %v884 = vsel %vm315, %v862, 0
      %886 = vmatpush.bf16.msra.mxu0 0
      %887 = vmatpush.bf16.msra.mxu0 0
      %888 = vmatpush.bf16.msra.mxu0 0
      %889 = vmatpush.bf16.msra.mxu0 0
      %890 = vmatpush.bf16.msra.mxu0 0
      %891 = vmatpush.bf16.msra.mxu0 0
      %892 = vmatpush.bf16.msra.mxu0 %v877
      %893 = vmatpush.bf16.msra.mxu0 %v875
      %894 = vmatmul.bf16.gmra.mxu0 %v884
      %v895 = vpop.f32.mrf.mxu0
      %v896 = vadd.f32 0.0, %v895
      %v897 = vpop.f32.mrf.mxu0
      %898 = vdwg.mxu0
      %899 = vmatpush.bf16.msra.mxu0 0
      %900 = vmatpush.bf16.msra.mxu0 0
      %901 = vmatpush.bf16.msra.mxu0 0
      %902 = vmatpush.bf16.msra.mxu0 0
      %903 = vmatpush.bf16.msra.mxu0 0
      %904 = vmatpush.bf16.msra.mxu0 0
      %905 = vmatpush.bf16.msra.mxu0 %v878
      %906 = vmatpush.bf16.msra.mxu0 %v876
      %907 = vmatmul.bf16.gmra.mxu0 %v884
      %v908 = vpop.f32.mrf.mxu0
      %v909 = vadd.f32 0.0, %v908
      %v910 = vpop.f32.mrf.mxu0
      %911 = vdwg.mxu0
      %v912 = vadd.f32 %v832, %v896
      %v913 = vadd.f32 %v845, %v909
      %v914 = vld [vmem:[%s288] sm:$0xf]
      %v915 = vld [vmem:[%s454] sm:$0xff]
      %v916 = vld [vmem:[%s454 + $0x8] sm:$0xff]
      %v917 = vld [vmem:[%s454 + $0x10] sm:$0xff]
      %v918 = vld [vmem:[%s454 + $0x18] sm:$0xff]
      %v920 = vunpack.c.l.b16 %v914
      %v921 = vpack.c.b16 %v920, %v920
      %v923 = vshrl.u32 %v921, 16
      %v925 = vshll.u32 %v921, 16
      %v927 = vrot.slane %v925, 1
      %v928 = vor.u32 %v923, %v927
      %v933 = vunpack.c.l.b16 %v915
      %v934 = vunpack.c.h.b16 %v915
      %v935 = vunpack.c.l.b16 %v916
      %v936 = vunpack.c.h.b16 %v916
      %v937 = vunpack.c.l.b16 %v917
      %v938 = vunpack.c.h.b16 %v917
      %v939 = vunpack.c.l.b16 %v918
      %v940 = vunpack.c.h.b16 %v918
      %v941 = vpack.c.b16 %v935, %v933
      %v942 = vpack.c.b16 %v936, %v934
      %v943 = vpack.c.b16 %v939, %v937
      %v944 = vpack.c.b16 %v940, %v938
      %v950 = vsel %vm315, %v928, 0
      %952 = vmatpush.bf16.msra.mxu0 0
      %953 = vmatpush.bf16.msra.mxu0 0
      %954 = vmatpush.bf16.msra.mxu0 0
      %955 = vmatpush.bf16.msra.mxu0 0
      %956 = vmatpush.bf16.msra.mxu0 0
      %957 = vmatpush.bf16.msra.mxu0 0
      %958 = vmatpush.bf16.msra.mxu0 %v943
      %959 = vmatpush.bf16.msra.mxu0 %v941
      %960 = vmatmul.bf16.gmra.mxu0 %v950
      %v961 = vpop.f32.mrf.mxu0
      %v962 = vadd.f32 0.0, %v961
      %v963 = vpop.f32.mrf.mxu0
      %964 = vdwg.mxu0
      %965 = vmatpush.bf16.msra.mxu0 0
      %966 = vmatpush.bf16.msra.mxu0 0
      %967 = vmatpush.bf16.msra.mxu0 0
      %968 = vmatpush.bf16.msra.mxu0 0
      %969 = vmatpush.bf16.msra.mxu0 0
      %970 = vmatpush.bf16.msra.mxu0 0
      %971 = vmatpush.bf16.msra.mxu0 %v944
      %972 = vmatpush.bf16.msra.mxu0 %v942
      %973 = vmatmul.bf16.gmra.mxu0 %v950
      %v974 = vpop.f32.mrf.mxu0
      %v975 = vadd.f32 0.0, %v974
      %v976 = vpop.f32.mrf.mxu0
      %977 = vdwg.mxu0
      %v978 = vadd.f32 %v912, %v962
      %v979 = vadd.f32 %v913, %v975
      %v980 = vld [vmem:[%s510] sm:$0xff]
      %v981 = vld [vmem:[%s510 + $0x8] sm:$0xff]
      %v982 = vld [vmem:[%s510 + $0x10] sm:$0xff]
      %v983 = vld [vmem:[%s510 + $0x18] sm:$0xff]
      %v985 = vunpack.c.l.b16 %v740
      %v986 = vpack.c.b16 %v985, %v985
      %v988 = vshrl.u32 %v986, 16
      %v990 = vshll.u32 %v986, 16
      %v992 = vrot.slane %v990, 1
      %v993 = vor.u32 %v988, %v992
      %v998 = vunpack.c.l.b16 %v980
      %v999 = vunpack.c.h.b16 %v980
      %v1000 = vunpack.c.l.b16 %v981
      %v1001 = vunpack.c.h.b16 %v981
      %v1002 = vunpack.c.l.b16 %v982
      %v1003 = vunpack.c.h.b16 %v982
      %v1004 = vunpack.c.l.b16 %v983
      %v1005 = vunpack.c.h.b16 %v983
      %v1006 = vpack.c.b16 %v1000, %v998
      %v1007 = vpack.c.b16 %v1001, %v999
      %v1008 = vpack.c.b16 %v1004, %v1002
      %v1009 = vpack.c.b16 %v1005, %v1003
      %v1015 = vsel %vm315, %v993, 0
      %1017 = vmatpush.bf16.msra.mxu0 0
      %1018 = vmatpush.bf16.msra.mxu0 0
      %1019 = vmatpush.bf16.msra.mxu0 0
      %1020 = vmatpush.bf16.msra.mxu0 0
      %1021 = vmatpush.bf16.msra.mxu0 0
      %1022 = vmatpush.bf16.msra.mxu0 0
      %1023 = vmatpush.bf16.msra.mxu0 %v1008
      %1024 = vmatpush.bf16.msra.mxu0 %v1006
      %1025 = vmatmul.bf16.gmra.mxu0 %v1015
      %v1026 = vpop.f32.mrf.mxu0
      %v1027 = vadd.f32 0.0, %v1026
      %v1028 = vpop.f32.mrf.mxu0
      %1029 = vdwg.mxu0
      %1030 = vmatpush.bf16.msra.mxu0 0
      %1031 = vmatpush.bf16.msra.mxu0 0
      %1032 = vmatpush.bf16.msra.mxu0 0
      %1033 = vmatpush.bf16.msra.mxu0 0
      %1034 = vmatpush.bf16.msra.mxu0 0
      %1035 = vmatpush.bf16.msra.mxu0 0
      %1036 = vmatpush.bf16.msra.mxu0 %v1009
      %1037 = vmatpush.bf16.msra.mxu0 %v1007
      %1038 = vmatmul.bf16.gmra.mxu0 %v1015
      %v1039 = vpop.f32.mrf.mxu0
      %v1040 = vadd.f32 0.0, %v1039
      %v1041 = vpop.f32.mrf.mxu0
      %1042 = vdwg.mxu0
      %v1043 = vadd.f32 %v978, %v1027
      %v1044 = vadd.f32 %v979, %v1040
      %v1045 = vmax.f32 %v1043, %v1044
      %1046 = vmatpush.bf16.msra.mxu0 0
      %1047 = vmatpush.bf16.msra.mxu0 0
      %1048 = vmatpush.bf16.msra.mxu0 0
      %1049 = vmatpush.bf16.msra.mxu0 0
      %1050 = vmatpush.bf16.msra.mxu0 0
      %1051 = vmatpush.bf16.msra.mxu0 0
      %1052 = vmatpush.bf16.msra.mxu0 %v764
      %1053 = vmatpush.bf16.msra.mxu0 %v762
      %1054 = vmatmul.bf16.gmra.mxu0 %v884
      %v1055 = vpop.f32.mrf.mxu0
      %v1056 = vadd.f32 0.0, %v1055
      %v1057 = vpop.f32.mrf.mxu0
      %1058 = vdwg.mxu0
      %1059 = vmatpush.bf16.msra.mxu0 0
      %1060 = vmatpush.bf16.msra.mxu0 0
      %1061 = vmatpush.bf16.msra.mxu0 0
      %1062 = vmatpush.bf16.msra.mxu0 0
      %1063 = vmatpush.bf16.msra.mxu0 0
      %1064 = vmatpush.bf16.msra.mxu0 0
      %1065 = vmatpush.bf16.msra.mxu0 %v765
      %1066 = vmatpush.bf16.msra.mxu0 %v763
      %1067 = vmatmul.bf16.gmra.mxu0 %v884
      %v1068 = vpop.f32.mrf.mxu0
      %v1069 = vadd.f32 0.0, %v1068
      %v1070 = vpop.f32.mrf.mxu0
      %1071 = vdwg.mxu0
      %1072 = vmatpush.bf16.msra.mxu0 0
      %1073 = vmatpush.bf16.msra.mxu0 0
      %1074 = vmatpush.bf16.msra.mxu0 0
      %1075 = vmatpush.bf16.msra.mxu0 0
      %1076 = vmatpush.bf16.msra.mxu0 0
      %1077 = vmatpush.bf16.msra.mxu0 0
      %1078 = vmatpush.bf16.msra.mxu0 %v813
      %1079 = vmatpush.bf16.msra.mxu0 %v811
      %1080 = vmatmul.bf16.gmra.mxu0 %v771
      %v1081 = vpop.f32.mrf.mxu0
      %v1082 = vadd.f32 %v1056, %v1081
      %v1083 = vpop.f32.mrf.mxu0
      %1084 = vdwg.mxu0
      %1085 = vmatpush.bf16.msra.mxu0 0
      %1086 = vmatpush.bf16.msra.mxu0 0
      %1087 = vmatpush.bf16.msra.mxu0 0
      %1088 = vmatpush.bf16.msra.mxu0 0
      %1089 = vmatpush.bf16.msra.mxu0 0
      %1090 = vmatpush.bf16.msra.mxu0 0
      %1091 = vmatpush.bf16.msra.mxu0 %v814
      %1092 = vmatpush.bf16.msra.mxu0 %v812
      %1093 = vmatmul.bf16.gmra.mxu0 %v771
      %v1094 = vpop.f32.mrf.mxu0
      %v1095 = vadd.f32 %v1069, %v1094
      %v1096 = vpop.f32.mrf.mxu0
      %1097 = vdwg.mxu0
      %1098 = vmatpush.bf16.msra.mxu0 0
      %1099 = vmatpush.bf16.msra.mxu0 0
      %1100 = vmatpush.bf16.msra.mxu0 0
      %1101 = vmatpush.bf16.msra.mxu0 0
      %1102 = vmatpush.bf16.msra.mxu0 0
      %1103 = vmatpush.bf16.msra.mxu0 0
      %1104 = vmatpush.bf16.msra.mxu0 %v877
      %1105 = vmatpush.bf16.msra.mxu0 %v875
      %1106 = vmatmul.bf16.gmra.mxu0 %v950
      %v1107 = vpop.f32.mrf.mxu0
      %v1108 = vadd.f32 0.0, %v1107
      %v1109 = vpop.f32.mrf.mxu0
      %1110 = vdwg.mxu0
      %1111 = vmatpush.bf16.msra.mxu0 0
      %1112 = vmatpush.bf16.msra.mxu0 0
      %1113 = vmatpush.bf16.msra.mxu0 0
      %1114 = vmatpush.bf16.msra.mxu0 0
      %1115 = vmatpush.bf16.msra.mxu0 0
      %1116 = vmatpush.bf16.msra.mxu0 0
      %1117 = vmatpush.bf16.msra.mxu0 %v878
      %1118 = vmatpush.bf16.msra.mxu0 %v876
      %1119 = vmatmul.bf16.gmra.mxu0 %v950
      %v1120 = vpop.f32.mrf.mxu0
      %v1121 = vadd.f32 0.0, %v1120
      %v1122 = vpop.f32.mrf.mxu0
      %1123 = vdwg.mxu0
      %v1124 = vadd.f32 %v1082, %v1108
      %v1125 = vadd.f32 %v1095, %v1121
      %1126 = vmatpush.bf16.msra.mxu0 0
      %1127 = vmatpush.bf16.msra.mxu0 0
      %1128 = vmatpush.bf16.msra.mxu0 0
      %1129 = vmatpush.bf16.msra.mxu0 0
      %1130 = vmatpush.bf16.msra.mxu0 0
      %1131 = vmatpush.bf16.msra.mxu0 0
      %1132 = vmatpush.bf16.msra.mxu0 %v943
      %1133 = vmatpush.bf16.msra.mxu0 %v941
      %1134 = vmatmul.bf16.gmra.mxu0 %v1015
      %v1135 = vpop.f32.mrf.mxu0
      %v1136 = vadd.f32 0.0, %v1135
      %v1137 = vpop.f32.mrf.mxu0
      %1138 = vdwg.mxu0
      %1139 = vmatpush.bf16.msra.mxu0 0
      %1140 = vmatpush.bf16.msra.mxu0 0
      %1141 = vmatpush.bf16.msra.mxu0 0
      %1142 = vmatpush.bf16.msra.mxu0 0
      %1143 = vmatpush.bf16.msra.mxu0 0
      %1144 = vmatpush.bf16.msra.mxu0 0
      %1145 = vmatpush.bf16.msra.mxu0 %v944
      %1146 = vmatpush.bf16.msra.mxu0 %v942
      %1147 = vmatmul.bf16.gmra.mxu0 %v1015
      %v1148 = vpop.f32.mrf.mxu0
      %v1149 = vadd.f32 0.0, %v1148
      %v1150 = vpop.f32.mrf.mxu0
      %1151 = vdwg.mxu0
      %v1152 = vadd.f32 %v1124, %v1136
      %v1153 = vadd.f32 %v1125, %v1149
      %v1155 = vunpack.c.l.b16 %v745
      %v1156 = vpack.c.b16 %v1155, %v1155
      %v1158 = vshrl.u32 %v1156, 16
      %v1160 = vshll.u32 %v1156, 16
      %v1162 = vrot.slane %v1160, 1
      %v1163 = vor.u32 %v1158, %v1162
      %v1165 = vsel %vm315, %v1163, 0
      %1167 = vmatpush.bf16.msra.mxu0 0
      %1168 = vmatpush.bf16.msra.mxu0 0
      %1169 = vmatpush.bf16.msra.mxu0 0
      %1170 = vmatpush.bf16.msra.mxu0 0
      %1171 = vmatpush.bf16.msra.mxu0 0
      %1172 = vmatpush.bf16.msra.mxu0 0
      %1173 = vmatpush.bf16.msra.mxu0 %v1008
      %1174 = vmatpush.bf16.msra.mxu0 %v1006
      %1175 = vmatmul.bf16.gmra.mxu0 %v1165
      %v1176 = vpop.f32.mrf.mxu0
      %v1177 = vadd.f32 0.0, %v1176
      %v1178 = vpop.f32.mrf.mxu0
      %1179 = vdwg.mxu0
      %1180 = vmatpush.bf16.msra.mxu0 0
      %1181 = vmatpush.bf16.msra.mxu0 0
      %1182 = vmatpush.bf16.msra.mxu0 0
      %1183 = vmatpush.bf16.msra.mxu0 0
      %1184 = vmatpush.bf16.msra.mxu0 0
      %1185 = vmatpush.bf16.msra.mxu0 0
      %1186 = vmatpush.bf16.msra.mxu0 %v1009
      %1187 = vmatpush.bf16.msra.mxu0 %v1007
      %1188 = vmatmul.bf16.gmra.mxu0 %v1165
      %v1189 = vpop.f32.mrf.mxu0
      %v1190 = vadd.f32 0.0, %v1189
      %v1191 = vpop.f32.mrf.mxu0
      %1192 = vdwg.mxu0
      %v1193 = vadd.f32 %v1152, %v1177
      %v1194 = vadd.f32 %v1153, %v1190
      %v1195 = vmax.f32 %v1193, %v1194
      %v1196 = vmax.f32 %v1045, %v1195
      %v1197 = vadd.f32 %v1196, %v729
      %v1198 = vmax.f32 %v1197, 0.0
      %v1199 = vpack.c.bf16 %v1198, %v1198
      %s1200 = scalar_lea.vmem [#allocation2], 4
      %v1201 = vld [vmem:[%s1200] sm:$0xf]
      %v1202 = vsel %vm736, %v1199, %v1201
      %1203 = vst [vmem:[%s1200] sm:$0xf] %v1202
      %v1204 = vld [vmem:[#allocation2] sm:$0x7]
      %v1205 = vld [vmem:[%s2] sm:$0xff]
      %v1206 = vld [vmem:[%s2 + $0x8] sm:$0xff]
      %v1207 = vld [vmem:[%s2 + $0x10] sm:$0xff]
      %v1208 = vld [vmem:[%s2 + $0x18] sm:$0xff]
      %v1209 = vld [vmem:[%s2 + $0x20] sm:$0xff]
      %v1210 = vld [vmem:[%s2 + $0x28] sm:$0xff]
      %v1211 = vld [vmem:[%s2 + $0x30] sm:$0xff]
      %v1212 = vld [vmem:[%s2 + $0x38] sm:$0xff]
      %v1213 = vld [vmem:[%s2 + $0x40] sm:$0xff]
      %v1214 = vld [vmem:[%s2 + $0x48] sm:$0xff]
      %v1215 = vld [vmem:[%s2 + $0x50] sm:$0x33]
      %v1216 = vld [vmem:[%s1200] sm:$0x7]
      %s1217 = scalar_lea.vmem %s2, 88
      %v1218 = vld [vmem:[%s1217] sm:$0xff]
      %v1219 = vld [vmem:[%s1217 + $0x8] sm:$0xff]
      %v1220 = vld [vmem:[%s1217 + $0x10] sm:$0xff]
      %v1221 = vld [vmem:[%s1217 + $0x18] sm:$0xff]
      %v1222 = vld [vmem:[%s1217 + $0x20] sm:$0xff]
      %v1223 = vld [vmem:[%s1217 + $0x28] sm:$0xff]
      %v1224 = vld [vmem:[%s1217 + $0x30] sm:$0xff]
      %v1225 = vld [vmem:[%s1217 + $0x38] sm:$0xff]
      %v1226 = vld [vmem:[%s1217 + $0x40] sm:$0xff]
      %v1227 = vld [vmem:[%s1217 + $0x48] sm:$0xff]
      %v1228 = vld [vmem:[%s1217 + $0x50] sm:$0x33]
      %v1240 = vunpack.c.l.b16 %v1218
      %v1241 = vunpack.c.h.b16 %v1218
      %v1242 = vunpack.c.l.b16 %v1219
      %v1243 = vunpack.c.h.b16 %v1219
      %v1244 = vunpack.c.l.b16 %v1220
      %v1245 = vunpack.c.h.b16 %v1220
      %v1246 = vunpack.c.l.b16 %v1221
      %v1247 = vunpack.c.h.b16 %v1221
      %v1248 = vunpack.c.l.b16 %v1222
      %v1249 = vunpack.c.h.b16 %v1222
      %v1250 = vunpack.c.l.b16 %v1223
      %v1251 = vunpack.c.h.b16 %v1223
      %v1252 = vunpack.c.l.b16 %v1224
      %v1253 = vunpack.c.h.b16 %v1224
      %v1254 = vunpack.c.l.b16 %v1225
      %v1255 = vunpack.c.h.b16 %v1225
      %v1256 = vunpack.c.l.b16 %v1226
      %v1257 = vunpack.c.h.b16 %v1226
      %v1258 = vunpack.c.l.b16 %v1227
      %v1259 = vunpack.c.h.b16 %v1227
      %v1260 = vunpack.c.l.b16 %v1228
      %v1261 = vunpack.c.h.b16 %v1228
      %v1262 = vpack.c.b16 %v1242, %v1240
      %v1263 = vpack.c.b16 %v1243, %v1241
      %v1264 = vpack.c.b16 %v1246, %v1244
      %v1265 = vpack.c.b16 %v1247, %v1245
      %v1266 = vpack.c.b16 %v1250, %v1248
      %v1267 = vpack.c.b16 %v1251, %v1249
      %v1268 = vpack.c.b16 %v1254, %v1252
      %v1269 = vpack.c.b16 %v1255, %v1253
      %v1270 = vpack.c.b16 %v1258, %v1256
      %v1271 = vpack.c.b16 %v1259, %v1257
      %v1272 = vpack.c.b16 %v1260, %v1260
      %v1273 = vpack.c.b16 %v1261, %v1261
      %vm1284 = vcmask 687104
      %v1286 = vsel %vm1284, %v1216, 0
      %vm1288 = vcmask 1041408
      %v1290 = vsel %vm1288, %v1272, 0
      %v1293 = vsel %vm1288, %v1273, 0
      %1295 = vmatpush.bf16.msra.mxu0 0
      %1296 = vmatpush.bf16.msra.mxu0 0
      %1297 = vmatpush.bf16.msra.mxu0 %v1290
      %1298 = vmatpush.bf16.msra.mxu0 %v1270
      %1299 = vmatpush.bf16.msra.mxu0 %v1268
      %1300 = vmatpush.bf16.msra.mxu0 %v1266
      %1301 = vmatpush.bf16.msra.mxu0 %v1264
      %1302 = vmatpush.bf16.msra.mxu0 %v1262
      %1303 = vmatmul.bf16.gmra.mxu0 %v1286
      %v1304 = vpop.f32.mrf.mxu0
      %v1305 = vadd.f32 0.0, %v1304
      %v1306 = vpop.f32.mrf.mxu0
      %1307 = vdwg.mxu0
      %1308 = vmatpush.bf16.msra.mxu0 0
      %1309 = vmatpush.bf16.msra.mxu0 0
      %1310 = vmatpush.bf16.msra.mxu0 %v1293
      %1311 = vmatpush.bf16.msra.mxu0 %v1271
      %1312 = vmatpush.bf16.msra.mxu0 %v1269
      %1313 = vmatpush.bf16.msra.mxu0 %v1267
      %1314 = vmatpush.bf16.msra.mxu0 %v1265
      %1315 = vmatpush.bf16.msra.mxu0 %v1263
      %1316 = vmatmul.bf16.gmra.mxu0 %v1286
      %v1317 = vpop.f32.mrf.mxu0
      %v1318 = vadd.f32 0.0, %v1317
      %v1319 = vpop.f32.mrf.mxu0
      %1320 = vdwg.mxu0
      %v1332 = vunpack.c.l.b16 %v1205
      %v1333 = vunpack.c.h.b16 %v1205
      %v1334 = vunpack.c.l.b16 %v1206
      %v1335 = vunpack.c.h.b16 %v1206
      %v1336 = vunpack.c.l.b16 %v1207
      %v1337 = vunpack.c.h.b16 %v1207
      %v1338 = vunpack.c.l.b16 %v1208
      %v1339 = vunpack.c.h.b16 %v1208
      %v1340 = vunpack.c.l.b16 %v1209
      %v1341 = vunpack.c.h.b16 %v1209
      %v1342 = vunpack.c.l.b16 %v1210
      %v1343 = vunpack.c.h.b16 %v1210
      %v1344 = vunpack.c.l.b16 %v1211
      %v1345 = vunpack.c.h.b16 %v1211
      %v1346 = vunpack.c.l.b16 %v1212
      %v1347 = vunpack.c.h.b16 %v1212
      %v1348 = vunpack.c.l.b16 %v1213
      %v1349 = vunpack.c.h.b16 %v1213
      %v1350 = vunpack.c.l.b16 %v1214
      %v1351 = vunpack.c.h.b16 %v1214
      %v1352 = vunpack.c.l.b16 %v1215
      %v1353 = vunpack.c.h.b16 %v1215
      %v1354 = vpack.c.b16 %v1334, %v1332
      %v1355 = vpack.c.b16 %v1335, %v1333
      %v1356 = vpack.c.b16 %v1338, %v1336
      %v1357 = vpack.c.b16 %v1339, %v1337
      %v1358 = vpack.c.b16 %v1342, %v1340
      %v1359 = vpack.c.b16 %v1343, %v1341
      %v1360 = vpack.c.b16 %v1346, %v1344
      %v1361 = vpack.c.b16 %v1347, %v1345
      %v1362 = vpack.c.b16 %v1350, %v1348
      %v1363 = vpack.c.b16 %v1351, %v1349
      %v1364 = vpack.c.b16 %v1352, %v1352
      %v1365 = vpack.c.b16 %v1353, %v1353
      %v1377 = vsel %vm1284, %v1204, 0
      %v1380 = vsel %vm1288, %v1364, 0
      %v1383 = vsel %vm1288, %v1365, 0
      %1385 = vmatpush.bf16.msra.mxu0 0
      %1386 = vmatpush.bf16.msra.mxu0 0
      %1387 = vmatpush.bf16.msra.mxu0 %v1380
      %1388 = vmatpush.bf16.msra.mxu0 %v1362
      %1389 = vmatpush.bf16.msra.mxu0 %v1360
      %1390 = vmatpush.bf16.msra.mxu0 %v1358
      %1391 = vmatpush.bf16.msra.mxu0 %v1356
      %1392 = vmatpush.bf16.msra.mxu0 %v1354
      %1393 = vmatmul.bf16.gmra.mxu0 %v1377
      %v1394 = vpop.f32.mrf.mxu0
      %v1395 = vadd.f32 %v1305, %v1394
      %v1396 = vpop.f32.mrf.mxu0
      %1397 = vdwg.mxu0
      %1398 = vmatpush.bf16.msra.mxu0 0
      %1399 = vmatpush.bf16.msra.mxu0 0
      %1400 = vmatpush.bf16.msra.mxu0 %v1383
      %1401 = vmatpush.bf16.msra.mxu0 %v1363
      %1402 = vmatpush.bf16.msra.mxu0 %v1361
      %1403 = vmatpush.bf16.msra.mxu0 %v1359
      %1404 = vmatpush.bf16.msra.mxu0 %v1357
      %1405 = vmatpush.bf16.msra.mxu0 %v1355
      %1406 = vmatmul.bf16.gmra.mxu0 %v1377
      %v1407 = vpop.f32.mrf.mxu0
      %v1408 = vadd.f32 %v1318, %v1407
      %v1409 = vpop.f32.mrf.mxu0
      %1410 = vdwg.mxu0
      %s1411 = scalar_lea.vmem %s2, 176
      %v1412 = vld [vmem:[%s1411] sm:$0xff]
      %v1413 = vld [vmem:[%s1411 + $0x8] sm:$0xff]
      %v1414 = vld [vmem:[%s1411 + $0x10] sm:$0xff]
      %v1415 = vld [vmem:[%s1411 + $0x18] sm:$0xff]
      %v1416 = vld [vmem:[%s1411 + $0x20] sm:$0xff]
      %v1417 = vld [vmem:[%s1411 + $0x28] sm:$0xff]
      %v1418 = vld [vmem:[%s1411 + $0x30] sm:$0xff]
      %v1419 = vld [vmem:[%s1411 + $0x38] sm:$0xff]
      %v1420 = vld [vmem:[%s1411 + $0x40] sm:$0xff]
      %v1421 = vld [vmem:[%s1411 + $0x48] sm:$0xff]
      %v1422 = vld [vmem:[%s1411 + $0x50] sm:$0x33]
      %v1424 = vunpack.c.l.b16 %v1204
      %v1425 = vpack.c.b16 %v1424, %v1424
      %v1427 = vshrl.u32 %v1425, 16
      %v1429 = vshll.u32 %v1425, 16
      %v1431 = vrot.slane %v1429, 1
      %v1432 = vor.u32 %v1427, %v1431
      %v1444 = vunpack.c.l.b16 %v1412
      %v1445 = vunpack.c.h.b16 %v1412
      %v1446 = vunpack.c.l.b16 %v1413
      %v1447 = vunpack.c.h.b16 %v1413
      %v1448 = vunpack.c.l.b16 %v1414
      %v1449 = vunpack.c.h.b16 %v1414
      %v1450 = vunpack.c.l.b16 %v1415
      %v1451 = vunpack.c.h.b16 %v1415
      %v1452 = vunpack.c.l.b16 %v1416
      %v1453 = vunpack.c.h.b16 %v1416
      %v1454 = vunpack.c.l.b16 %v1417
      %v1455 = vunpack.c.h.b16 %v1417
      %v1456 = vunpack.c.l.b16 %v1418
      %v1457 = vunpack.c.h.b16 %v1418
      %v1458 = vunpack.c.l.b16 %v1419
      %v1459 = vunpack.c.h.b16 %v1419
      %v1460 = vunpack.c.l.b16 %v1420
      %v1461 = vunpack.c.h.b16 %v1420
      %v1462 = vunpack.c.l.b16 %v1421
      %v1463 = vunpack.c.h.b16 %v1421
      %v1464 = vunpack.c.l.b16 %v1422
      %v1465 = vunpack.c.h.b16 %v1422
      %v1466 = vpack.c.b16 %v1446, %v1444
      %v1467 = vpack.c.b16 %v1447, %v1445
      %v1468 = vpack.c.b16 %v1450, %v1448
      %v1469 = vpack.c.b16 %v1451, %v1449
      %v1470 = vpack.c.b16 %v1454, %v1452
      %v1471 = vpack.c.b16 %v1455, %v1453
      %v1472 = vpack.c.b16 %v1458, %v1456
      %v1473 = vpack.c.b16 %v1459, %v1457
      %v1474 = vpack.c.b16 %v1462, %v1460
      %v1475 = vpack.c.b16 %v1463, %v1461
      %v1476 = vpack.c.b16 %v1464, %v1464
      %v1477 = vpack.c.b16 %v1465, %v1465
      %v1489 = vsel %vm1284, %v1432, 0
      %v1492 = vsel %vm1288, %v1476, 0
      %v1495 = vsel %vm1288, %v1477, 0
      %1497 = vmatpush.bf16.msra.mxu0 0
      %1498 = vmatpush.bf16.msra.mxu0 0
      %1499 = vmatpush.bf16.msra.mxu0 %v1492
      %1500 = vmatpush.bf16.msra.mxu0 %v1474
      %1501 = vmatpush.bf16.msra.mxu0 %v1472
      %1502 = vmatpush.bf16.msra.mxu0 %v1470
      %1503 = vmatpush.bf16.msra.mxu0 %v1468
      %1504 = vmatpush.bf16.msra.mxu0 %v1466
      %1505 = vmatmul.bf16.gmra.mxu0 %v1489
      %v1506 = vpop.f32.mrf.mxu0
      %v1507 = vadd.f32 0.0, %v1506
      %v1508 = vpop.f32.mrf.mxu0
      %1509 = vdwg.mxu0
      %1510 = vmatpush.bf16.msra.mxu0 0
      %1511 = vmatpush.bf16.msra.mxu0 0
      %1512 = vmatpush.bf16.msra.mxu0 %v1495
      %1513 = vmatpush.bf16.msra.mxu0 %v1475
      %1514 = vmatpush.bf16.msra.mxu0 %v1473
      %1515 = vmatpush.bf16.msra.mxu0 %v1471
      %1516 = vmatpush.bf16.msra.mxu0 %v1469
      %1517 = vmatpush.bf16.msra.mxu0 %v1467
      %1518 = vmatmul.bf16.gmra.mxu0 %v1489
      %v1519 = vpop.f32.mrf.mxu0
      %v1520 = vadd.f32 0.0, %v1519
      %v1521 = vpop.f32.mrf.mxu0
      %1522 = vdwg.mxu0
      %v1523 = vadd.f32 %v1395, %v1507
      %v1524 = vadd.f32 %v1408, %v1520
      %s1525 = scalar_lea.vmem %s2, 264
      %v1526 = vld [vmem:[%s1525] sm:$0xff]
      %v1527 = vld [vmem:[%s1525 + $0x8] sm:$0xff]
      %v1528 = vld [vmem:[%s1525 + $0x10] sm:$0xff]
      %v1529 = vld [vmem:[%s1525 + $0x18] sm:$0xff]
      %v1530 = vld [vmem:[%s1525 + $0x20] sm:$0xff]
      %v1531 = vld [vmem:[%s1525 + $0x28] sm:$0xff]
      %v1532 = vld [vmem:[%s1525 + $0x30] sm:$0xff]
      %v1533 = vld [vmem:[%s1525 + $0x38] sm:$0xff]
      %v1534 = vld [vmem:[%s1525 + $0x40] sm:$0xff]
      %v1535 = vld [vmem:[%s1525 + $0x48] sm:$0xff]
      %v1536 = vld [vmem:[%s1525 + $0x50] sm:$0x33]
      %v1538 = vunpack.c.l.b16 %v1216
      %v1539 = vpack.c.b16 %v1538, %v1538
      %v1541 = vshrl.u32 %v1539, 16
      %v1543 = vshll.u32 %v1539, 16
      %v1545 = vrot.slane %v1543, 1
      %v1546 = vor.u32 %v1541, %v1545
      %v1558 = vunpack.c.l.b16 %v1526
      %v1559 = vunpack.c.h.b16 %v1526
      %v1560 = vunpack.c.l.b16 %v1527
      %v1561 = vunpack.c.h.b16 %v1527
      %v1562 = vunpack.c.l.b16 %v1528
      %v1563 = vunpack.c.h.b16 %v1528
      %v1564 = vunpack.c.l.b16 %v1529
      %v1565 = vunpack.c.h.b16 %v1529
      %v1566 = vunpack.c.l.b16 %v1530
      %v1567 = vunpack.c.h.b16 %v1530
      %v1568 = vunpack.c.l.b16 %v1531
      %v1569 = vunpack.c.h.b16 %v1531
      %v1570 = vunpack.c.l.b16 %v1532
      %v1571 = vunpack.c.h.b16 %v1532
      %v1572 = vunpack.c.l.b16 %v1533
      %v1573 = vunpack.c.h.b16 %v1533
      %v1574 = vunpack.c.l.b16 %v1534
      %v1575 = vunpack.c.h.b16 %v1534
      %v1576 = vunpack.c.l.b16 %v1535
      %v1577 = vunpack.c.h.b16 %v1535
      %v1578 = vunpack.c.l.b16 %v1536
      %v1579 = vunpack.c.h.b16 %v1536
      %v1580 = vpack.c.b16 %v1560, %v1558
      %v1581 = vpack.c.b16 %v1561, %v1559
      %v1582 = vpack.c.b16 %v1564, %v1562
      %v1583 = vpack.c.b16 %v1565, %v1563
      %v1584 = vpack.c.b16 %v1568, %v1566
      %v1585 = vpack.c.b16 %v1569, %v1567
      %v1586 = vpack.c.b16 %v1572, %v1570
      %v1587 = vpack.c.b16 %v1573, %v1571
      %v1588 = vpack.c.b16 %v1576, %v1574
      %v1589 = vpack.c.b16 %v1577, %v1575
      %v1590 = vpack.c.b16 %v1578, %v1578
      %v1591 = vpack.c.b16 %v1579, %v1579
      %v1603 = vsel %vm1284, %v1546, 0
      %v1606 = vsel %vm1288, %v1590, 0
      %v1609 = vsel %vm1288, %v1591, 0
      %1611 = vmatpush.bf16.msra.mxu0 0
      %1612 = vmatpush.bf16.msra.mxu0 0
      %1613 = vmatpush.bf16.msra.mxu0 %v1606
      %1614 = vmatpush.bf16.msra.mxu0 %v1588
      %1615 = vmatpush.bf16.msra.mxu0 %v1586
      %1616 = vmatpush.bf16.msra.mxu0 %v1584
      %1617 = vmatpush.bf16.msra.mxu0 %v1582
      %1618 = vmatpush.bf16.msra.mxu0 %v1580
      %1619 = vmatmul.bf16.gmra.mxu0 %v1603
      %v1620 = vpop.f32.mrf.mxu0
      %v1621 = vadd.f32 0.0, %v1620
      %v1622 = vpop.f32.mrf.mxu0
      %1623 = vdwg.mxu0
      %1624 = vmatpush.bf16.msra.mxu0 0
      %1625 = vmatpush.bf16.msra.mxu0 0
      %1626 = vmatpush.bf16.msra.mxu0 %v1609
      %1627 = vmatpush.bf16.msra.mxu0 %v1589
      %1628 = vmatpush.bf16.msra.mxu0 %v1587
      %1629 = vmatpush.bf16.msra.mxu0 %v1585
      %1630 = vmatpush.bf16.msra.mxu0 %v1583
      %1631 = vmatpush.bf16.msra.mxu0 %v1581
      %1632 = vmatmul.bf16.gmra.mxu0 %v1603
      %v1633 = vpop.f32.mrf.mxu0
      %v1634 = vadd.f32 0.0, %v1633
      %v1635 = vpop.f32.mrf.mxu0
      %1636 = vdwg.mxu0
      %v1637 = vadd.f32 %v1523, %v1621
      %v1638 = vadd.f32 %v1524, %v1634
      %v1639 = vld [vmem:[#allocation2] sm:$0xe]
      %s1640 = scalar_lea.vmem %s2, 352
      %v1641 = vld [vmem:[%s1640] sm:$0xff]
      %v1642 = vld [vmem:[%s1640 + $0x8] sm:$0xff]
      %v1643 = vld [vmem:[%s1640 + $0x10] sm:$0xff]
      %v1644 = vld [vmem:[%s1640 + $0x18] sm:$0xff]
      %v1645 = vld [vmem:[%s1640 + $0x20] sm:$0xff]
      %v1646 = vld [vmem:[%s1640 + $0x28] sm:$0xff]
      %v1647 = vld [vmem:[%s1640 + $0x30] sm:$0xff]
      %v1648 = vld [vmem:[%s1640 + $0x38] sm:$0xff]
      %v1649 = vld [vmem:[%s1640 + $0x40] sm:$0xff]
      %v1650 = vld [vmem:[%s1640 + $0x48] sm:$0xff]
      %v1651 = vld [vmem:[%s1640 + $0x50] sm:$0x33]
      %v1653 = vunpack.c.l.b16 %v1639
      %v1654 = vpack.c.b16 %v1653, %v1653
      %v1655 = vrot.slane %v1654, 1
      %v1667 = vunpack.c.l.b16 %v1641
      %v1668 = vunpack.c.h.b16 %v1641
      %v1669 = vunpack.c.l.b16 %v1642
      %v1670 = vunpack.c.h.b16 %v1642
      %v1671 = vunpack.c.l.b16 %v1643
      %v1672 = vunpack.c.h.b16 %v1643
      %v1673 = vunpack.c.l.b16 %v1644
      %v1674 = vunpack.c.h.b16 %v1644
      %v1675 = vunpack.c.l.b16 %v1645
      %v1676 = vunpack.c.h.b16 %v1645
      %v1677 = vunpack.c.l.b16 %v1646
      %v1678 = vunpack.c.h.b16 %v1646
      %v1679 = vunpack.c.l.b16 %v1647
      %v1680 = vunpack.c.h.b16 %v1647
      %v1681 = vunpack.c.l.b16 %v1648
      %v1682 = vunpack.c.h.b16 %v1648
      %v1683 = vunpack.c.l.b16 %v1649
      %v1684 = vunpack.c.h.b16 %v1649
      %v1685 = vunpack.c.l.b16 %v1650
      %v1686 = vunpack.c.h.b16 %v1650
      %v1687 = vunpack.c.l.b16 %v1651
      %v1688 = vunpack.c.h.b16 %v1651
      %v1689 = vpack.c.b16 %v1669, %v1667
      %v1690 = vpack.c.b16 %v1670, %v1668
      %v1691 = vpack.c.b16 %v1673, %v1671
      %v1692 = vpack.c.b16 %v1674, %v1672
      %v1693 = vpack.c.b16 %v1677, %v1675
      %v1694 = vpack.c.b16 %v1678, %v1676
      %v1695 = vpack.c.b16 %v1681, %v1679
      %v1696 = vpack.c.b16 %v1682, %v1680
      %v1697 = vpack.c.b16 %v1685, %v1683
      %v1698 = vpack.c.b16 %v1686, %v1684
      %v1699 = vpack.c.b16 %v1687, %v1687
      %v1700 = vpack.c.b16 %v1688, %v1688
      %v1712 = vsel %vm1284, %v1655, 0
      %v1715 = vsel %vm1288, %v1699, 0
      %v1718 = vsel %vm1288, %v1700, 0
      %1720 = vmatpush.bf16.msra.mxu0 0
      %1721 = vmatpush.bf16.msra.mxu0 0
      %1722 = vmatpush.bf16.msra.mxu0 %v1715
      %1723 = vmatpush.bf16.msra.mxu0 %v1697
      %1724 = vmatpush.bf16.msra.mxu0 %v1695
      %1725 = vmatpush.bf16.msra.mxu0 %v1693
      %1726 = vmatpush.bf16.msra.mxu0 %v1691
      %1727 = vmatpush.bf16.msra.mxu0 %v1689
      %1728 = vmatmul.bf16.gmra.mxu0 %v1712
      %v1729 = vpop.f32.mrf.mxu0
      %v1730 = vadd.f32 0.0, %v1729
      %v1731 = vpop.f32.mrf.mxu0
      %1732 = vdwg.mxu0
      %1733 = vmatpush.bf16.msra.mxu0 0
      %1734 = vmatpush.bf16.msra.mxu0 0
      %1735 = vmatpush.bf16.msra.mxu0 %v1718
      %1736 = vmatpush.bf16.msra.mxu0 %v1698
      %1737 = vmatpush.bf16.msra.mxu0 %v1696
      %1738 = vmatpush.bf16.msra.mxu0 %v1694
      %1739 = vmatpush.bf16.msra.mxu0 %v1692
      %1740 = vmatpush.bf16.msra.mxu0 %v1690
      %1741 = vmatmul.bf16.gmra.mxu0 %v1712
      %v1742 = vpop.f32.mrf.mxu0
      %v1743 = vadd.f32 0.0, %v1742
      %v1744 = vpop.f32.mrf.mxu0
      %1745 = vdwg.mxu0
      %v1746 = vadd.f32 %v1637, %v1730
      %v1747 = vadd.f32 %v1638, %v1743
      %v1748 = vmax.f32 %v1746, %v1747
      %1749 = vmatpush.bf16.msra.mxu0 0
      %1750 = vmatpush.bf16.msra.mxu0 0
      %1751 = vmatpush.bf16.msra.mxu0 %v1290
      %1752 = vmatpush.bf16.msra.mxu0 %v1270
      %1753 = vmatpush.bf16.msra.mxu0 %v1268
      %1754 = vmatpush.bf16.msra.mxu0 %v1266
      %1755 = vmatpush.bf16.msra.mxu0 %v1264
      %1756 = vmatpush.bf16.msra.mxu0 %v1262
      %1757 = vmatmul.bf16.gmra.mxu0 %v1489
      %v1758 = vpop.f32.mrf.mxu0
      %v1759 = vadd.f32 0.0, %v1758
      %v1760 = vpop.f32.mrf.mxu0
      %1761 = vdwg.mxu0
      %1762 = vmatpush.bf16.msra.mxu0 0
      %1763 = vmatpush.bf16.msra.mxu0 0
      %1764 = vmatpush.bf16.msra.mxu0 %v1293
      %1765 = vmatpush.bf16.msra.mxu0 %v1271
      %1766 = vmatpush.bf16.msra.mxu0 %v1269
      %1767 = vmatpush.bf16.msra.mxu0 %v1267
      %1768 = vmatpush.bf16.msra.mxu0 %v1265
      %1769 = vmatpush.bf16.msra.mxu0 %v1263
      %1770 = vmatmul.bf16.gmra.mxu0 %v1489
      %v1771 = vpop.f32.mrf.mxu0
      %v1772 = vadd.f32 0.0, %v1771
      %v1773 = vpop.f32.mrf.mxu0
      %1774 = vdwg.mxu0
      %1775 = vmatpush.bf16.msra.mxu0 0
      %1776 = vmatpush.bf16.msra.mxu0 0
      %1777 = vmatpush.bf16.msra.mxu0 %v1380
      %1778 = vmatpush.bf16.msra.mxu0 %v1362
      %1779 = vmatpush.bf16.msra.mxu0 %v1360
      %1780 = vmatpush.bf16.msra.mxu0 %v1358
      %1781 = vmatpush.bf16.msra.mxu0 %v1356
      %1782 = vmatpush.bf16.msra.mxu0 %v1354
      %1783 = vmatmul.bf16.gmra.mxu0 %v1286
      %v1784 = vpop.f32.mrf.mxu0
      %v1785 = vadd.f32 %v1759, %v1784
      %v1786 = vpop.f32.mrf.mxu0
      %1787 = vdwg.mxu0
      %1788 = vmatpush.bf16.msra.mxu0 0
      %1789 = vmatpush.bf16.msra.mxu0 0
      %1790 = vmatpush.bf16.msra.mxu0 %v1383
      %1791 = vmatpush.bf16.msra.mxu0 %v1363
      %1792 = vmatpush.bf16.msra.mxu0 %v1361
      %1793 = vmatpush.bf16.msra.mxu0 %v1359
      %1794 = vmatpush.bf16.msra.mxu0 %v1357
      %1795 = vmatpush.bf16.msra.mxu0 %v1355
      %1796 = vmatmul.bf16.gmra.mxu0 %v1286
      %v1797 = vpop.f32.mrf.mxu0
      %v1798 = vadd.f32 %v1772, %v1797
      %v1799 = vpop.f32.mrf.mxu0
      %1800 = vdwg.mxu0
      %1801 = vmatpush.bf16.msra.mxu0 0
      %1802 = vmatpush.bf16.msra.mxu0 0
      %1803 = vmatpush.bf16.msra.mxu0 %v1492
      %1804 = vmatpush.bf16.msra.mxu0 %v1474
      %1805 = vmatpush.bf16.msra.mxu0 %v1472
      %1806 = vmatpush.bf16.msra.mxu0 %v1470
      %1807 = vmatpush.bf16.msra.mxu0 %v1468
      %1808 = vmatpush.bf16.msra.mxu0 %v1466
      %1809 = vmatmul.bf16.gmra.mxu0 %v1603
      %v1810 = vpop.f32.mrf.mxu0
      %v1811 = vadd.f32 0.0, %v1810
      %v1812 = vpop.f32.mrf.mxu0
      %1813 = vdwg.mxu0
      %1814 = vmatpush.bf16.msra.mxu0 0
      %1815 = vmatpush.bf16.msra.mxu0 0
      %1816 = vmatpush.bf16.msra.mxu0 %v1495
      %1817 = vmatpush.bf16.msra.mxu0 %v1475
      %1818 = vmatpush.bf16.msra.mxu0 %v1473
      %1819 = vmatpush.bf16.msra.mxu0 %v1471
      %1820 = vmatpush.bf16.msra.mxu0 %v1469
      %1821 = vmatpush.bf16.msra.mxu0 %v1467
      %1822 = vmatmul.bf16.gmra.mxu0 %v1603
      %v1823 = vpop.f32.mrf.mxu0
      %v1824 = vadd.f32 0.0, %v1823
      %v1825 = vpop.f32.mrf.mxu0
      %1826 = vdwg.mxu0
      %v1827 = vadd.f32 %v1785, %v1811
      %v1828 = vadd.f32 %v1798, %v1824
      %1829 = vmatpush.bf16.msra.mxu0 0
      %1830 = vmatpush.bf16.msra.mxu0 0
      %1831 = vmatpush.bf16.msra.mxu0 %v1606
      %1832 = vmatpush.bf16.msra.mxu0 %v1588
      %1833 = vmatpush.bf16.msra.mxu0 %v1586
      %1834 = vmatpush.bf16.msra.mxu0 %v1584
      %1835 = vmatpush.bf16.msra.mxu0 %v1582
      %1836 = vmatpush.bf16.msra.mxu0 %v1580
      %1837 = vmatmul.bf16.gmra.mxu0 %v1712
      %v1838 = vpop.f32.mrf.mxu0
      %v1839 = vadd.f32 0.0, %v1838
      %v1840 = vpop.f32.mrf.mxu0
      %1841 = vdwg.mxu0
      %1842 = vmatpush.bf16.msra.mxu0 0
      %1843 = vmatpush.bf16.msra.mxu0 0
      %1844 = vmatpush.bf16.msra.mxu0 %v1609
      %1845 = vmatpush.bf16.msra.mxu0 %v1589
      %1846 = vmatpush.bf16.msra.mxu0 %v1587
      %1847 = vmatpush.bf16.msra.mxu0 %v1585
      %1848 = vmatpush.bf16.msra.mxu0 %v1583
      %1849 = vmatpush.bf16.msra.mxu0 %v1581
      %1850 = vmatmul.bf16.gmra.mxu0 %v1712
      %v1851 = vpop.f32.mrf.mxu0
      %v1852 = vadd.f32 0.0, %v1851
      %v1853 = vpop.f32.mrf.mxu0
      %1854 = vdwg.mxu0
      %v1855 = vadd.f32 %v1827, %v1839
      %v1856 = vadd.f32 %v1828, %v1852
      %v1857 = vld [vmem:[%s1200] sm:$0xe]
      %v1859 = vunpack.c.l.b16 %v1857
      %v1860 = vpack.c.b16 %v1859, %v1859
      %v1861 = vrot.slane %v1860, 1
      %v1863 = vsel %vm1284, %v1861, 0
      %1865 = vmatpush.bf16.msra.mxu0 0
      %1866 = vmatpush.bf16.msra.mxu0 0
      %1867 = vmatpush.bf16.msra.mxu0 %v1715
      %1868 = vmatpush.bf16.msra.mxu0 %v1697
      %1869 = vmatpush.bf16.msra.mxu0 %v1695
      %1870 = vmatpush.bf16.msra.mxu0 %v1693
      %1871 = vmatpush.bf16.msra.mxu0 %v1691
      %1872 = vmatpush.bf16.msra.mxu0 %v1689
      %1873 = vmatmul.bf16.gmra.mxu0 %v1863
      %v1874 = vpop.f32.mrf.mxu0
      %v1875 = vadd.f32 0.0, %v1874
      %v1876 = vpop.f32.mrf.mxu0
      %1877 = vdwg.mxu0
      %1878 = vmatpush.bf16.msra.mxu0 0
      %1879 = vmatpush.bf16.msra.mxu0 0
      %1880 = vmatpush.bf16.msra.mxu0 %v1718
      %1881 = vmatpush.bf16.msra.mxu0 %v1698
      %1882 = vmatpush.bf16.msra.mxu0 %v1696
      %1883 = vmatpush.bf16.msra.mxu0 %v1694
      %1884 = vmatpush.bf16.msra.mxu0 %v1692
      %1885 = vmatpush.bf16.msra.mxu0 %v1690
      %1886 = vmatmul.bf16.gmra.mxu0 %v1863
      %v1887 = vpop.f32.mrf.mxu0
      %v1888 = vadd.f32 0.0, %v1887
      %v1889 = vpop.f32.mrf.mxu0
      %1890 = vdwg.mxu0
      %v1891 = vadd.f32 %v1855, %v1875
      %v1892 = vadd.f32 %v1856, %v1888
      %v1893 = vmax.f32 %v1891, %v1892
      %v1894 = vmax.f32 %v1748, %v1893
      %v1896 = vperm.slane %v279, 0
      %v1898 = vadd.f32 %v1894, %v1896
      %v1899 = vmax.f32 %v1898, 0.0
      %v1900 = vpack.c.bf16 %v1899, %v1899
      %vm1901 = vcmask 649216
      %vm1902 = vsmask.f32 2304
      %vm1903 = vmand %vm1901, %vm1902
      %v1904 = vld [vmem:[#allocation3] sm:$0x7]
      %v1905 = vsel %vm1903, %v1900, %v1904
      %1906 = vst [vmem:[#allocation3] sm:$0x7] %v1905
      %v1907 = vld [vmem:[#allocation3] sm:$0x1]
      %v1908 = vld [vmem:[%s3] sm:$0xf]
      %v1909 = vld [vmem:[%s3 + $0x4] sm:$0xf]
      %v1910 = vld [vmem:[%s3 + $0x8] sm:$0xf]
      %v1911 = vld [vmem:[%s3 + $0xc] sm:$0xf]
      %v1912 = vld [vmem:[%s3 + $0x10] sm:$0xf]
      %v1913 = vld [vmem:[%s3 + $0x14] sm:$0xf]
      %v1914 = vld [vmem:[%s3 + $0x18] sm:$0xf]
      %v1915 = vld [vmem:[%s3 + $0x1c] sm:$0xf]
      %v1916 = vld [vmem:[%s3 + $0x20] sm:$0xf]
      %v1917 = vld [vmem:[%s3 + $0x24] sm:$0xf]
      %v1928 = vunpack.c.l.b16 %v1908
      %v1929 = vunpack.c.l.b16 %v1909
      %v1930 = vunpack.c.l.b16 %v1910
      %v1931 = vunpack.c.l.b16 %v1911
      %v1932 = vunpack.c.l.b16 %v1912
      %v1933 = vunpack.c.l.b16 %v1913
      %v1934 = vunpack.c.l.b16 %v1914
      %v1935 = vunpack.c.l.b16 %v1915
      %v1936 = vunpack.c.l.b16 %v1916
      %v1937 = vunpack.c.l.b16 %v1917
      %v1938 = vpack.c.b16 %v1929, %v1928
      %v1939 = vpack.c.b16 %v1931, %v1930
      %v1940 = vpack.c.b16 %v1933, %v1932
      %v1941 = vpack.c.b16 %v1935, %v1934
      %v1942 = vpack.c.b16 %v1937, %v1936
      %vm1948 = vcmask 654336
      %v1950 = vsel %vm1948, %v1907, 0
      %1952 = vmatpush.bf16.msra.mxu0 0
      %1953 = vmatpush.bf16.msra.mxu0 0
      %1954 = vmatpush.bf16.msra.mxu0 0
      %1955 = vmatpush.bf16.msra.mxu0 %v1942
      %1956 = vmatpush.bf16.msra.mxu0 %v1941
      %1957 = vmatpush.bf16.msra.mxu0 %v1940
      %1958 = vmatpush.bf16.msra.mxu0 %v1939
      %1959 = vmatpush.bf16.msra.mxu0 %v1938
      %1960 = vmatmul.bf16.gmra.mxu0 %v1950
      %v1961 = vpop.f32.mrf.mxu0
      %v1962 = vadd.f32 0.0, %v1961
      %v1963 = vpop.f32.mrf.mxu0
      %1964 = vdwg.mxu0
      %v1965 = vadd.f32 %v280, %v1962
      %s1966 = scalar_lea.vmem %s3, 40
      %v1967 = vld [vmem:[%s1966] sm:$0xf]
      %v1968 = vld [vmem:[%s1966 + $0x4] sm:$0xf]
      %v1969 = vld [vmem:[%s1966 + $0x8] sm:$0xf]
      %v1970 = vld [vmem:[%s1966 + $0xc] sm:$0xf]
      %v1971 = vld [vmem:[%s1966 + $0x10] sm:$0xf]
      %v1972 = vld [vmem:[%s1966 + $0x14] sm:$0xf]
      %v1973 = vld [vmem:[%s1966 + $0x18] sm:$0xf]
      %v1974 = vld [vmem:[%s1966 + $0x1c] sm:$0xf]
      %v1975 = vld [vmem:[%s1966 + $0x20] sm:$0xf]
      %v1976 = vld [vmem:[%s1966 + $0x24] sm:$0xf]
      %v1978 = vunpack.c.l.b16 %v1907
      %v1979 = vpack.c.b16 %v1978, %v1978
      %v1981 = vshrl.u32 %v1979, 16
      %v1993 = vunpack.c.l.b16 %v1967
      %v1994 = vunpack.c.l.b16 %v1968
      %v1995 = vunpack.c.l.b16 %v1969
      %v1996 = vunpack.c.l.b16 %v1970
      %v1997 = vunpack.c.l.b16 %v1971
      %v1998 = vunpack.c.l.b16 %v1972
      %v1999 = vunpack.c.l.b16 %v1973
      %v2000 = vunpack.c.l.b16 %v1974
      %v2001 = vunpack.c.l.b16 %v1975
      %v2002 = vunpack.c.l.b16 %v1976
      %v2003 = vpack.c.b16 %v1994, %v1993
      %v2004 = vpack.c.b16 %v1996, %v1995
      %v2005 = vpack.c.b16 %v1998, %v1997
      %v2006 = vpack.c.b16 %v2000, %v1999
      %v2007 = vpack.c.b16 %v2002, %v2001
      %v2014 = vsel %vm1948, %v1981, 0
      %2016 = vmatpush.bf16.msra.mxu0 0
      %2017 = vmatpush.bf16.msra.mxu0 0
      %2018 = vmatpush.bf16.msra.mxu0 0
      %2019 = vmatpush.bf16.msra.mxu0 %v2007
      %2020 = vmatpush.bf16.msra.mxu0 %v2006
      %2021 = vmatpush.bf16.msra.mxu0 %v2005
      %2022 = vmatpush.bf16.msra.mxu0 %v2004
      %2023 = vmatpush.bf16.msra.mxu0 %v2003
      %2024 = vmatmul.bf16.gmra.mxu0 %v2014
      %v2025 = vpop.f32.mrf.mxu0
      %v2026 = vadd.f32 0.0, %v2025
      %v2027 = vpop.f32.mrf.mxu0
      %2028 = vdwg.mxu0
      %v2029 = vadd.f32 %v1965, %v2026
      %v2030 = vld [vmem:[#allocation3] sm:$0x2]
      %s2031 = scalar_lea.vmem %s3, 80
      %v2032 = vld [vmem:[%s2031] sm:$0xf]
      %v2033 = vld [vmem:[%s2031 + $0x4] sm:$0xf]
      %v2034 = vld [vmem:[%s2031 + $0x8] sm:$0xf]
      %v2035 = vld [vmem:[%s2031 + $0xc] sm:$0xf]
      %v2036 = vld [vmem:[%s2031 + $0x10] sm:$0xf]
      %v2037 = vld [vmem:[%s2031 + $0x14] sm:$0xf]
      %v2038 = vld [vmem:[%s2031 + $0x18] sm:$0xf]
      %v2039 = vld [vmem:[%s2031 + $0x1c] sm:$0xf]
      %v2040 = vld [vmem:[%s2031 + $0x20] sm:$0xf]
      %v2041 = vld [vmem:[%s2031 + $0x24] sm:$0xf]
      %v2043 = vunpack.c.l.b16 %v2030
      %v2044 = vpack.c.b16 %v2043, %v2043
      %v2045 = vrot.slane %v2044, 1
      %v2056 = vunpack.c.l.b16 %v2032
      %v2057 = vunpack.c.l.b16 %v2033
      %v2058 = vunpack.c.l.b16 %v2034
      %v2059 = vunpack.c.l.b16 %v2035
      %v2060 = vunpack.c.l.b16 %v2036
      %v2061 = vunpack.c.l.b16 %v2037
      %v2062 = vunpack.c.l.b16 %v2038
      %v2063 = vunpack.c.l.b16 %v2039
      %v2064 = vunpack.c.l.b16 %v2040
      %v2065 = vunpack.c.l.b16 %v2041
      %v2066 = vpack.c.b16 %v2057, %v2056
      %v2067 = vpack.c.b16 %v2059, %v2058
      %v2068 = vpack.c.b16 %v2061, %v2060
      %v2069 = vpack.c.b16 %v2063, %v2062
      %v2070 = vpack.c.b16 %v2065, %v2064
      %v2077 = vsel %vm1948, %v2045, 0
      %2079 = vmatpush.bf16.msra.mxu0 0
      %2080 = vmatpush.bf16.msra.mxu0 0
      %2081 = vmatpush.bf16.msra.mxu0 0
      %2082 = vmatpush.bf16.msra.mxu0 %v2070
      %2083 = vmatpush.bf16.msra.mxu0 %v2069
      %2084 = vmatpush.bf16.msra.mxu0 %v2068
      %2085 = vmatpush.bf16.msra.mxu0 %v2067
      %2086 = vmatpush.bf16.msra.mxu0 %v2066
      %2087 = vmatmul.bf16.gmra.mxu0 %v2077
      %v2088 = vpop.f32.mrf.mxu0
      %v2089 = vadd.f32 0.0, %v2088
      %v2090 = vpop.f32.mrf.mxu0
      %2091 = vdwg.mxu0
      %v2092 = vadd.f32 %v2029, %v2089
      %s2093 = scalar_lea.vmem %s3, 120
      %v2094 = vld [vmem:[%s2093] sm:$0xf]
      %v2095 = vld [vmem:[%s2093 + $0x4] sm:$0xf]
      %v2096 = vld [vmem:[%s2093 + $0x8] sm:$0xf]
      %v2097 = vld [vmem:[%s2093 + $0xc] sm:$0xf]
      %v2098 = vld [vmem:[%s2093 + $0x10] sm:$0xf]
      %v2099 = vld [vmem:[%s2093 + $0x14] sm:$0xf]
      %v2100 = vld [vmem:[%s2093 + $0x18] sm:$0xf]
      %v2101 = vld [vmem:[%s2093 + $0x1c] sm:$0xf]
      %v2102 = vld [vmem:[%s2093 + $0x20] sm:$0xf]
      %v2103 = vld [vmem:[%s2093 + $0x24] sm:$0xf]
      %v2105 = vshrl.u32 %v2044, 16
      %v2107 = vrot.slane %v2105, 1
      %v2118 = vunpack.c.l.b16 %v2094
      %v2119 = vunpack.c.l.b16 %v2095
      %v2120 = vunpack.c.l.b16 %v2096
      %v2121 = vunpack.c.l.b16 %v2097
      %v2122 = vunpack.c.l.b16 %v2098
      %v2123 = vunpack.c.l.b16 %v2099
      %v2124 = vunpack.c.l.b16 %v2100
      %v2125 = vunpack.c.l.b16 %v2101
      %v2126 = vunpack.c.l.b16 %v2102
      %v2127 = vunpack.c.l.b16 %v2103
      %v2128 = vpack.c.b16 %v2119, %v2118
      %v2129 = vpack.c.b16 %v2121, %v2120
      %v2130 = vpack.c.b16 %v2123, %v2122
      %v2131 = vpack.c.b16 %v2125, %v2124
      %v2132 = vpack.c.b16 %v2127, %v2126
      %v2139 = vsel %vm1948, %v2107, 0
      %2141 = vmatpush.bf16.msra.mxu0 0
      %2142 = vmatpush.bf16.msra.mxu0 0
      %2143 = vmatpush.bf16.msra.mxu0 0
      %2144 = vmatpush.bf16.msra.mxu0 %v2132
      %2145 = vmatpush.bf16.msra.mxu0 %v2131
      %2146 = vmatpush.bf16.msra.mxu0 %v2130
      %2147 = vmatpush.bf16.msra.mxu0 %v2129
      %2148 = vmatpush.bf16.msra.mxu0 %v2128
      %2149 = vmatmul.bf16.gmra.mxu0 %v2139
      %v2150 = vpop.f32.mrf.mxu0
      %v2151 = vadd.f32 0.0, %v2150
      %v2152 = vpop.f32.mrf.mxu0
      %2153 = vdwg.mxu0
      %v2154 = vadd.f32 %v2092, %v2151
      %v2155 = vld [vmem:[#allocation3] sm:$0x4]
      %s2156 = scalar_lea.vmem %s3, 160
      %v2157 = vld [vmem:[%s2156] sm:$0xf]
      %v2158 = vld [vmem:[%s2156 + $0x4] sm:$0xf]
      %v2159 = vld [vmem:[%s2156 + $0x8] sm:$0xf]
      %v2160 = vld [vmem:[%s2156 + $0xc] sm:$0xf]
      %v2161 = vld [vmem:[%s2156 + $0x10] sm:$0xf]
      %v2162 = vld [vmem:[%s2156 + $0x14] sm:$0xf]
      %v2163 = vld [vmem:[%s2156 + $0x18] sm:$0xf]
      %v2164 = vld [vmem:[%s2156 + $0x1c] sm:$0xf]
      %v2165 = vld [vmem:[%s2156 + $0x20] sm:$0xf]
      %v2166 = vld [vmem:[%s2156 + $0x24] sm:$0xf]
      %v2168 = vunpack.c.l.b16 %v2155
      %v2169 = vpack.c.b16 %v2168, %v2168
      %v2170 = vrot.slane %v2169, 2
      %v2181 = vunpack.c.l.b16 %v2157
      %v2182 = vunpack.c.l.b16 %v2158
      %v2183 = vunpack.c.l.b16 %v2159
      %v2184 = vunpack.c.l.b16 %v2160
      %v2185 = vunpack.c.l.b16 %v2161
      %v2186 = vunpack.c.l.b16 %v2162
      %v2187 = vunpack.c.l.b16 %v2163
      %v2188 = vunpack.c.l.b16 %v2164
      %v2189 = vunpack.c.l.b16 %v2165
      %v2190 = vunpack.c.l.b16 %v2166
      %v2191 = vpack.c.b16 %v2182, %v2181
      %v2192 = vpack.c.b16 %v2184, %v2183
      %v2193 = vpack.c.b16 %v2186, %v2185
      %v2194 = vpack.c.b16 %v2188, %v2187
      %v2195 = vpack.c.b16 %v2190, %v2189
      %v2202 = vsel %vm1948, %v2170, 0
      %2204 = vmatpush.bf16.msra.mxu0 0
      %2205 = vmatpush.bf16.msra.mxu0 0
      %2206 = vmatpush.bf16.msra.mxu0 0
      %2207 = vmatpush.bf16.msra.mxu0 %v2195
      %2208 = vmatpush.bf16.msra.mxu0 %v2194
      %2209 = vmatpush.bf16.msra.mxu0 %v2193
      %2210 = vmatpush.bf16.msra.mxu0 %v2192
      %2211 = vmatpush.bf16.msra.mxu0 %v2191
      %2212 = vmatmul.bf16.gmra.mxu0 %v2202
      %v2213 = vpop.f32.mrf.mxu0
      %v2214 = vadd.f32 0.0, %v2213
      %v2215 = vpop.f32.mrf.mxu0
      %2216 = vdwg.mxu0
      %v2217 = vadd.f32 %v2154, %v2214
      %v2218 = vmax.f32 %v2217, 0.0
      %v2219 = vpack.c.bf16 %v2218, %v2218
      %v2220 = vld [vmem:[%s4] sm:$0xf]
      %v2221 = vld [vmem:[%s4 + $0x4] sm:$0xf]
      %v2222 = vld [vmem:[%s4 + $0x8] sm:$0xf]
      %v2223 = vld [vmem:[%s4 + $0xc] sm:$0xf]
      %v2224 = vld [vmem:[%s4 + $0x10] sm:$0xf]
      %v2225 = vld [vmem:[%s4 + $0x14] sm:$0xf]
      %v2226 = vld [vmem:[%s4 + $0x18] sm:$0xf]
      %v2227 = vld [vmem:[%s4 + $0x1c] sm:$0xf]
      %v2228 = vld [vmem:[%s4 + $0x20] sm:$0xf]
      %v2229 = vld [vmem:[%s4 + $0x24] sm:$0xf]
      %v2230 = vld [vmem:[%s4 + $0x28] sm:$0xf]
      %v2231 = vld [vmem:[%s4 + $0x2c] sm:$0xf]
      %v2232 = vld [vmem:[%s4 + $0x30] sm:$0xf]
      %v2233 = vld [vmem:[%s4 + $0x34] sm:$0xf]
      %v2234 = vld [vmem:[%s4 + $0x38] sm:$0xf]
      %v2250 = vunpack.c.l.b16 %v2220
      %v2251 = vunpack.c.l.b16 %v2221
      %v2252 = vunpack.c.l.b16 %v2222
      %v2253 = vunpack.c.l.b16 %v2223
      %v2254 = vunpack.c.l.b16 %v2224
      %v2255 = vunpack.c.l.b16 %v2225
      %v2256 = vunpack.c.l.b16 %v2226
      %v2257 = vunpack.c.l.b16 %v2227
      %v2258 = vunpack.c.l.b16 %v2228
      %v2259 = vunpack.c.l.b16 %v2229
      %v2260 = vunpack.c.l.b16 %v2230
      %v2261 = vunpack.c.l.b16 %v2231
      %v2262 = vunpack.c.l.b16 %v2232
      %v2263 = vunpack.c.l.b16 %v2233
      %v2264 = vunpack.c.l.b16 %v2234
      %v2265 = vpack.c.b16 %v2251, %v2250
      %v2266 = vpack.c.b16 %v2253, %v2252
      %v2267 = vpack.c.b16 %v2255, %v2254
      %v2268 = vpack.c.b16 %v2257, %v2256
      %v2269 = vpack.c.b16 %v2259, %v2258
      %v2270 = vpack.c.b16 %v2261, %v2260
      %v2271 = vpack.c.b16 %v2263, %v2262
      %v2272 = vpack.c.b16 %v2264, %v2264
      %vm2280 = vcmask 982016
      %v2282 = vsel %vm2280, %v2219, 0
      %vm2284 = vcmask 1043456
      %v2286 = vsel %vm2284, %v2272, 0
      %2288 = vmatpush.bf16.msra.mxu0 %v2286
      %2289 = vmatpush.bf16.msra.mxu0 %v2271
      %2290 = vmatpush.bf16.msra.mxu0 %v2270
      %2291 = vmatpush.bf16.msra.mxu0 %v2269
      %2292 = vmatpush.bf16.msra.mxu0 %v2268
      %2293 = vmatpush.bf16.msra.mxu0 %v2267
      %2294 = vmatpush.bf16.msra.mxu0 %v2266
      %2295 = vmatpush.bf16.msra.mxu0 %v2265
      %2296 = vmatmul.bf16.gmra.mxu0 %v2282
      %v2297 = vpop.f32.mrf.mxu0
      %v2298 = vadd.f32 %v281, %v2297
      %v2299 = vpop.f32.mrf.mxu0
      %2300 = vdwg.mxu0
      %v2301 = vmax.f32 %v2298, 0.0
      %v2302 = vpack.c.bf16 %v2301, %v2301
      %v2303 = vld [vmem:[%s5] sm:$0xf]
      %v2304 = vld [vmem:[%s5 + $0x8] sm:$0xf]
      %v2305 = vld [vmem:[%s5 + $0x10] sm:$0xf]
      %v2306 = vld [vmem:[%s5 + $0x18] sm:$0xf]
      %v2307 = vld [vmem:[%s5 + $0x20] sm:$0xf]
      %v2308 = vld [vmem:[%s5 + $0x28] sm:$0xf]
      %v2309 = vld [vmem:[%s5 + $0x30] sm:$0xf]
      %v2310 = vld [vmem:[%s5 + $0x38] sm:$0xf]
      %v2311 = vld [vmem:[%s5 + $0x40] sm:$0xf]
      %v2312 = vld [vmem:[%s5 + $0x48] sm:$0xf]
      %v2313 = vld [vmem:[%s5 + $0x50] sm:$0xf]
      %v2314 = vld [vmem:[%s5 + $0x58] sm:$0xf]
      %v2327 = vunpack.c.l.b16 %v2303
      %v2328 = vunpack.c.l.b16 %v2304
      %v2329 = vunpack.c.l.b16 %v2305
      %v2330 = vunpack.c.l.b16 %v2306
      %v2331 = vunpack.c.l.b16 %v2307
      %v2332 = vunpack.c.l.b16 %v2308
      %v2333 = vunpack.c.l.b16 %v2309
      %v2334 = vunpack.c.l.b16 %v2310
      %v2335 = vunpack.c.l.b16 %v2311
      %v2336 = vunpack.c.l.b16 %v2312
      %v2337 = vunpack.c.l.b16 %v2313
      %v2338 = vunpack.c.l.b16 %v2314
      %v2339 = vpack.c.b16 %v2328, %v2327
      %v2340 = vpack.c.b16 %v2330, %v2329
      %v2341 = vpack.c.b16 %v2332, %v2331
      %v2342 = vpack.c.b16 %v2334, %v2333
      %v2343 = vpack.c.b16 %v2336, %v2335
      %v2344 = vpack.c.b16 %v2338, %v2337
      %vm2351 = vcmask 785408
      %v2353 = vsel %vm2351, %v2302, 0
      %2355 = vmatpush.bf16.msra.mxu0 0
      %2356 = vmatpush.bf16.msra.mxu0 0
      %2357 = vmatpush.bf16.msra.mxu0 %v2344
      %2358 = vmatpush.bf16.msra.mxu0 %v2343
      %2359 = vmatpush.bf16.msra.mxu0 %v2342
      %2360 = vmatpush.bf16.msra.mxu0 %v2341
      %2361 = vmatpush.bf16.msra.mxu0 %v2340
      %2362 = vmatpush.bf16.msra.mxu0 %v2339
      %2363 = vmatmul.bf16.gmra.mxu0 %v2353
      %v2364 = vpop.f32.mrf.mxu0
      %v2365 = vadd.f32 %v282, %v2364
      %v2366 = vpop.f32.mrf.mxu0
      %2367 = vdwg.mxu0
      %vm2368 = vcmask 73728
      %2369 = vst.msk [vmem:[%s276] sm:$0x1] %vm2368, %v2365
      %v2370 = vrcp.pop 0.1
      %v2371 = vmul.f32 0.1, %v2370
      %v2372 = vsub.f32 1.0, %v2371
      %v2373 = vmul.f32 %v2370, %v2372
      %v2374 = vadd.f32 %v2370, %v2373
      %vm2375 = vweird.f32 %v2370
      %v2376 = vsel %vm2375, %v2370, %v2374
      %v2377 = vmul.f32 %v2301, %v2376
      %v2378 = vround.ne.pseudo %v2377
      %v2379 = vmax.f32 %v2378, -127.0
      %v2380 = vmin.f32 %v2379, 128.0
      %v2381 = vpack.c.bf16 %v2380, %v2380
      %v2382 = vld [vmem:[%s5 + $0x4] sm:$0xf]
      %v2383 = vld [vmem:[%s5 + $0xc] sm:$0xf]
      %v2384 = vld [vmem:[%s5 + $0x14] sm:$0xf]
      %v2385 = vld [vmem:[%s5 + $0x1c] sm:$0xf]
      %v2386 = vld [vmem:[%s5 + $0x24] sm:$0xf]
      %v2387 = vld [vmem:[%s5 + $0x2c] sm:$0xf]
      %v2388 = vld [vmem:[%s5 + $0x34] sm:$0xf]
      %v2389 = vld [vmem:[%s5 + $0x3c] sm:$0xf]
      %v2390 = vld [vmem:[%s5 + $0x44] sm:$0xf]
      %v2391 = vld [vmem:[%s5 + $0x4c] sm:$0xf]
      %v2392 = vld [vmem:[%s5 + $0x54] sm:$0xf]
      %v2393 = vld [vmem:[%s5 + $0x5c] sm:$0xf]
      %v2406 = vunpack.c.l.b16 %v2382
      %v2407 = vunpack.c.l.b16 %v2383
      %v2408 = vunpack.c.l.b16 %v2384
      %v2409 = vunpack.c.l.b16 %v2385
      %v2410 = vunpack.c.l.b16 %v2386
      %v2411 = vunpack.c.l.b16 %v2387
      %v2412 = vunpack.c.l.b16 %v2388
      %v2413 = vunpack.c.l.b16 %v2389
      %v2414 = vunpack.c.l.b16 %v2390
      %v2415 = vunpack.c.l.b16 %v2391
      %v2416 = vunpack.c.l.b16 %v2392
      %v2417 = vunpack.c.l.b16 %v2393
      %v2418 = vpack.c.b16 %v2407, %v2406
      %v2419 = vpack.c.b16 %v2409, %v2408
      %v2420 = vpack.c.b16 %v2411, %v2410
      %v2421 = vpack.c.b16 %v2413, %v2412
      %v2422 = vpack.c.b16 %v2415, %v2414
      %v2423 = vpack.c.b16 %v2417, %v2416
      %v2431 = vsel %vm2351, %v2381, 0
      %2433 = vmatpush.bf16.msra.mxu0 0
      %2434 = vmatpush.bf16.msra.mxu0 0
      %2435 = vmatpush.bf16.msra.mxu0 %v2423
      %2436 = vmatpush.bf16.msra.mxu0 %v2422
      %2437 = vmatpush.bf16.msra.mxu0 %v2421
      %2438 = vmatpush.bf16.msra.mxu0 %v2420
      %2439 = vmatpush.bf16.msra.mxu0 %v2419
      %2440 = vmatpush.bf16.msra.mxu0 %v2418
      %2441 = vmatmul.bf16.gmra.mxu0 %v2431
      %v2442 = vpop.f32.mrf.mxu0
      %v2443 = vadd.f32 0.0, %v2442
      %v2444 = vpop.f32.mrf.mxu0
      %2445 = vdwg.mxu0
      %2446 = vst.msk [vmem:[%s276 + $0x1] sm:$0x1] %vm2368, %v2443
      %p2447 = scmp.lt.s32.totalorder %s18, 1
      %s2448 = scalar_select %p2447, %s18, 1
      %s2449 = smul.addr %s2448, 2
      %s2450 = scalar_lea.vmem %s7, %s2449
      // Predicated region
      $region49: #{lenet_forward.1} parent=47 // pred_check
        %p2451 = pneg %p188
      $region50: #{lenet_forward.1} parent=47 // pred_check_branch
        %2453 = sbr.rel (%p2451) target = $region52
      $region51: #{lenet_forward.1} parent=47 // pred_region
        _
      $region52: #{lenet_forward.1} parent=47 // pred_fallthru
        _
    $region48: #{lenet_forward.1} parent=5 // pred_fallthru
      _
    %p2454 = scmp.le.s32.totalorder 2, %s13
    // Predicated region
    $region53: #{lenet_forward.1} parent=5 // pred_check
      %p2455 = pneg %p2454
    $region54: #{lenet_forward.1} parent=5 // pred_check_branch
      %2457 = sbr.rel (%p2455) target = $region56
    $region55: #{lenet_forward.1} parent=5 // pred_region
      %s2458 = ssub.s32 %s13, 2
      // Predicated region
      $region57: #{lenet_forward.1} parent=55 // pred_check
        %p2459 = pneg %p194
      $region58: #{lenet_forward.1} parent=55 // pred_check_branch
        %2461 = sbr.rel (%p2459) target = $region60
      $region59: #{lenet_forward.1} parent=55 // pred_region
        %p2462 = scmp.lt.s32.totalorder %s19, 1
        %s2463 = scalar_select %p2462, %s19, 1
        %s2464 = smul.addr %s2463, 2
        %s2465 = scalar_lea.vmem %s7, %s2464
      $region60: #{lenet_forward.1} parent=55 // pred_fallthru
        _
    $region56: #{lenet_forward.1} parent=5 // pred_fallthru
      _
  $region6: #{lenet_forward.1} parent=0 // loop_footer
    %s17 = sadd.s32 1, %s13
  $region7: #{lenet_forward.1} parent=0 // loop_footer_branch
    %12 = sbr.rel target = $region3
  $region8: #{lenet_forward.1} parent=0 // loop_exit
    _

</llo_original>
